<compile_context>
chip_gen: v6e
topology: v6e:2x2x1
jax: 0.10.0
libtpu: 0.0.40
codegen_flags: <defaults>
</compile_context>

<pallas_src>
import jax
import jax.numpy as jnp
from jax.experimental import pallas as pl
from jax.experimental.pallas import tpu as pltpu


_LAYER_SIZES = [12, 1200, 1000, 500]  # hidden stack; final layer -> n_lab


# ----------------------------------------------------------------------------
# Fused Pallas kernel: whole MLP forward for one batch tile
# ----------------------------------------------------------------------------
def _mlp_fused_kernel(x_ref,
                      w1_ref, b1_ref,
                      w2_ref, b2_ref,
                      w3_ref, b3_ref,
                      w4_ref, b4_ref,
                      o_ref):
    # x_ref : (tm, 12)        f32  VMEM
    # wK_ref: (F_in, F_out)   bf16 VMEM (resident across grid steps)
    # bK_ref: (1, F_out)      f32  VMEM
    # o_ref : (tm, n_lab)     f32  VMEM

    # Layer 1: K=12 is tiny; do this dot in f32 (upcasting w1 is ~14K elems)
    # to keep full input-feature precision.
    h = jnp.dot(x_ref[...], w1_ref[...].astype(jnp.float32),
                preferred_element_type=jnp.float32)
    h = jnp.maximum(h + b1_ref[...], 0.0)

    # Layer 2: bf16 x bf16 on the MXU, f32 accumulation.
    h = jnp.dot(h.astype(jnp.bfloat16), w2_ref[...],
                preferred_element_type=jnp.float32)
    h = jnp.maximum(h + b2_ref[...], 0.0)

    # Layer 3
    h = jnp.dot(h.astype(jnp.bfloat16), w3_ref[...],
                preferred_element_type=jnp.float32)
    h = jnp.maximum(h + b3_ref[...], 0.0)

    # Layer 4 + Sigmoid (EUP)
    y = jnp.dot(h.astype(jnp.bfloat16), w4_ref[...],
                preferred_element_type=jnp.float32)
    y = jax.nn.sigmoid(y + b4_ref[...])

    o_ref[...] = y.astype(o_ref.dtype)


def _round_up(v, m):
    return ((v + m - 1) // m) * m


def mlp_forward(params, x, *, block_n=256):
    """Fused 4-layer MLP forward as one pallas_call, gridded over the batch.

    `params` is a list of four (w_bf16[(F_in,F_out)], b_f32[(1,F_out)]) pairs.
    The batch is tiled into `tm`-row blocks (tm <= block_n, multiple of 8);
    weights/biases use a constant index_map so they are DMA'd into VMEM once
    and reused across all batch tiles.
    """
    (w1, b1), (w2, b2), (w3, b3), (w4, b4) = params
    n, f_in = x.shape
    n_lab = w4.shape[1]

    # Batch tile: sublane-aligned, capped at block_n.
    tm = min(block_n, _round_up(max(n, 1), 8))
    n_pad = _round_up(max(n, 1), tm)
    if n_pad != n:
        x = jnp.pad(x, ((0, n_pad - n), (0, 0)))
    grid = (n_pad // tm,)

    def resident(arr):
        # Full-array block, constant index -> stays in VMEM across grid steps.
        return pl.BlockSpec(arr.shape, lambda i: (0, 0))

    out = pl.pallas_call(
        _mlp_fused_kernel,
        out_shape=jax.ShapeDtypeStruct((n_pad, n_lab), jnp.float32),
        grid=grid,
        in_specs=[
            pl.BlockSpec((tm, f_in), lambda i: (i, 0)),   # x tile
            resident(w1), resident(b1),
            resident(w2), resident(b2),
            resident(w3), resident(b3),
            resident(w4), resident(b4),
        ],
        out_specs=pl.BlockSpec((tm, n_lab), lambda i: (i, 0)),
        compiler_params=pltpu.CompilerParams(
            dimension_semantics=("parallel",),
            vmem_limit_bytes=64 << 20,
        ),
    )(x, w1, b1, w2, b2, w3, b3, w4, b4)

    return out[:n]


# ----------------------------------------------------------------------------
# Parameter init (mirrors nn.Linear uniform(-1/sqrt(fan_in), +)) + packing
# ----------------------------------------------------------------------------
def init_mlp_params(key, n_lab):
    sizes = _LAYER_SIZES + [n_lab]
    params_f32 = []
    for i in range(len(sizes) - 1):
        f_in, f_out = sizes[i], sizes[i + 1]
        key, kw, kb = jax.random.split(key, 3)
        bound = 1.0 / (f_in ** 0.5)
        # stored as (F_in, F_out)  (== PyTorch weight.T)
        w = jax.random.uniform(kw, (f_in, f_out), jnp.float32, -bound, bound)
        b = jax.random.uniform(kb, (f_out,), jnp.float32, -bound, bound)
        params_f32.append((w, b))
    return params_f32


def to_kernel_params(params_f32):
    """bf16 weights (halve HBM bytes), f32 biases reshaped to (1, F_out)."""
    return [(w.astype(jnp.bfloat16), b.reshape(1, -1)) for (w, b) in params_f32]


# ----------------------------------------------------------------------------
# Pure-JAX f32 reference for a correctness check
# ----------------------------------------------------------------------------
def mlp_forward_ref(params_f32, x):
    h = x
    for (w, b) in params_f32[:-1]:
        h = jnp.maximum(h @ w + b, 0.0)
    w, b = params_f32[-1]
    return jax.nn.sigmoid(h @ w + b)


if __name__ == "__main__":
    key = jax.random.PRNGKey(0)
    k_params, k_x = jax.random.split(key)

    n_lab = 2        # Pumpkin seeds dataset: 2 classes
    batch = 8        # small batch (aligned to the 8-sublane vreg dimension)

    params_f32 = init_mlp_params(k_params, n_lab)
    params = to_kernel_params(params_f32)
    x = jax.random.normal(k_x, (batch, 12), jnp.float32)

    out = jax.block_until_ready(mlp_forward(params, x))
    ref = mlp_forward_ref(params_f32, x)

    assert out.shape == (batch, n_lab), out.shape
    # bf16 weights -> loosened tolerance vs the f32 reference.
    assert jnp.allclose(out, ref, atol=2e-2, rtol=2e-2), "mismatch vs reference"

    print("KERNEL_OK")
</pallas_src>

<mosaic_0001>
module attributes {stable_mosaic.version = 11 : i64} {
  func.func @_mlp_fused_kernel(%arg0: i32, %arg1: memref<8x12xf32, #tpu.memory_space<vmem>>, %arg2: memref<12x1200xbf16, #tpu.memory_space<vmem>>, %arg3: memref<1x1200xf32, #tpu.memory_space<vmem>>, %arg4: memref<1200x1000xbf16, #tpu.memory_space<vmem>>, %arg5: memref<1x1000xf32, #tpu.memory_space<vmem>>, %arg6: memref<1000x500xbf16, #tpu.memory_space<vmem>>, %arg7: memref<1x500xf32, #tpu.memory_space<vmem>>, %arg8: memref<500x2xbf16, #tpu.memory_space<vmem>>, %arg9: memref<1x2xf32, #tpu.memory_space<vmem>>, %arg10: memref<8x2xf32, #tpu.memory_space<vmem>>) attributes {dimension_semantics = [#tpu.dimension_semantics<parallel>], iteration_bounds = array<i64: 1>, scalar_prefetch = 0 : i64, scratch_operands = 0 : i64, tpu.core_type = #tpu.core_type<tc>, window_params = [{transform_indices = @transform_0, window_bounds = array<i64: 8, 12>}, {pipeline_mode = #tpu.pipeline_mode<synchronous>, transform_indices = @transform_1, window_bounds = array<i64: 12, 1200>}, {pipeline_mode = #tpu.pipeline_mode<synchronous>, transform_indices = @transform_2, window_bounds = array<i64: 1, 1200>}, {pipeline_mode = #tpu.pipeline_mode<synchronous>, transform_indices = @transform_3, window_bounds = array<i64: 1200, 1000>}, {pipeline_mode = #tpu.pipeline_mode<synchronous>, transform_indices = @transform_4, window_bounds = array<i64: 1, 1000>}, {pipeline_mode = #tpu.pipeline_mode<synchronous>, transform_indices = @transform_5, window_bounds = array<i64: 1000, 500>}, {pipeline_mode = #tpu.pipeline_mode<synchronous>, transform_indices = @transform_6, window_bounds = array<i64: 1, 500>}, {pipeline_mode = #tpu.pipeline_mode<synchronous>, transform_indices = @transform_7, window_bounds = array<i64: 500, 2>}, {pipeline_mode = #tpu.pipeline_mode<synchronous>, transform_indices = @transform_8, window_bounds = array<i64: 1, 2>}, {transform_indices = @transform_9, window_bounds = array<i64: 8, 2>}]} {
    %c0 = arith.constant 0 : index
    %c0_0 = arith.constant 0 : index
    %0 = vector.load %arg1[%c0, %c0_0] : memref<8x12xf32, #tpu.memory_space<vmem>>, vector<8x12xf32>
    %c0_1 = arith.constant 0 : index
    %c0_2 = arith.constant 0 : index
    %1 = vector.load %arg2[%c0_1, %c0_2] : memref<12x1200xbf16, #tpu.memory_space<vmem>>, vector<12x1200xbf16>
    %2 = arith.extf %1 : vector<12x1200xbf16> to vector<12x1200xf32>
    %cst = arith.constant dense<0.000000e+00> : vector<8x1200xf32>
    %3 = tpu.matmul %0, %2, %cst {dimension_numbers = #tpu.dot_dimension_numbers<[1], [0], [0], [1], [0, 0, 1, 1], [], []>} : vector<8x12xf32>, vector<12x1200xf32>, vector<8x1200xf32> -> vector<8x1200xf32>
    %c0_3 = arith.constant 0 : index
    %c0_4 = arith.constant 0 : index
    %4 = vector.load %arg3[%c0_3, %c0_4] : memref<1x1200xf32, #tpu.memory_space<vmem>>, vector<1x1200xf32>
    %5 = vector.broadcast %4 : vector<1x1200xf32> to vector<8x1200xf32>
    %6 = arith.addf %3, %5 : vector<8x1200xf32>
    %cst_5 = arith.constant 0.000000e+00 : f32
    %7 = vector.broadcast %cst_5 : f32 to vector<8x1200xf32>
    %8 = arith.maximumf %6, %7 : vector<8x1200xf32>
    %9 = arith.truncf %8 : vector<8x1200xf32> to vector<8x1200xbf16>
    %c0_6 = arith.constant 0 : index
    %c0_7 = arith.constant 0 : index
    %10 = vector.load %arg4[%c0_6, %c0_7] : memref<1200x1000xbf16, #tpu.memory_space<vmem>>, vector<1200x1000xbf16>
    %cst_8 = arith.constant dense<0.000000e+00> : vector<8x1000xf32>
    %11 = tpu.matmul %9, %10, %cst_8 {dimension_numbers = #tpu.dot_dimension_numbers<[1], [0], [0], [1], [0, 0, 1, 1], [], []>} : vector<8x1200xbf16>, vector<1200x1000xbf16>, vector<8x1000xf32> -> vector<8x1000xf32>
    %c0_9 = arith.constant 0 : index
    %c0_10 = arith.constant 0 : index
    %12 = vector.load %arg5[%c0_9, %c0_10] : memref<1x1000xf32, #tpu.memory_space<vmem>>, vector<1x1000xf32>
    %13 = vector.broadcast %12 : vector<1x1000xf32> to vector<8x1000xf32>
    %14 = arith.addf %11, %13 : vector<8x1000xf32>
    %cst_11 = arith.constant 0.000000e+00 : f32
    %15 = vector.broadcast %cst_11 : f32 to vector<8x1000xf32>
    %16 = arith.maximumf %14, %15 : vector<8x1000xf32>
    %17 = arith.truncf %16 : vector<8x1000xf32> to vector<8x1000xbf16>
    %c0_12 = arith.constant 0 : index
    %c0_13 = arith.constant 0 : index
    %18 = vector.load %arg6[%c0_12, %c0_13] : memref<1000x500xbf16, #tpu.memory_space<vmem>>, vector<1000x500xbf16>
    %cst_14 = arith.constant dense<0.000000e+00> : vector<8x500xf32>
    %19 = tpu.matmul %17, %18, %cst_14 {dimension_numbers = #tpu.dot_dimension_numbers<[1], [0], [0], [1], [0, 0, 1, 1], [], []>} : vector<8x1000xbf16>, vector<1000x500xbf16>, vector<8x500xf32> -> vector<8x500xf32>
    %c0_15 = arith.constant 0 : index
    %c0_16 = arith.constant 0 : index
    %20 = vector.load %arg7[%c0_15, %c0_16] : memref<1x500xf32, #tpu.memory_space<vmem>>, vector<1x500xf32>
    %21 = vector.broadcast %20 : vector<1x500xf32> to vector<8x500xf32>
    %22 = arith.addf %19, %21 : vector<8x500xf32>
    %cst_17 = arith.constant 0.000000e+00 : f32
    %23 = vector.broadcast %cst_17 : f32 to vector<8x500xf32>
    %24 = arith.maximumf %22, %23 : vector<8x500xf32>
    %25 = arith.truncf %24 : vector<8x500xf32> to vector<8x500xbf16>
    %c0_18 = arith.constant 0 : index
    %c0_19 = arith.constant 0 : index
    %26 = vector.load %arg8[%c0_18, %c0_19] : memref<500x2xbf16, #tpu.memory_space<vmem>>, vector<500x2xbf16>
    %cst_20 = arith.constant dense<0.000000e+00> : vector<8x2xf32>
    %27 = tpu.matmul %25, %26, %cst_20 {dimension_numbers = #tpu.dot_dimension_numbers<[1], [0], [0], [1], [0, 0, 1, 1], [], []>} : vector<8x500xbf16>, vector<500x2xbf16>, vector<8x2xf32> -> vector<8x2xf32>
    %c0_21 = arith.constant 0 : index
    %c0_22 = arith.constant 0 : index
    %28 = vector.load %arg9[%c0_21, %c0_22] : memref<1x2xf32, #tpu.memory_space<vmem>>, vector<1x2xf32>
    %29 = vector.broadcast %28 : vector<1x2xf32> to vector<8x2xf32>
    %30 = arith.addf %27, %29 : vector<8x2xf32>
    %31 = arith.negf %30 : vector<8x2xf32>
    %32 = math.exp %31 : vector<8x2xf32>
    %cst_23 = arith.constant 1.000000e+00 : f32
    %33 = vector.broadcast %cst_23 : f32 to vector<8x2xf32>
    %34 = arith.addf %33, %32 : vector<8x2xf32>
    %35 = arith.divf %33, %34 : vector<8x2xf32>
    %c0_24 = arith.constant 0 : index
    %c0_25 = arith.constant 0 : index
    %36 = vector.load %arg10[%c0_24, %c0_25] : memref<8x2xf32, #tpu.memory_space<vmem>>, vector<8x2xf32>
    tpu.vector_store %arg10[%c0_24, %c0_25], %35 {strides = array<i32>} : memref<8x2xf32, #tpu.memory_space<vmem>>, vector<8x2xf32>,
    return
  }
  func.func @transform_0(%arg0: i32) -> (i32, i32) {
    %c0_i32 = arith.constant 0 : i32
    %c0_i32_0 = arith.constant 0 : i32
    return %arg0, %c0_i32 : i32, i32
  }
  func.func @transform_1(%arg0: i32) -> (i32, i32) {
    %c0_i32 = arith.constant 0 : i32
    %c0_i32_0 = arith.constant 0 : i32
    %c0_i32_1 = arith.constant 0 : i32
    return %c0_i32, %c0_i32_0 : i32, i32
  }
  func.func @transform_2(%arg0: i32) -> (i32, i32) {
    %c0_i32 = arith.constant 0 : i32
    %c0_i32_0 = arith.constant 0 : i32
    %c0_i32_1 = arith.constant 0 : i32
    return %c0_i32, %c0_i32_0 : i32, i32
  }
  func.func @transform_3(%arg0: i32) -> (i32, i32) {
    %c0_i32 = arith.constant 0 : i32
    %c0_i32_0 = arith.constant 0 : i32
    %c0_i32_1 = arith.constant 0 : i32
    return %c0_i32, %c0_i32_0 : i32, i32
  }
  func.func @transform_4(%arg0: i32) -> (i32, i32) {
    %c0_i32 = arith.constant 0 : i32
    %c0_i32_0 = arith.constant 0 : i32
    %c0_i32_1 = arith.constant 0 : i32
    return %c0_i32, %c0_i32_0 : i32, i32
  }
  func.func @transform_5(%arg0: i32) -> (i32, i32) {
    %c0_i32 = arith.constant 0 : i32
    %c0_i32_0 = arith.constant 0 : i32
    %c0_i32_1 = arith.constant 0 : i32
    return %c0_i32, %c0_i32_0 : i32, i32
  }
  func.func @transform_6(%arg0: i32) -> (i32, i32) {
    %c0_i32 = arith.constant 0 : i32
    %c0_i32_0 = arith.constant 0 : i32
    %c0_i32_1 = arith.constant 0 : i32
    return %c0_i32, %c0_i32_0 : i32, i32
  }
  func.func @transform_7(%arg0: i32) -> (i32, i32) {
    %c0_i32 = arith.constant 0 : i32
    %c0_i32_0 = arith.constant 0 : i32
    %c0_i32_1 = arith.constant 0 : i32
    return %c0_i32, %c0_i32_0 : i32, i32
  }
  func.func @transform_8(%arg0: i32) -> (i32, i32) {
    %c0_i32 = arith.constant 0 : i32
    %c0_i32_0 = arith.constant 0 : i32
    %c0_i32_1 = arith.constant 0 : i32
    return %c0_i32, %c0_i32_0 : i32, i32
  }
  func.func @transform_9(%arg0: i32) -> (i32, i32) {
    %c0_i32 = arith.constant 0 : i32
    %c0_i32_0 = arith.constant 0 : i32
    return %arg0, %c0_i32 : i32, i32
  }
}

</mosaic_0001>

<llo_original>
// kernel: tpu_custom_call.1
$region0: #{tpu_custom_call.1}
  #allocation0 [shape = 'u32[]', space=smem, size = 0x4, offset = 0x4, fixed_abs, tag = 'smem constant byte address 0x4 - core index']
  #allocation1 [shape = 'u32[144,128]{1,0:T(1,128)}', space=vmem, size = 0x12000, scoped, tag = 'internal scratch']
  %s0 = inlined_call_operand.hbm [shape: f32[8,12], index: 0, kind: input, shape index: {}]
  %s1 = inlined_call_operand.hbm [shape: bf16[12,1200], index: 1, kind: input, shape index: {}]
  %s2 = inlined_call_operand.hbm [shape: f32[1,1200], index: 2, kind: input, shape index: {}]
  %s3 = inlined_call_operand.hbm [shape: bf16[1200,1000], index: 3, kind: input, shape index: {}]
  %s4 = inlined_call_operand.hbm [shape: f32[1,1000], index: 4, kind: input, shape index: {}]
  %s5 = inlined_call_operand.hbm [shape: bf16[1000,500], index: 5, kind: input, shape index: {}]
  %s6 = inlined_call_operand.hbm [shape: f32[1,500], index: 6, kind: input, shape index: {}]
  %s7 = inlined_call_operand.vmem [shape: bf16[500,2], index: 7, kind: input, shape index: {}]
  %s8 = inlined_call_operand.hbm [shape: f32[1,2], index: 8, kind: input, shape index: {}]
  %s9 = inlined_call_operand.vmem [shape: f32[8,2], index: 9, kind: output, shape index: {}]
  %s10 = sld [smem:[#allocation0]]
  $region78: #{tpu_custom_call.1} parent=0
    _
  %s12 = ssub.s32 1, %s10
  %s13 = scalar_select 0, %s12, %s10
  $region1: #{tpu_custom_call.1} parent=0
    #allocation2 [shape = 'u8[4096]{0}', space=vmem, size = 0x1000, scoped, tag = 'input window, operand 0, single buffered']
    #allocation3 [shape = 's32[1]{0}', space=sflag, size = 0x4, scoped, tag = 'scoped memory for tpu_custom_call.1']
    #allocation4 [shape = 'u8[40960]{0}', space=vmem, size = 0xa000, scoped, tag = 'input window, operand 1, single buffered']
    #allocation5 [shape = 's32[1]{0}', space=sflag, size = 0x4, scoped, tag = 'scoped memory for tpu_custom_call.1']
    #allocation6 [shape = 'u8[5120]{0}', space=vmem, size = 0x1400, scoped, tag = 'input window, operand 2, single buffered']
    #allocation7 [shape = 'u8[2457600]{0}', space=vmem, size = 0x258000, scoped, tag = 'input window, operand 3, single buffered']
    #allocation8 [shape = 's32[1]{0}', space=sflag, size = 0x4, scoped, tag = 'scoped memory for tpu_custom_call.1']
    #allocation9 [shape = 'u8[4096]{0}', space=vmem, size = 0x1000, scoped, tag = 'input window, operand 4, single buffered']
    #allocation10 [shape = 'u8[1024000]{0}', space=vmem, size = 0xfa000, scoped, tag = 'input window, operand 5, single buffered']
    #allocation11 [shape = 's32[1]{0}', space=sflag, size = 0x4, scoped, tag = 'scoped memory for tpu_custom_call.1']
    #allocation12 [shape = 'u8[2048]{0}', space=vmem, size = 0x800, scoped, tag = 'input window, operand 6, single buffered']
    #allocation13 [shape = 'u8[512]{0}', space=vmem, size = 0x400, scoped, tag = 'input window, operand 8, single buffered']
    #allocation14 [shape = 's32[1]{0}', space=sflag, size = 0x4, scoped, tag = 'scoped memory for tpu_custom_call.1']
    %14 = vsyncpa [#allocation3], 0
    %15 = vsyncpa [#allocation5], 0
    %16 = vsyncpa [#allocation8], 0
    %17 = vsyncpa [#allocation11], 0
    %18 = vsyncpa [#allocation14], 0
    // Predicated region
    $region2: #{tpu_custom_call.1} parent=1 // pred_check
      _
    $region3: #{tpu_custom_call.1} parent=1 // pred_check_branch
      %20 = sbr.rel (0) target = $region5
    $region4: #{tpu_custom_call.1} parent=1 // pred_region
      %s22 = ssub.s32 128, 128
      %23 = vsyncadd [#allocation3], %s22
      %s25 = sshll.u32 [#allocation2], 4
      %s26 = int_to_ptr.vmem [resolvable:$true] %s25
      %28 = dma.hbm_to_vmem [thread:$0]  %s0, 128, %s26, [#allocation3]
    $region5: #{tpu_custom_call.1} parent=1 // pred_fallthru
      _
    // Predicated region
    $region6: #{tpu_custom_call.1} parent=1 // pred_check
      _
    $region7: #{tpu_custom_call.1} parent=1 // pred_check_branch
      %30 = sbr.rel (0) target = $region9
    $region8: #{tpu_custom_call.1} parent=1 // pred_region
      %s32 = ssub.s32 1280, 1280
      %33 = vsyncadd [#allocation5], %s32
      %s34 = sshll.u32 [#allocation4], 4
      %s35 = int_to_ptr.vmem [resolvable:$true] %s34
      %40 = dma.hbm_to_vmem [thread:$0]  %s1, 1280, %s35, [#allocation5], 640, 640, 40
    $region9: #{tpu_custom_call.1} parent=1 // pred_fallthru
      _
    // Predicated region
    $region10: #{tpu_custom_call.1} parent=1 // pred_check
      _
    $region11: #{tpu_custom_call.1} parent=1 // pred_check_branch
      %42 = sbr.rel (0) target = $region13
    $region12: #{tpu_custom_call.1} parent=1 // pred_region
      %s44 = ssub.s32 160, 160
      %45 = vsyncadd [#allocation5], %s44
      %s47 = sshll.u32 [#allocation6], 4
      %s48 = int_to_ptr.vmem [resolvable:$true] %s47
      %50 = dma.hbm_to_vmem [thread:$0]  %s2, 160, %s48, [#allocation5]
    $region13: #{tpu_custom_call.1} parent=1 // pred_fallthru
      _
    // Predicated region
    $region14: #{tpu_custom_call.1} parent=1 // pred_check
      _
    $region15: #{tpu_custom_call.1} parent=1 // pred_check_branch
      %52 = sbr.rel (0) target = $region17
    $region16: #{tpu_custom_call.1} parent=1 // pred_region
      %s54 = ssub.s32 76800, 76800
      %55 = vsyncadd [#allocation8], %s54
      %s56 = sshll.u32 [#allocation7], 4
      %s57 = int_to_ptr.vmem [resolvable:$true] %s56
      %62 = dma.hbm_to_vmem [thread:$0]  %s3, 76800, %s57, [#allocation8], 512, 512, 32
    $region17: #{tpu_custom_call.1} parent=1 // pred_fallthru
      _
    // Predicated region
    $region18: #{tpu_custom_call.1} parent=1 // pred_check
      _
    $region19: #{tpu_custom_call.1} parent=1 // pred_check_branch
      %64 = sbr.rel (0) target = $region21
    $region20: #{tpu_custom_call.1} parent=1 // pred_region
      %s66 = ssub.s32 128, 128
      %67 = vsyncadd [#allocation8], %s66
      %s69 = sshll.u32 [#allocation9], 4
      %s70 = int_to_ptr.vmem [resolvable:$true] %s69
      %72 = dma.hbm_to_vmem [thread:$0]  %s4, 128, %s70, [#allocation8]
    $region21: #{tpu_custom_call.1} parent=1 // pred_fallthru
      _
    // Predicated region
    $region22: #{tpu_custom_call.1} parent=1 // pred_check
      _
    $region23: #{tpu_custom_call.1} parent=1 // pred_check_branch
      %74 = sbr.rel (0) target = $region25
    $region24: #{tpu_custom_call.1} parent=1 // pred_region
      %s76 = ssub.s32 32000, 32000
      %77 = vsyncadd [#allocation11], %s76
      %s78 = sshll.u32 [#allocation10], 4
      %s79 = int_to_ptr.vmem [resolvable:$true] %s78
      %84 = dma.hbm_to_vmem [thread:$0]  %s5, 32000, %s79, [#allocation11], 256, 256, 16
    $region25: #{tpu_custom_call.1} parent=1 // pred_fallthru
      _
    // Predicated region
    $region26: #{tpu_custom_call.1} parent=1 // pred_check
      _
    $region27: #{tpu_custom_call.1} parent=1 // pred_check_branch
      %86 = sbr.rel (0) target = $region29
    $region28: #{tpu_custom_call.1} parent=1 // pred_region
      %s88 = ssub.s32 64, 64
      %89 = vsyncadd [#allocation11], %s88
      %s91 = sshll.u32 [#allocation12], 4
      %s92 = int_to_ptr.vmem [resolvable:$true] %s91
      %94 = dma.hbm_to_vmem [thread:$0]  %s6, 64, %s92, [#allocation11]
    $region29: #{tpu_custom_call.1} parent=1 // pred_fallthru
      _
    // Predicated region
    $region30: #{tpu_custom_call.1} parent=1 // pred_check
      _
    $region31: #{tpu_custom_call.1} parent=1 // pred_check_branch
      %96 = sbr.rel (0) target = $region33
    $region32: #{tpu_custom_call.1} parent=1 // pred_region
      _
    $region33: #{tpu_custom_call.1} parent=1 // pred_fallthru
      _
    // Predicated region
    $region34: #{tpu_custom_call.1} parent=1 // pred_check
      _
    $region35: #{tpu_custom_call.1} parent=1 // pred_check_branch
      %98 = sbr.rel (0) target = $region37
    $region36: #{tpu_custom_call.1} parent=1 // pred_region
      %s100 = ssub.s32 16, 16
      %101 = vsyncadd [#allocation14], %s100
      %s103 = sshll.u32 [#allocation13], 4
      %s104 = int_to_ptr.vmem [resolvable:$true] %s103
      %106 = dma.hbm_to_vmem [thread:$0]  %s8, 16, %s104, [#allocation14]
    $region37: #{tpu_custom_call.1} parent=1 // pred_fallthru
      _
    // Predicated region
    $region38: #{tpu_custom_call.1} parent=1 // pred_check
      _
    $region39: #{tpu_custom_call.1} parent=1 // pred_check_branch
      %108 = sbr.rel (0) target = $region41
    $region40: #{tpu_custom_call.1} parent=1 // pred_region
      %109 = dma.done [#allocation3], 128
    $region41: #{tpu_custom_call.1} parent=1 // pred_fallthru
      _
    // Predicated region
    $region42: #{tpu_custom_call.1} parent=1 // pred_check
      _
    $region43: #{tpu_custom_call.1} parent=1 // pred_check_branch
      %111 = sbr.rel (0) target = $region45
    $region44: #{tpu_custom_call.1} parent=1 // pred_region
      %112 = dma.done [#allocation5], 1280
    $region45: #{tpu_custom_call.1} parent=1 // pred_fallthru
      _
    // Predicated region
    $region46: #{tpu_custom_call.1} parent=1 // pred_check
      _
    $region47: #{tpu_custom_call.1} parent=1 // pred_check_branch
      %114 = sbr.rel (0) target = $region49
    $region48: #{tpu_custom_call.1} parent=1 // pred_region
      %115 = dma.done [#allocation5], 160
    $region49: #{tpu_custom_call.1} parent=1 // pred_fallthru
      _
    // Predicated region
    $region50: #{tpu_custom_call.1} parent=1 // pred_check
      _
    $region51: #{tpu_custom_call.1} parent=1 // pred_check_branch
      %117 = sbr.rel (0) target = $region53
    $region52: #{tpu_custom_call.1} parent=1 // pred_region
      %118 = dma.done [#allocation8], 76800
    $region53: #{tpu_custom_call.1} parent=1 // pred_fallthru
      _
    // Predicated region
    $region54: #{tpu_custom_call.1} parent=1 // pred_check
      _
    $region55: #{tpu_custom_call.1} parent=1 // pred_check_branch
      %120 = sbr.rel (0) target = $region57
    $region56: #{tpu_custom_call.1} parent=1 // pred_region
      %121 = dma.done [#allocation8], 128
    $region57: #{tpu_custom_call.1} parent=1 // pred_fallthru
      _
    // Predicated region
    $region58: #{tpu_custom_call.1} parent=1 // pred_check
      _
    $region59: #{tpu_custom_call.1} parent=1 // pred_check_branch
      %123 = sbr.rel (0) target = $region61
    $region60: #{tpu_custom_call.1} parent=1 // pred_region
      %124 = dma.done [#allocation11], 32000
    $region61: #{tpu_custom_call.1} parent=1 // pred_fallthru
      _
    // Predicated region
    $region62: #{tpu_custom_call.1} parent=1 // pred_check
      _
    $region63: #{tpu_custom_call.1} parent=1 // pred_check_branch
      %126 = sbr.rel (0) target = $region65
    $region64: #{tpu_custom_call.1} parent=1 // pred_region
      %127 = dma.done [#allocation11], 64
    $region65: #{tpu_custom_call.1} parent=1 // pred_fallthru
      _
    // Predicated region
    $region66: #{tpu_custom_call.1} parent=1 // pred_check
      _
    $region67: #{tpu_custom_call.1} parent=1 // pred_check_branch
      %129 = sbr.rel (0) target = $region69
    $region68: #{tpu_custom_call.1} parent=1 // pred_region
      %130 = dma.done [#allocation14], 16
    $region69: #{tpu_custom_call.1} parent=1 // pred_fallthru
      _
    %v132 = vld [vmem:[#allocation2] sm:$0xff]
    %v133 = vld [vmem:[#allocation4] sm:$0xff]
    %v134 = vld [vmem:[#allocation4 + $0x8] sm:$0xff]
    %v135 = vld [vmem:[#allocation4 + $0x10] sm:$0xff]
    %v136 = vld [vmem:[#allocation4 + $0x18] sm:$0xff]
    %v137 = vld [vmem:[#allocation4 + $0x20] sm:$0xff]
    %v138 = vld [vmem:[#allocation4 + $0x28] sm:$0x33]
    %v139 = vld [vmem:[#allocation4 + $0x30] sm:$0x33]
    %v140 = vld [vmem:[#allocation4 + $0x38] sm:$0x33]
    %v141 = vld [vmem:[#allocation4 + $0x40] sm:$0x33]
    %v142 = vld [vmem:[#allocation4 + $0x48] sm:$0x33]
    %v143 = vunpack.c.l.bf16 %v133
    %v144 = vunpack.c.h.bf16 %v133
    %v145 = vunpack.c.l.bf16 %v134
    %v146 = vunpack.c.h.bf16 %v134
    %v147 = vunpack.c.l.bf16 %v135
    %v148 = vunpack.c.h.bf16 %v135
    %v149 = vunpack.c.l.bf16 %v136
    %v150 = vunpack.c.h.bf16 %v136
    %v151 = vunpack.c.l.bf16 %v137
    %v152 = vunpack.c.h.bf16 %v137
    %v153 = vunpack.c.l.bf16 %v138
    %v154 = vunpack.c.h.bf16 %v138
    %v155 = vunpack.c.l.bf16 %v139
    %v156 = vunpack.c.h.bf16 %v139
    %v157 = vunpack.c.l.bf16 %v140
    %v158 = vunpack.c.h.bf16 %v140
    %v159 = vunpack.c.l.bf16 %v141
    %v160 = vunpack.c.h.bf16 %v141
    %v161 = vunpack.c.l.bf16 %v142
    %v162 = vunpack.c.h.bf16 %v142
    %v163 = vld [vmem:[#allocation6] sm:$0xff]
    %v164 = vld [vmem:[#allocation6 + $0x8] sm:$0x3]
    %v167 = vlaneseq
    %v168 = vshrl.u32 %v167, 7
    %v169 = vsub.s32 0, %v168
    %v170 = vrot.slane %v163, %v169
    %v171 = vlaneseq
    %v172 = vshrl.u32 %v171, 7
    %v173 = vsub.s32 1, %v172
    %v174 = vrot.slane %v163, %v173
    %v175 = vlaneseq
    %v176 = vshrl.u32 %v175, 7
    %v177 = vsub.s32 2, %v176
    %v178 = vrot.slane %v163, %v177
    %v179 = vlaneseq
    %v180 = vshrl.u32 %v179, 7
    %v181 = vsub.s32 3, %v180
    %v182 = vrot.slane %v163, %v181
    %v183 = vlaneseq
    %v184 = vshrl.u32 %v183, 7
    %v185 = vsub.s32 4, %v184
    %v186 = vrot.slane %v163, %v185
    %v187 = vlaneseq
    %v188 = vshrl.u32 %v187, 7
    %v189 = vsub.s32 5, %v188
    %v190 = vrot.slane %v163, %v189
    %v191 = vlaneseq
    %v192 = vshrl.u32 %v191, 7
    %v193 = vsub.s32 6, %v192
    %v194 = vrot.slane %v163, %v193
    %v195 = vlaneseq
    %v196 = vshrl.u32 %v195, 7
    %v197 = vsub.s32 7, %v196
    %v198 = vrot.slane %v163, %v197
    %v199 = vlaneseq
    %v200 = vshrl.u32 %v199, 7
    %v201 = vsub.s32 0, %v200
    %v202 = vrot.slane %v164, %v201
    %v203 = vlaneseq
    %v204 = vshrl.u32 %v203, 7
    %v205 = vsub.s32 1, %v204
    %v206 = vrot.slane %v164, %v205
    %vm217 = vcmask 97280
    %v219 = vsel %vm217, %v132, 0
    %vm221 = vcmask 1043456
    %v223 = vsel %vm221, %v153, 0
    %v226 = vsel %vm221, %v154, 0
    %v229 = vsel %vm221, %v155, 0
    %v232 = vsel %vm221, %v156, 0
    %v235 = vsel %vm221, %v157, 0
    %v238 = vsel %vm221, %v158, 0
    %v241 = vsel %vm221, %v159, 0
    %v244 = vsel %vm221, %v160, 0
    %v247 = vsel %vm221, %v161, 0
    %v250 = vsel %vm221, %v162, 0
    %252 = vmatprep.subr.mxu0 0.0
    %253 = vmatpush1.msra.mxu0 0.0
    %254 = vmatprep.subr.mxu0 0.0
    %255 = vmatpush1.msra.mxu0 0.0
    %256 = vmatprep.subr.mxu0 0.0
    %257 = vmatpush1.msra.mxu0 0.0
    %258 = vmatprep.subr.mxu0 0.0
    %259 = vmatpush1.msra.mxu0 0.0
    %260 = vmatprep.subr.mxu0 0.0
    %261 = vmatpush1.msra.mxu0 0.0
    %262 = vmatprep.subr.mxu0 0.0
    %263 = vmatpush1.msra.mxu0 0.0
    %264 = vmatprep.subr.mxu0 0.0
    %265 = vmatpush1.msra.mxu0 0.0
    %266 = vmatprep.subr.mxu0 0.0
    %267 = vmatpush1.msra.mxu0 0.0
    %268 = vmatprep.subr.mxu0 0.0
    %269 = vmatpush1.msra.mxu0 0.0
    %270 = vmatprep.subr.mxu0 0.0
    %271 = vmatpush1.msra.mxu0 0.0
    %272 = vmatprep.subr.mxu0 0.0
    %273 = vmatpush1.msra.mxu0 0.0
    %274 = vmatprep.subr.mxu0 0.0
    %275 = vmatpush1.msra.mxu0 0.0
    %276 = vmatprep.subr.mxu0 0.0
    %277 = vmatpush1.msra.mxu0 0.0
    %278 = vmatprep.subr.mxu0 0.0
    %279 = vmatpush1.msra.mxu0 0.0
    %280 = vmatprep.subr.mxu0 %v226
    %281 = vmatpush1.msra.mxu0 %v223
    %282 = vmatprep.subr.mxu0 %v144
    %283 = vmatpush1.msra.mxu0 %v143
    %284 = vmatprep.subr.mxu0 0.0
    %285 = vmatpush2.msra.mxu0 0.0
    %286 = vmatprep.subr.mxu0 0.0
    %287 = vmatpush2.msra.mxu0 0.0
    %288 = vmatprep.subr.mxu0 0.0
    %289 = vmatpush2.msra.mxu0 0.0
    %290 = vmatprep.subr.mxu0 0.0
    %291 = vmatpush2.msra.mxu0 0.0
    %292 = vmatprep.subr.mxu0 0.0
    %293 = vmatpush2.msra.mxu0 0.0
    %294 = vmatprep.subr.mxu0 0.0
    %295 = vmatpush2.msra.mxu0 0.0
    %296 = vmatprep.subr.mxu0 0.0
    %297 = vmatpush2.msra.mxu0 0.0
    %298 = vmatprep.subr.mxu0 0.0
    %299 = vmatpush2.msra.mxu0 0.0
    %300 = vmatprep.subr.mxu0 0.0
    %301 = vmatpush2.msra.mxu0 0.0
    %302 = vmatprep.subr.mxu0 0.0
    %303 = vmatpush2.msra.mxu0 0.0
    %304 = vmatprep.subr.mxu0 0.0
    %305 = vmatpush2.msra.mxu0 0.0
    %306 = vmatprep.subr.mxu0 0.0
    %307 = vmatpush2.msra.mxu0 0.0
    %308 = vmatprep.subr.mxu0 0.0
    %309 = vmatpush2.msra.mxu0 0.0
    %310 = vmatprep.subr.mxu0 0.0
    %311 = vmatpush2.msra.mxu0 0.0
    %312 = vmatprep.subr.mxu0 0.0
    %313 = vmatpush2.msra.mxu0 0.0
    %314 = vmatprep.subr.mxu0 0.0
    %315 = vmatpush2.msra.mxu0 0.0
    %316 = vmatprep.mubr.f32.mxu0 0.0
    %317 = vmatmul.mubr.f32.gmra.mxu0 %v219
    %v318 = vpop.f32.mrf.mxu0
    %v319 = vadd.f32 %v170, %v318
    %v320 = vpop.f32.mrf.mxu0
    %v321 = vadd.f32 %v174, %v320
    %322 = vdwg.mxu0
    %323 = vmatprep.subr.mxu0 0.0
    %324 = vmatpush1.msra.mxu0 0.0
    %325 = vmatprep.subr.mxu0 0.0
    %326 = vmatpush1.msra.mxu0 0.0
    %327 = vmatprep.subr.mxu0 0.0
    %328 = vmatpush1.msra.mxu0 0.0
    %329 = vmatprep.subr.mxu0 0.0
    %330 = vmatpush1.msra.mxu0 0.0
    %331 = vmatprep.subr.mxu0 0.0
    %332 = vmatpush1.msra.mxu0 0.0
    %333 = vmatprep.subr.mxu0 0.0
    %334 = vmatpush1.msra.mxu0 0.0
    %335 = vmatprep.subr.mxu0 0.0
    %336 = vmatpush1.msra.mxu0 0.0
    %337 = vmatprep.subr.mxu0 0.0
    %338 = vmatpush1.msra.mxu0 0.0
    %339 = vmatprep.subr.mxu0 0.0
    %340 = vmatpush1.msra.mxu0 0.0
    %341 = vmatprep.subr.mxu0 0.0
    %342 = vmatpush1.msra.mxu0 0.0
    %343 = vmatprep.subr.mxu0 0.0
    %344 = vmatpush1.msra.mxu0 0.0
    %345 = vmatprep.subr.mxu0 0.0
    %346 = vmatpush1.msra.mxu0 0.0
    %347 = vmatprep.subr.mxu0 0.0
    %348 = vmatpush1.msra.mxu0 0.0
    %349 = vmatprep.subr.mxu0 0.0
    %350 = vmatpush1.msra.mxu0 0.0
    %351 = vmatprep.subr.mxu0 %v232
    %352 = vmatpush1.msra.mxu0 %v229
    %353 = vmatprep.subr.mxu0 %v146
    %354 = vmatpush1.msra.mxu0 %v145
    %355 = vmatprep.subr.mxu0 0.0
    %356 = vmatpush2.msra.mxu0 0.0
    %357 = vmatprep.subr.mxu0 0.0
    %358 = vmatpush2.msra.mxu0 0.0
    %359 = vmatprep.subr.mxu0 0.0
    %360 = vmatpush2.msra.mxu0 0.0
    %361 = vmatprep.subr.mxu0 0.0
    %362 = vmatpush2.msra.mxu0 0.0
    %363 = vmatprep.subr.mxu0 0.0
    %364 = vmatpush2.msra.mxu0 0.0
    %365 = vmatprep.subr.mxu0 0.0
    %366 = vmatpush2.msra.mxu0 0.0
    %367 = vmatprep.subr.mxu0 0.0
    %368 = vmatpush2.msra.mxu0 0.0
    %369 = vmatprep.subr.mxu0 0.0
    %370 = vmatpush2.msra.mxu0 0.0
    %371 = vmatprep.subr.mxu0 0.0
    %372 = vmatpush2.msra.mxu0 0.0
    %373 = vmatprep.subr.mxu0 0.0
    %374 = vmatpush2.msra.mxu0 0.0
    %375 = vmatprep.subr.mxu0 0.0
    %376 = vmatpush2.msra.mxu0 0.0
    %377 = vmatprep.subr.mxu0 0.0
    %378 = vmatpush2.msra.mxu0 0.0
    %379 = vmatprep.subr.mxu0 0.0
    %380 = vmatpush2.msra.mxu0 0.0
    %381 = vmatprep.subr.mxu0 0.0
    %382 = vmatpush2.msra.mxu0 0.0
    %383 = vmatprep.subr.mxu0 0.0
    %384 = vmatpush2.msra.mxu0 0.0
    %385 = vmatprep.subr.mxu0 0.0
    %386 = vmatpush2.msra.mxu0 0.0
    %387 = vmatprep.mubr.f32.mxu0 0.0
    %388 = vmatmul.mubr.f32.gmra.mxu0 %v219
    %v389 = vpop.f32.mrf.mxu0
    %v390 = vadd.f32 %v178, %v389
    %v391 = vpop.f32.mrf.mxu0
    %v392 = vadd.f32 %v182, %v391
    %393 = vdwg.mxu0
    %394 = vmatprep.subr.mxu0 0.0
    %395 = vmatpush1.msra.mxu0 0.0
    %396 = vmatprep.subr.mxu0 0.0
    %397 = vmatpush1.msra.mxu0 0.0
    %398 = vmatprep.subr.mxu0 0.0
    %399 = vmatpush1.msra.mxu0 0.0
    %400 = vmatprep.subr.mxu0 0.0
    %401 = vmatpush1.msra.mxu0 0.0
    %402 = vmatprep.subr.mxu0 0.0
    %403 = vmatpush1.msra.mxu0 0.0
    %404 = vmatprep.subr.mxu0 0.0
    %405 = vmatpush1.msra.mxu0 0.0
    %406 = vmatprep.subr.mxu0 0.0
    %407 = vmatpush1.msra.mxu0 0.0
    %408 = vmatprep.subr.mxu0 0.0
    %409 = vmatpush1.msra.mxu0 0.0
    %410 = vmatprep.subr.mxu0 0.0
    %411 = vmatpush1.msra.mxu0 0.0
    %412 = vmatprep.subr.mxu0 0.0
    %413 = vmatpush1.msra.mxu0 0.0
    %414 = vmatprep.subr.mxu0 0.0
    %415 = vmatpush1.msra.mxu0 0.0
    %416 = vmatprep.subr.mxu0 0.0
    %417 = vmatpush1.msra.mxu0 0.0
    %418 = vmatprep.subr.mxu0 0.0
    %419 = vmatpush1.msra.mxu0 0.0
    %420 = vmatprep.subr.mxu0 0.0
    %421 = vmatpush1.msra.mxu0 0.0
    %422 = vmatprep.subr.mxu0 %v238
    %423 = vmatpush1.msra.mxu0 %v235
    %424 = vmatprep.subr.mxu0 %v148
    %425 = vmatpush1.msra.mxu0 %v147
    %426 = vmatprep.subr.mxu0 0.0
    %427 = vmatpush2.msra.mxu0 0.0
    %428 = vmatprep.subr.mxu0 0.0
    %429 = vmatpush2.msra.mxu0 0.0
    %430 = vmatprep.subr.mxu0 0.0
    %431 = vmatpush2.msra.mxu0 0.0
    %432 = vmatprep.subr.mxu0 0.0
    %433 = vmatpush2.msra.mxu0 0.0
    %434 = vmatprep.subr.mxu0 0.0
    %435 = vmatpush2.msra.mxu0 0.0
    %436 = vmatprep.subr.mxu0 0.0
    %437 = vmatpush2.msra.mxu0 0.0
    %438 = vmatprep.subr.mxu0 0.0
    %439 = vmatpush2.msra.mxu0 0.0
    %440 = vmatprep.subr.mxu0 0.0
    %441 = vmatpush2.msra.mxu0 0.0
    %442 = vmatprep.subr.mxu0 0.0
    %443 = vmatpush2.msra.mxu0 0.0
    %444 = vmatprep.subr.mxu0 0.0
    %445 = vmatpush2.msra.mxu0 0.0
    %446 = vmatprep.subr.mxu0 0.0
    %447 = vmatpush2.msra.mxu0 0.0
    %448 = vmatprep.subr.mxu0 0.0
    %449 = vmatpush2.msra.mxu0 0.0
    %450 = vmatprep.subr.mxu0 0.0
    %451 = vmatpush2.msra.mxu0 0.0
    %452 = vmatprep.subr.mxu0 0.0
    %453 = vmatpush2.msra.mxu0 0.0
    %454 = vmatprep.subr.mxu0 0.0
    %455 = vmatpush2.msra.mxu0 0.0
    %456 = vmatprep.subr.mxu0 0.0
    %457 = vmatpush2.msra.mxu0 0.0
    %458 = vmatprep.mubr.f32.mxu0 0.0
    %459 = vmatmul.mubr.f32.gmra.mxu0 %v219
    %v460 = vpop.f32.mrf.mxu0
    %v461 = vadd.f32 %v186, %v460
    %v462 = vpop.f32.mrf.mxu0
    %v463 = vadd.f32 %v190, %v462
    %464 = vdwg.mxu0
    %465 = vmatprep.subr.mxu0 0.0
    %466 = vmatpush1.msra.mxu0 0.0
    %467 = vmatprep.subr.mxu0 0.0
    %468 = vmatpush1.msra.mxu0 0.0
    %469 = vmatprep.subr.mxu0 0.0
    %470 = vmatpush1.msra.mxu0 0.0
    %471 = vmatprep.subr.mxu0 0.0
    %472 = vmatpush1.msra.mxu0 0.0
    %473 = vmatprep.subr.mxu0 0.0
    %474 = vmatpush1.msra.mxu0 0.0
    %475 = vmatprep.subr.mxu0 0.0
    %476 = vmatpush1.msra.mxu0 0.0
    %477 = vmatprep.subr.mxu0 0.0
    %478 = vmatpush1.msra.mxu0 0.0
    %479 = vmatprep.subr.mxu0 0.0
    %480 = vmatpush1.msra.mxu0 0.0
    %481 = vmatprep.subr.mxu0 0.0
    %482 = vmatpush1.msra.mxu0 0.0
    %483 = vmatprep.subr.mxu0 0.0
    %484 = vmatpush1.msra.mxu0 0.0
    %485 = vmatprep.subr.mxu0 0.0
    %486 = vmatpush1.msra.mxu0 0.0
    %487 = vmatprep.subr.mxu0 0.0
    %488 = vmatpush1.msra.mxu0 0.0
    %489 = vmatprep.subr.mxu0 0.0
    %490 = vmatpush1.msra.mxu0 0.0
    %491 = vmatprep.subr.mxu0 0.0
    %492 = vmatpush1.msra.mxu0 0.0
    %493 = vmatprep.subr.mxu0 %v244
    %494 = vmatpush1.msra.mxu0 %v241
    %495 = vmatprep.subr.mxu0 %v150
    %496 = vmatpush1.msra.mxu0 %v149
    %497 = vmatprep.subr.mxu0 0.0
    %498 = vmatpush2.msra.mxu0 0.0
    %499 = vmatprep.subr.mxu0 0.0
    %500 = vmatpush2.msra.mxu0 0.0
    %501 = vmatprep.subr.mxu0 0.0
    %502 = vmatpush2.msra.mxu0 0.0
    %503 = vmatprep.subr.mxu0 0.0
    %504 = vmatpush2.msra.mxu0 0.0
    %505 = vmatprep.subr.mxu0 0.0
    %506 = vmatpush2.msra.mxu0 0.0
    %507 = vmatprep.subr.mxu0 0.0
    %508 = vmatpush2.msra.mxu0 0.0
    %509 = vmatprep.subr.mxu0 0.0
    %510 = vmatpush2.msra.mxu0 0.0
    %511 = vmatprep.subr.mxu0 0.0
    %512 = vmatpush2.msra.mxu0 0.0
    %513 = vmatprep.subr.mxu0 0.0
    %514 = vmatpush2.msra.mxu0 0.0
    %515 = vmatprep.subr.mxu0 0.0
    %516 = vmatpush2.msra.mxu0 0.0
    %517 = vmatprep.subr.mxu0 0.0
    %518 = vmatpush2.msra.mxu0 0.0
    %519 = vmatprep.subr.mxu0 0.0
    %520 = vmatpush2.msra.mxu0 0.0
    %521 = vmatprep.subr.mxu0 0.0
    %522 = vmatpush2.msra.mxu0 0.0
    %523 = vmatprep.subr.mxu0 0.0
    %524 = vmatpush2.msra.mxu0 0.0
    %525 = vmatprep.subr.mxu0 0.0
    %526 = vmatpush2.msra.mxu0 0.0
    %527 = vmatprep.subr.mxu0 0.0
    %528 = vmatpush2.msra.mxu0 0.0
    %529 = vmatprep.mubr.f32.mxu0 0.0
    %530 = vmatmul.mubr.f32.gmra.mxu0 %v219
    %v531 = vpop.f32.mrf.mxu0
    %v532 = vadd.f32 %v194, %v531
    %v533 = vpop.f32.mrf.mxu0
    %v534 = vadd.f32 %v198, %v533
    %535 = vdwg.mxu0
    %536 = vmatprep.subr.mxu0 0.0
    %537 = vmatpush1.msra.mxu0 0.0
    %538 = vmatprep.subr.mxu0 0.0
    %539 = vmatpush1.msra.mxu0 0.0
    %540 = vmatprep.subr.mxu0 0.0
    %541 = vmatpush1.msra.mxu0 0.0
    %542 = vmatprep.subr.mxu0 0.0
    %543 = vmatpush1.msra.mxu0 0.0
    %544 = vmatprep.subr.mxu0 0.0
    %545 = vmatpush1.msra.mxu0 0.0
    %546 = vmatprep.subr.mxu0 0.0
    %547 = vmatpush1.msra.mxu0 0.0
    %548 = vmatprep.subr.mxu0 0.0
    %549 = vmatpush1.msra.mxu0 0.0
    %550 = vmatprep.subr.mxu0 0.0
    %551 = vmatpush1.msra.mxu0 0.0
    %552 = vmatprep.subr.mxu0 0.0
    %553 = vmatpush1.msra.mxu0 0.0
    %554 = vmatprep.subr.mxu0 0.0
    %555 = vmatpush1.msra.mxu0 0.0
    %556 = vmatprep.subr.mxu0 0.0
    %557 = vmatpush1.msra.mxu0 0.0
    %558 = vmatprep.subr.mxu0 0.0
    %559 = vmatpush1.msra.mxu0 0.0
    %560 = vmatprep.subr.mxu0 0.0
    %561 = vmatpush1.msra.mxu0 0.0
    %562 = vmatprep.subr.mxu0 0.0
    %563 = vmatpush1.msra.mxu0 0.0
    %564 = vmatprep.subr.mxu0 %v250
    %565 = vmatpush1.msra.mxu0 %v247
    %566 = vmatprep.subr.mxu0 %v152
    %567 = vmatpush1.msra.mxu0 %v151
    %568 = vmatprep.subr.mxu0 0.0
    %569 = vmatpush2.msra.mxu0 0.0
    %570 = vmatprep.subr.mxu0 0.0
    %571 = vmatpush2.msra.mxu0 0.0
    %572 = vmatprep.subr.mxu0 0.0
    %573 = vmatpush2.msra.mxu0 0.0
    %574 = vmatprep.subr.mxu0 0.0
    %575 = vmatpush2.msra.mxu0 0.0
    %576 = vmatprep.subr.mxu0 0.0
    %577 = vmatpush2.msra.mxu0 0.0
    %578 = vmatprep.subr.mxu0 0.0
    %579 = vmatpush2.msra.mxu0 0.0
    %580 = vmatprep.subr.mxu0 0.0
    %581 = vmatpush2.msra.mxu0 0.0
    %582 = vmatprep.subr.mxu0 0.0
    %583 = vmatpush2.msra.mxu0 0.0
    %584 = vmatprep.subr.mxu0 0.0
    %585 = vmatpush2.msra.mxu0 0.0
    %586 = vmatprep.subr.mxu0 0.0
    %587 = vmatpush2.msra.mxu0 0.0
    %588 = vmatprep.subr.mxu0 0.0
    %589 = vmatpush2.msra.mxu0 0.0
    %590 = vmatprep.subr.mxu0 0.0
    %591 = vmatpush2.msra.mxu0 0.0
    %592 = vmatprep.subr.mxu0 0.0
    %593 = vmatpush2.msra.mxu0 0.0
    %594 = vmatprep.subr.mxu0 0.0
    %595 = vmatpush2.msra.mxu0 0.0
    %596 = vmatprep.subr.mxu0 0.0
    %597 = vmatpush2.msra.mxu0 0.0
    %598 = vmatprep.subr.mxu0 0.0
    %599 = vmatpush2.msra.mxu0 0.0
    %600 = vmatprep.mubr.f32.mxu0 0.0
    %601 = vmatmul.mubr.f32.gmra.mxu0 %v219
    %v602 = vpop.f32.mrf.mxu0
    %v603 = vadd.f32 %v202, %v602
    %v604 = vpop.f32.mrf.mxu0
    %v605 = vadd.f32 %v206, %v604
    %606 = vdwg.mxu0
    %v607 = vmax.f32 %v319, 0.0
    %v608 = vmax.f32 %v321, 0.0
    %v609 = vmax.f32 %v390, 0.0
    %v610 = vmax.f32 %v392, 0.0
    %v611 = vmax.f32 %v461, 0.0
    %v612 = vmax.f32 %v463, 0.0
    %v613 = vmax.f32 %v532, 0.0
    %v614 = vmax.f32 %v534, 0.0
    %v615 = vmax.f32 %v603, 0.0
    %v616 = vmax.f32 %v605, 0.0
    %v617 = vpack.c.bf16 %v607, %v607
    %v618 = vpack.c.bf16 %v608, %v608
    %v619 = vpack.c.bf16 %v609, %v609
    %v620 = vpack.c.bf16 %v610, %v610
    %v621 = vpack.c.bf16 %v611, %v611
    %v622 = vpack.c.bf16 %v612, %v612
    %v623 = vpack.c.bf16 %v613, %v613
    %v624 = vpack.c.bf16 %v614, %v614
    %v625 = vpack.c.bf16 %v615, %v615
    %v626 = vpack.c.bf16 %v616, %v616
    %v627 = vld [vmem:[#allocation7] sm:$0xff]
    %v628 = vld [vmem:[#allocation7 + $0x8] sm:$0xff]
    %v629 = vld [vmem:[#allocation7 + $0x10] sm:$0xff]
    %v630 = vld [vmem:[#allocation7 + $0x18] sm:$0xff]
    %v631 = vld [vmem:[#allocation7 + $0x20] sm:$0xff]
    %v632 = vld [vmem:[#allocation7 + $0x28] sm:$0xff]
    %v633 = vld [vmem:[#allocation7 + $0x30] sm:$0xff]
    %v634 = vld [vmem:[#allocation7 + $0x38] sm:$0xff]
    %v635 = vld [vmem:[#allocation7 + $0x40] sm:$0xff]
    %v636 = vld [vmem:[#allocation7 + $0x48] sm:$0xff]
    %v637 = vld [vmem:[#allocation7 + $0x50] sm:$0xff]
    %v638 = vld [vmem:[#allocation7 + $0x58] sm:$0xff]
    %v639 = vld [vmem:[#allocation7 + $0x60] sm:$0xff]
    %v640 = vld [vmem:[#allocation7 + $0x68] sm:$0xff]
    %v641 = vld [vmem:[#allocation7 + $0x70] sm:$0xff]
    %v642 = vld [vmem:[#allocation7 + $0x78] sm:$0xff]
    %v643 = vld [vmem:[#allocation7 + $0x80] sm:$0xff]
    %v644 = vld [vmem:[#allocation7 + $0x88] sm:$0xff]
    %v645 = vld [vmem:[#allocation7 + $0x90] sm:$0xff]
    %v646 = vld [vmem:[#allocation7 + $0x98] sm:$0xff]
    %v647 = vld [vmem:[#allocation7 + $0xa0] sm:$0xff]
    %v648 = vld [vmem:[#allocation7 + $0xa8] sm:$0xff]
    %v649 = vld [vmem:[#allocation7 + $0xb0] sm:$0xff]
    %v650 = vld [vmem:[#allocation7 + $0xb8] sm:$0xff]
    %v651 = vld [vmem:[#allocation7 + $0xc0] sm:$0xff]
    %v652 = vld [vmem:[#allocation7 + $0xc8] sm:$0xff]
    %v653 = vld [vmem:[#allocation7 + $0xd0] sm:$0xff]
    %v654 = vld [vmem:[#allocation7 + $0xd8] sm:$0xff]
    %v655 = vld [vmem:[#allocation7 + $0xe0] sm:$0xff]
    %v656 = vld [vmem:[#allocation7 + $0xe8] sm:$0xff]
    %v657 = vld [vmem:[#allocation7 + $0xf0] sm:$0xff]
    %v658 = vld [vmem:[#allocation7 + $0xf8] sm:$0xff]
    %v659 = vld [vmem:[#allocation7 + $0x100] sm:$0xff]
    %v660 = vld [vmem:[#allocation7 + $0x108] sm:$0xff]
    %v661 = vld [vmem:[#allocation7 + $0x110] sm:$0xff]
    %v662 = vld [vmem:[#allocation7 + $0x118] sm:$0xff]
    %v663 = vld [vmem:[#allocation7 + $0x120] sm:$0xff]
    %v664 = vld [vmem:[#allocation7 + $0x128] sm:$0xff]
    %v665 = vld [vmem:[#allocation7 + $0x130] sm:$0xff]
    %v666 = vld [vmem:[#allocation7 + $0x138] sm:$0xff]
    %v667 = vld [vmem:[#allocation7 + $0x140] sm:$0xff]
    %v668 = vld [vmem:[#allocation7 + $0x148] sm:$0xff]
    %v669 = vld [vmem:[#allocation7 + $0x150] sm:$0xff]
    %v670 = vld [vmem:[#allocation7 + $0x158] sm:$0xff]
    %v671 = vld [vmem:[#allocation7 + $0x160] sm:$0xff]
    %v672 = vld [vmem:[#allocation7 + $0x168] sm:$0xff]
    %v673 = vld [vmem:[#allocation7 + $0x170] sm:$0xff]
    %v674 = vld [vmem:[#allocation7 + $0x178] sm:$0xff]
    %v675 = vld [vmem:[#allocation7 + $0x180] sm:$0xff]
    %v676 = vld [vmem:[#allocation7 + $0x188] sm:$0xff]
    %v677 = vld [vmem:[#allocation7 + $0x190] sm:$0xff]
    %v678 = vld [vmem:[#allocation7 + $0x198] sm:$0xff]
    %v679 = vld [vmem:[#allocation7 + $0x1a0] sm:$0xff]
    %v680 = vld [vmem:[#allocation7 + $0x1a8] sm:$0xff]
    %v681 = vld [vmem:[#allocation7 + $0x1b0] sm:$0xff]
    %v682 = vld [vmem:[#allocation7 + $0x1b8] sm:$0xff]
    %v683 = vld [vmem:[#allocation7 + $0x1c0] sm:$0xff]
    %v684 = vld [vmem:[#allocation7 + $0x1c8] sm:$0xff]
    %v685 = vld [vmem:[#allocation7 + $0x1d0] sm:$0xff]
    %v686 = vld [vmem:[#allocation7 + $0x1d8] sm:$0xff]
    %v687 = vld [vmem:[#allocation7 + $0x1e0] sm:$0xff]
    %v688 = vld [vmem:[#allocation7 + $0x1e8] sm:$0xff]
    %v689 = vld [vmem:[#allocation7 + $0x1f0] sm:$0xff]
    %v690 = vld [vmem:[#allocation7 + $0x1f8] sm:$0xff]
    %v691 = vld [vmem:[#allocation7 + $0x200] sm:$0xff]
    %v692 = vld [vmem:[#allocation7 + $0x208] sm:$0xff]
    %v693 = vld [vmem:[#allocation7 + $0x210] sm:$0xff]
    %v694 = vld [vmem:[#allocation7 + $0x218] sm:$0xff]
    %v695 = vld [vmem:[#allocation7 + $0x220] sm:$0xff]
    %v696 = vld [vmem:[#allocation7 + $0x228] sm:$0xff]
    %v697 = vld [vmem:[#allocation7 + $0x230] sm:$0xff]
    %v698 = vld [vmem:[#allocation7 + $0x238] sm:$0xff]
    %v699 = vld [vmem:[#allocation7 + $0x240] sm:$0xff]
    %v700 = vld [vmem:[#allocation7 + $0x248] sm:$0xff]
    %v701 = vld [vmem:[#allocation7 + $0x250] sm:$0xff]
    %v702 = vld [vmem:[#allocation7 + $0x258] sm:$0xff]
    %v703 = vld [vmem:[#allocation7 + $0x260] sm:$0xff]
    %v704 = vld [vmem:[#allocation7 + $0x268] sm:$0xff]
    %v705 = vld [vmem:[#allocation7 + $0x270] sm:$0xff]
    %v706 = vld [vmem:[#allocation7 + $0x278] sm:$0xff]
    %v707 = vld [vmem:[#allocation7 + $0x280] sm:$0xff]
    %v708 = vld [vmem:[#allocation7 + $0x288] sm:$0xff]
    %v709 = vld [vmem:[#allocation7 + $0x290] sm:$0xff]
    %v710 = vld [vmem:[#allocation7 + $0x298] sm:$0xff]
    %v711 = vld [vmem:[#allocation7 + $0x2a0] sm:$0xff]
    %v712 = vld [vmem:[#allocation7 + $0x2a8] sm:$0xff]
    %v713 = vld [vmem:[#allocation7 + $0x2b0] sm:$0xff]
    %v714 = vld [vmem:[#allocation7 + $0x2b8] sm:$0xff]
    %v715 = vld [vmem:[#allocation7 + $0x2c0] sm:$0xff]
    %v716 = vld [vmem:[#allocation7 + $0x2c8] sm:$0xff]
    %v717 = vld [vmem:[#allocation7 + $0x2d0] sm:$0xff]
    %v718 = vld [vmem:[#allocation7 + $0x2d8] sm:$0xff]
    %v719 = vld [vmem:[#allocation7 + $0x2e0] sm:$0xff]
    %v720 = vld [vmem:[#allocation7 + $0x2e8] sm:$0xff]
    %v721 = vld [vmem:[#allocation7 + $0x2f0] sm:$0xff]
    %v722 = vld [vmem:[#allocation7 + $0x2f8] sm:$0xff]
    %v723 = vld [vmem:[#allocation7 + $0x300] sm:$0xff]
    %v724 = vld [vmem:[#allocation7 + $0x308] sm:$0xff]
    %v725 = vld [vmem:[#allocation7 + $0x310] sm:$0xff]
    %v726 = vld [vmem:[#allocation7 + $0x318] sm:$0xff]
    %v727 = vld [vmem:[#allocation7 + $0x320] sm:$0xff]
    %v728 = vld [vmem:[#allocation7 + $0x328] sm:$0xff]
    %v729 = vld [vmem:[#allocation7 + $0x330] sm:$0xff]
    %v730 = vld [vmem:[#allocation7 + $0x338] sm:$0xff]
    %v731 = vld [vmem:[#allocation7 + $0x340] sm:$0xff]
    %v732 = vld [vmem:[#allocation7 + $0x348] sm:$0xff]
    %v733 = vld [vmem:[#allocation7 + $0x350] sm:$0xff]
    %v734 = vld [vmem:[#allocation7 + $0x358] sm:$0xff]
    %v735 = vld [vmem:[#allocation7 + $0x360] sm:$0xff]
    %v736 = vld [vmem:[#allocation7 + $0x368] sm:$0xff]
    %v737 = vld [vmem:[#allocation7 + $0x370] sm:$0xff]
    %v738 = vld [vmem:[#allocation7 + $0x378] sm:$0xff]
    %v739 = vld [vmem:[#allocation7 + $0x380] sm:$0xff]
    %v740 = vld [vmem:[#allocation7 + $0x388] sm:$0xff]
    %v741 = vld [vmem:[#allocation7 + $0x390] sm:$0xff]
    %v742 = vld [vmem:[#allocation7 + $0x398] sm:$0xff]
    %v743 = vld [vmem:[#allocation7 + $0x3a0] sm:$0xff]
    %v744 = vld [vmem:[#allocation7 + $0x3a8] sm:$0xff]
    %v745 = vld [vmem:[#allocation7 + $0x3b0] sm:$0xff]
    %v746 = vld [vmem:[#allocation7 + $0x3b8] sm:$0xff]
    %v747 = vld [vmem:[#allocation7 + $0x3c0] sm:$0xff]
    %v748 = vld [vmem:[#allocation7 + $0x3c8] sm:$0xff]
    %v749 = vld [vmem:[#allocation7 + $0x3d0] sm:$0xff]
    %v750 = vld [vmem:[#allocation7 + $0x3d8] sm:$0xff]
    %v751 = vld [vmem:[#allocation7 + $0x3e0] sm:$0xff]
    %v752 = vld [vmem:[#allocation7 + $0x3e8] sm:$0xff]
    %v753 = vld [vmem:[#allocation7 + $0x3f0] sm:$0xff]
    %v754 = vld [vmem:[#allocation7 + $0x3f8] sm:$0xff]
    %v755 = vld [vmem:[#allocation7 + $0x400] sm:$0xff]
    %v756 = vld [vmem:[#allocation7 + $0x408] sm:$0xff]
    %v757 = vld [vmem:[#allocation7 + $0x410] sm:$0xff]
    %v758 = vld [vmem:[#allocation7 + $0x418] sm:$0xff]
    %v759 = vld [vmem:[#allocation7 + $0x420] sm:$0xff]
    %v760 = vld [vmem:[#allocation7 + $0x428] sm:$0xff]
    %v761 = vld [vmem:[#allocation7 + $0x430] sm:$0xff]
    %v762 = vld [vmem:[#allocation7 + $0x438] sm:$0xff]
    %v763 = vld [vmem:[#allocation7 + $0x440] sm:$0xff]
    %v764 = vld [vmem:[#allocation7 + $0x448] sm:$0xff]
    %v765 = vld [vmem:[#allocation7 + $0x450] sm:$0xff]
    %v766 = vld [vmem:[#allocation7 + $0x458] sm:$0xff]
    %v767 = vld [vmem:[#allocation7 + $0x460] sm:$0xff]
    %v768 = vld [vmem:[#allocation7 + $0x468] sm:$0xff]
    %v769 = vld [vmem:[#allocation7 + $0x470] sm:$0xff]
    %v770 = vld [vmem:[#allocation7 + $0x478] sm:$0xff]
    %v771 = vld [vmem:[#allocation7 + $0x480] sm:$0xff]
    %v772 = vld [vmem:[#allocation7 + $0x488] sm:$0xff]
    %v773 = vld [vmem:[#allocation7 + $0x490] sm:$0xff]
    %v774 = vld [vmem:[#allocation7 + $0x498] sm:$0xff]
    %v775 = vld [vmem:[#allocation7 + $0x4a0] sm:$0xff]
    %v776 = vld [vmem:[#allocation7 + $0x4a8] sm:$0xff]
    %v777 = vld [vmem:[#allocation7 + $0x4b0] sm:$0xff]
    %v778 = vld [vmem:[#allocation7 + $0x4b8] sm:$0xff]
    %v779 = vld [vmem:[#allocation7 + $0x4c0] sm:$0xff]
    %v780 = vld [vmem:[#allocation7 + $0x4c8] sm:$0xff]
    %v781 = vld [vmem:[#allocation7 + $0x4d0] sm:$0xff]
    %v782 = vld [vmem:[#allocation7 + $0x4d8] sm:$0xff]
    %v783 = vld [vmem:[#allocation7 + $0x4e0] sm:$0xff]
    %v784 = vld [vmem:[#allocation7 + $0x4e8] sm:$0xff]
    %v785 = vld [vmem:[#allocation7 + $0x4f0] sm:$0xff]
    %v786 = vld [vmem:[#allocation7 + $0x4f8] sm:$0xff]
    %v787 = vld [vmem:[#allocation7 + $0x500] sm:$0xff]
    %v788 = vld [vmem:[#allocation7 + $0x508] sm:$0xff]
    %v789 = vld [vmem:[#allocation7 + $0x510] sm:$0xff]
    %v790 = vld [vmem:[#allocation7 + $0x518] sm:$0xff]
    %v791 = vld [vmem:[#allocation7 + $0x520] sm:$0xff]
    %v792 = vld [vmem:[#allocation7 + $0x528] sm:$0xff]
    %v793 = vld [vmem:[#allocation7 + $0x530] sm:$0xff]
    %v794 = vld [vmem:[#allocation7 + $0x538] sm:$0xff]
    %v795 = vld [vmem:[#allocation7 + $0x540] sm:$0xff]
    %v796 = vld [vmem:[#allocation7 + $0x548] sm:$0xff]
    %v797 = vld [vmem:[#allocation7 + $0x550] sm:$0xff]
    %v798 = vld [vmem:[#allocation7 + $0x558] sm:$0xff]
    %v799 = vld [vmem:[#allocation7 + $0x560] sm:$0xff]
    %v800 = vld [vmem:[#allocation7 + $0x568] sm:$0xff]
    %v801 = vld [vmem:[#allocation7 + $0x570] sm:$0xff]
    %v802 = vld [vmem:[#allocation7 + $0x578] sm:$0xff]
    %v803 = vld [vmem:[#allocation7 + $0x580] sm:$0xff]
    %v804 = vld [vmem:[#allocation7 + $0x588] sm:$0xff]
    %v805 = vld [vmem:[#allocation7 + $0x590] sm:$0xff]
    %v806 = vld [vmem:[#allocation7 + $0x598] sm:$0xff]
    %v807 = vld [vmem:[#allocation7 + $0x5a0] sm:$0xff]
    %v808 = vld [vmem:[#allocation7 + $0x5a8] sm:$0xff]
    %v809 = vld [vmem:[#allocation7 + $0x5b0] sm:$0xff]
    %v810 = vld [vmem:[#allocation7 + $0x5b8] sm:$0xff]
    %v811 = vld [vmem:[#allocation7 + $0x5c0] sm:$0xff]
    %v812 = vld [vmem:[#allocation7 + $0x5c8] sm:$0xff]
    %v813 = vld [vmem:[#allocation7 + $0x5d0] sm:$0xff]
    %v814 = vld [vmem:[#allocation7 + $0x5d8] sm:$0xff]
    %v815 = vld [vmem:[#allocation7 + $0x5e0] sm:$0xff]
    %v816 = vld [vmem:[#allocation7 + $0x5e8] sm:$0xff]
    %v817 = vld [vmem:[#allocation7 + $0x5f0] sm:$0xff]
    %v818 = vld [vmem:[#allocation7 + $0x5f8] sm:$0xff]
    %v819 = vld [vmem:[#allocation7 + $0x600] sm:$0xff]
    %v820 = vld [vmem:[#allocation7 + $0x608] sm:$0xff]
    %v821 = vld [vmem:[#allocation7 + $0x610] sm:$0xff]
    %v822 = vld [vmem:[#allocation7 + $0x618] sm:$0xff]
    %v823 = vld [vmem:[#allocation7 + $0x620] sm:$0xff]
    %v824 = vld [vmem:[#allocation7 + $0x628] sm:$0xff]
    %v825 = vld [vmem:[#allocation7 + $0x630] sm:$0xff]
    %v826 = vld [vmem:[#allocation7 + $0x638] sm:$0xff]
    %v827 = vld [vmem:[#allocation7 + $0x640] sm:$0xff]
    %v828 = vld [vmem:[#allocation7 + $0x648] sm:$0xff]
    %v829 = vld [vmem:[#allocation7 + $0x650] sm:$0xff]
    %v830 = vld [vmem:[#allocation7 + $0x658] sm:$0xff]
    %v831 = vld [vmem:[#allocation7 + $0x660] sm:$0xff]
    %v832 = vld [vmem:[#allocation7 + $0x668] sm:$0xff]
    %v833 = vld [vmem:[#allocation7 + $0x670] sm:$0xff]
    %v834 = vld [vmem:[#allocation7 + $0x678] sm:$0xff]
    %v835 = vld [vmem:[#allocation7 + $0x680] sm:$0xff]
    %v836 = vld [vmem:[#allocation7 + $0x688] sm:$0xff]
    %v837 = vld [vmem:[#allocation7 + $0x690] sm:$0xff]
    %v838 = vld [vmem:[#allocation7 + $0x698] sm:$0xff]
    %v839 = vld [vmem:[#allocation7 + $0x6a0] sm:$0xff]
    %v840 = vld [vmem:[#allocation7 + $0x6a8] sm:$0xff]
    %v841 = vld [vmem:[#allocation7 + $0x6b0] sm:$0xff]
    %v842 = vld [vmem:[#allocation7 + $0x6b8] sm:$0xff]
    %v843 = vld [vmem:[#allocation7 + $0x6c0] sm:$0xff]
    %v844 = vld [vmem:[#allocation7 + $0x6c8] sm:$0xff]
    %v845 = vld [vmem:[#allocation7 + $0x6d0] sm:$0xff]
    %v846 = vld [vmem:[#allocation7 + $0x6d8] sm:$0xff]
    %v847 = vld [vmem:[#allocation7 + $0x6e0] sm:$0xff]
    %v848 = vld [vmem:[#allocation7 + $0x6e8] sm:$0xff]
    %v849 = vld [vmem:[#allocation7 + $0x6f0] sm:$0xff]
    %v850 = vld [vmem:[#allocation7 + $0x6f8] sm:$0xff]
    %v851 = vld [vmem:[#allocation7 + $0x700] sm:$0xff]
    %v852 = vld [vmem:[#allocation7 + $0x708] sm:$0xff]
    %v853 = vld [vmem:[#allocation7 + $0x710] sm:$0xff]
    %v854 = vld [vmem:[#allocation7 + $0x718] sm:$0xff]
    %v855 = vld [vmem:[#allocation7 + $0x720] sm:$0xff]
    %v856 = vld [vmem:[#allocation7 + $0x728] sm:$0xff]
    %v857 = vld [vmem:[#allocation7 + $0x730] sm:$0xff]
    %v858 = vld [vmem:[#allocation7 + $0x738] sm:$0xff]
    %v859 = vld [vmem:[#allocation7 + $0x740] sm:$0xff]
    %v860 = vld [vmem:[#allocation7 + $0x748] sm:$0xff]
    %v861 = vld [vmem:[#allocation7 + $0x750] sm:$0xff]
    %v862 = vld [vmem:[#allocation7 + $0x758] sm:$0xff]
    %v863 = vld [vmem:[#allocation7 + $0x760] sm:$0xff]
    %v864 = vld [vmem:[#allocation7 + $0x768] sm:$0xff]
    %v865 = vld [vmem:[#allocation7 + $0x770] sm:$0xff]
    %v866 = vld [vmem:[#allocation7 + $0x778] sm:$0xff]
    %v867 = vld [vmem:[#allocation7 + $0x780] sm:$0xff]
    %v868 = vld [vmem:[#allocation7 + $0x788] sm:$0xff]
    %v869 = vld [vmem:[#allocation7 + $0x790] sm:$0xff]
    %v870 = vld [vmem:[#allocation7 + $0x798] sm:$0xff]
    %v871 = vld [vmem:[#allocation7 + $0x7a0] sm:$0xff]
    %v872 = vld [vmem:[#allocation7 + $0x7a8] sm:$0xff]
    %v873 = vld [vmem:[#allocation7 + $0x7b0] sm:$0xff]
    %v874 = vld [vmem:[#allocation7 + $0x7b8] sm:$0xff]
    %v875 = vld [vmem:[#allocation7 + $0x7c0] sm:$0xff]
    %v876 = vld [vmem:[#allocation7 + $0x7c8] sm:$0xff]
    %v877 = vld [vmem:[#allocation7 + $0x7d0] sm:$0xff]
    %v878 = vld [vmem:[#allocation7 + $0x7d8] sm:$0xff]
    %v879 = vld [vmem:[#allocation7 + $0x7e0] sm:$0xff]
    %v880 = vld [vmem:[#allocation7 + $0x7e8] sm:$0xff]
    %v881 = vld [vmem:[#allocation7 + $0x7f0] sm:$0xff]
    %v882 = vld [vmem:[#allocation7 + $0x7f8] sm:$0xff]
    %v883 = vld [vmem:[#allocation7 + $0x800] sm:$0xff]
    %v884 = vld [vmem:[#allocation7 + $0x808] sm:$0xff]
    %v885 = vld [vmem:[#allocation7 + $0x810] sm:$0xff]
    %v886 = vld [vmem:[#allocation7 + $0x818] sm:$0xff]
    %v887 = vld [vmem:[#allocation7 + $0x820] sm:$0xff]
    %v888 = vld [vmem:[#allocation7 + $0x828] sm:$0xff]
    %v889 = vld [vmem:[#allocation7 + $0x830] sm:$0xff]
    %v890 = vld [vmem:[#allocation7 + $0x838] sm:$0xff]
    %v891 = vld [vmem:[#allocation7 + $0x840] sm:$0xff]
    %v892 = vld [vmem:[#allocation7 + $0x848] sm:$0xff]
    %v893 = vld [vmem:[#allocation7 + $0x850] sm:$0xff]
    %v894 = vld [vmem:[#allocation7 + $0x858] sm:$0xff]
    %v895 = vld [vmem:[#allocation7 + $0x860] sm:$0xff]
    %v896 = vld [vmem:[#allocation7 + $0x868] sm:$0xff]
    %v897 = vld [vmem:[#allocation7 + $0x870] sm:$0xff]
    %v898 = vld [vmem:[#allocation7 + $0x878] sm:$0xff]
    %v899 = vld [vmem:[#allocation7 + $0x880] sm:$0xff]
    %v900 = vld [vmem:[#allocation7 + $0x888] sm:$0xff]
    %v901 = vld [vmem:[#allocation7 + $0x890] sm:$0xff]
    %v902 = vld [vmem:[#allocation7 + $0x898] sm:$0xff]
    %v903 = vld [vmem:[#allocation7 + $0x8a0] sm:$0xff]
    %v904 = vld [vmem:[#allocation7 + $0x8a8] sm:$0xff]
    %v905 = vld [vmem:[#allocation7 + $0x8b0] sm:$0xff]
    %v906 = vld [vmem:[#allocation7 + $0x8b8] sm:$0xff]
    %v907 = vld [vmem:[#allocation7 + $0x8c0] sm:$0xff]
    %v908 = vld [vmem:[#allocation7 + $0x8c8] sm:$0xff]
    %v909 = vld [vmem:[#allocation7 + $0x8d0] sm:$0xff]
    %v910 = vld [vmem:[#allocation7 + $0x8d8] sm:$0xff]
    %v911 = vld [vmem:[#allocation7 + $0x8e0] sm:$0xff]
    %v912 = vld [vmem:[#allocation7 + $0x8e8] sm:$0xff]
    %v913 = vld [vmem:[#allocation7 + $0x8f0] sm:$0xff]
    %v914 = vld [vmem:[#allocation7 + $0x8f8] sm:$0xff]
    %v915 = vld [vmem:[#allocation7 + $0x900] sm:$0xff]
    %v916 = vld [vmem:[#allocation7 + $0x908] sm:$0xff]
    %v917 = vld [vmem:[#allocation7 + $0x910] sm:$0xff]
    %v918 = vld [vmem:[#allocation7 + $0x918] sm:$0xff]
    %v919 = vld [vmem:[#allocation7 + $0x920] sm:$0xff]
    %v920 = vld [vmem:[#allocation7 + $0x928] sm:$0xff]
    %v921 = vld [vmem:[#allocation7 + $0x930] sm:$0xff]
    %v922 = vld [vmem:[#allocation7 + $0x938] sm:$0xff]
    %v923 = vld [vmem:[#allocation7 + $0x940] sm:$0xff]
    %v924 = vld [vmem:[#allocation7 + $0x948] sm:$0xff]
    %v925 = vld [vmem:[#allocation7 + $0x950] sm:$0xff]
    %v926 = vld [vmem:[#allocation7 + $0x958] sm:$0xff]
    %v927 = vld [vmem:[#allocation7 + $0x960] sm:$0xff]
    %v928 = vld [vmem:[#allocation7 + $0x968] sm:$0xff]
    %v929 = vld [vmem:[#allocation7 + $0x970] sm:$0xff]
    %v930 = vld [vmem:[#allocation7 + $0x978] sm:$0xff]
    %v931 = vld [vmem:[#allocation7 + $0x980] sm:$0xff]
    %v932 = vld [vmem:[#allocation7 + $0x988] sm:$0xff]
    %v933 = vld [vmem:[#allocation7 + $0x990] sm:$0xff]
    %v934 = vld [vmem:[#allocation7 + $0x998] sm:$0xff]
    %v935 = vld [vmem:[#allocation7 + $0x9a0] sm:$0xff]
    %v936 = vld [vmem:[#allocation7 + $0x9a8] sm:$0xff]
    %v937 = vld [vmem:[#allocation7 + $0x9b0] sm:$0xff]
    %v938 = vld [vmem:[#allocation7 + $0x9b8] sm:$0xff]
    %v939 = vld [vmem:[#allocation7 + $0x9c0] sm:$0xff]
    %v940 = vld [vmem:[#allocation7 + $0x9c8] sm:$0xff]
    %v941 = vld [vmem:[#allocation7 + $0x9d0] sm:$0xff]
    %v942 = vld [vmem:[#allocation7 + $0x9d8] sm:$0xff]
    %v943 = vld [vmem:[#allocation7 + $0x9e0] sm:$0xff]
    %v944 = vld [vmem:[#allocation7 + $0x9e8] sm:$0xff]
    %v945 = vld [vmem:[#allocation7 + $0x9f0] sm:$0xff]
    %v946 = vld [vmem:[#allocation7 + $0x9f8] sm:$0xff]
    %v947 = vld [vmem:[#allocation7 + $0xa00] sm:$0xff]
    %v948 = vld [vmem:[#allocation7 + $0xa08] sm:$0xff]
    %v949 = vld [vmem:[#allocation7 + $0xa10] sm:$0xff]
    %v950 = vld [vmem:[#allocation7 + $0xa18] sm:$0xff]
    %v951 = vld [vmem:[#allocation7 + $0xa20] sm:$0xff]
    %v952 = vld [vmem:[#allocation7 + $0xa28] sm:$0xff]
    %v953 = vld [vmem:[#allocation7 + $0xa30] sm:$0xff]
    %v954 = vld [vmem:[#allocation7 + $0xa38] sm:$0xff]
    %v955 = vld [vmem:[#allocation7 + $0xa40] sm:$0xff]
    %v956 = vld [vmem:[#allocation7 + $0xa48] sm:$0xff]
    %v957 = vld [vmem:[#allocation7 + $0xa50] sm:$0xff]
    %v958 = vld [vmem:[#allocation7 + $0xa58] sm:$0xff]
    %v959 = vld [vmem:[#allocation7 + $0xa60] sm:$0xff]
    %v960 = vld [vmem:[#allocation7 + $0xa68] sm:$0xff]
    %v961 = vld [vmem:[#allocation7 + $0xa70] sm:$0xff]
    %v962 = vld [vmem:[#allocation7 + $0xa78] sm:$0xff]
    %v963 = vld [vmem:[#allocation7 + $0xa80] sm:$0xff]
    %v964 = vld [vmem:[#allocation7 + $0xa88] sm:$0xff]
    %v965 = vld [vmem:[#allocation7 + $0xa90] sm:$0xff]
    %v966 = vld [vmem:[#allocation7 + $0xa98] sm:$0xff]
    %v967 = vld [vmem:[#allocation7 + $0xaa0] sm:$0xff]
    %v968 = vld [vmem:[#allocation7 + $0xaa8] sm:$0xff]
    %v969 = vld [vmem:[#allocation7 + $0xab0] sm:$0xff]
    %v970 = vld [vmem:[#allocation7 + $0xab8] sm:$0xff]
    %v971 = vld [vmem:[#allocation7 + $0xac0] sm:$0xff]
    %v972 = vld [vmem:[#allocation7 + $0xac8] sm:$0xff]
    %v973 = vld [vmem:[#allocation7 + $0xad0] sm:$0xff]
    %v974 = vld [vmem:[#allocation7 + $0xad8] sm:$0xff]
    %v975 = vld [vmem:[#allocation7 + $0xae0] sm:$0xff]
    %v976 = vld [vmem:[#allocation7 + $0xae8] sm:$0xff]
    %v977 = vld [vmem:[#allocation7 + $0xaf0] sm:$0xff]
    %v978 = vld [vmem:[#allocation7 + $0xaf8] sm:$0xff]
    %v979 = vld [vmem:[#allocation7 + $0xb00] sm:$0xff]
    %v980 = vld [vmem:[#allocation7 + $0xb08] sm:$0xff]
    %v981 = vld [vmem:[#allocation7 + $0xb10] sm:$0xff]
    %v982 = vld [vmem:[#allocation7 + $0xb18] sm:$0xff]
    %v983 = vld [vmem:[#allocation7 + $0xb20] sm:$0xff]
    %v984 = vld [vmem:[#allocation7 + $0xb28] sm:$0xff]
    %v985 = vld [vmem:[#allocation7 + $0xb30] sm:$0xff]
    %v986 = vld [vmem:[#allocation7 + $0xb38] sm:$0xff]
    %v987 = vld [vmem:[#allocation7 + $0xb40] sm:$0xff]
    %v988 = vld [vmem:[#allocation7 + $0xb48] sm:$0xff]
    %v989 = vld [vmem:[#allocation7 + $0xb50] sm:$0xff]
    %v990 = vld [vmem:[#allocation7 + $0xb58] sm:$0xff]
    %v991 = vld [vmem:[#allocation7 + $0xb60] sm:$0xff]
    %v992 = vld [vmem:[#allocation7 + $0xb68] sm:$0xff]
    %v993 = vld [vmem:[#allocation7 + $0xb70] sm:$0xff]
    %v994 = vld [vmem:[#allocation7 + $0xb78] sm:$0xff]
    %v995 = vld [vmem:[#allocation7 + $0xb80] sm:$0xff]
    %v996 = vld [vmem:[#allocation7 + $0xb88] sm:$0xff]
    %v997 = vld [vmem:[#allocation7 + $0xb90] sm:$0xff]
    %v998 = vld [vmem:[#allocation7 + $0xb98] sm:$0xff]
    %v999 = vld [vmem:[#allocation7 + $0xba0] sm:$0xff]
    %v1000 = vld [vmem:[#allocation7 + $0xba8] sm:$0xff]
    %v1001 = vld [vmem:[#allocation7 + $0xbb0] sm:$0xff]
    %v1002 = vld [vmem:[#allocation7 + $0xbb8] sm:$0xff]
    %v1003 = vld [vmem:[#allocation7 + $0xbc0] sm:$0xff]
    %v1004 = vld [vmem:[#allocation7 + $0xbc8] sm:$0xff]
    %v1005 = vld [vmem:[#allocation7 + $0xbd0] sm:$0xff]
    %v1006 = vld [vmem:[#allocation7 + $0xbd8] sm:$0xff]
    %v1007 = vld [vmem:[#allocation7 + $0xbe0] sm:$0xff]
    %v1008 = vld [vmem:[#allocation7 + $0xbe8] sm:$0xff]
    %v1009 = vld [vmem:[#allocation7 + $0xbf0] sm:$0xff]
    %v1010 = vld [vmem:[#allocation7 + $0xbf8] sm:$0xff]
    %v1011 = vld [vmem:[#allocation7 + $0xc00] sm:$0xff]
    %v1012 = vld [vmem:[#allocation7 + $0xc08] sm:$0xff]
    %v1013 = vld [vmem:[#allocation7 + $0xc10] sm:$0xff]
    %v1014 = vld [vmem:[#allocation7 + $0xc18] sm:$0xff]
    %v1015 = vld [vmem:[#allocation7 + $0xc20] sm:$0xff]
    %v1016 = vld [vmem:[#allocation7 + $0xc28] sm:$0xff]
    %v1017 = vld [vmem:[#allocation7 + $0xc30] sm:$0xff]
    %v1018 = vld [vmem:[#allocation7 + $0xc38] sm:$0xff]
    %v1019 = vld [vmem:[#allocation7 + $0xc40] sm:$0xff]
    %v1020 = vld [vmem:[#allocation7 + $0xc48] sm:$0xff]
    %v1021 = vld [vmem:[#allocation7 + $0xc50] sm:$0xff]
    %v1022 = vld [vmem:[#allocation7 + $0xc58] sm:$0xff]
    %v1023 = vld [vmem:[#allocation7 + $0xc60] sm:$0xff]
    %v1024 = vld [vmem:[#allocation7 + $0xc68] sm:$0xff]
    %v1025 = vld [vmem:[#allocation7 + $0xc70] sm:$0xff]
    %v1026 = vld [vmem:[#allocation7 + $0xc78] sm:$0xff]
    %v1027 = vld [vmem:[#allocation7 + $0xc80] sm:$0xff]
    %v1028 = vld [vmem:[#allocation7 + $0xc88] sm:$0xff]
    %v1029 = vld [vmem:[#allocation7 + $0xc90] sm:$0xff]
    %v1030 = vld [vmem:[#allocation7 + $0xc98] sm:$0xff]
    %v1031 = vld [vmem:[#allocation7 + $0xca0] sm:$0xff]
    %v1032 = vld [vmem:[#allocation7 + $0xca8] sm:$0xff]
    %v1033 = vld [vmem:[#allocation7 + $0xcb0] sm:$0xff]
    %v1034 = vld [vmem:[#allocation7 + $0xcb8] sm:$0xff]
    %v1035 = vld [vmem:[#allocation7 + $0xcc0] sm:$0xff]
    %v1036 = vld [vmem:[#allocation7 + $0xcc8] sm:$0xff]
    %v1037 = vld [vmem:[#allocation7 + $0xcd0] sm:$0xff]
    %v1038 = vld [vmem:[#allocation7 + $0xcd8] sm:$0xff]
    %v1039 = vld [vmem:[#allocation7 + $0xce0] sm:$0xff]
    %v1040 = vld [vmem:[#allocation7 + $0xce8] sm:$0xff]
    %v1041 = vld [vmem:[#allocation7 + $0xcf0] sm:$0xff]
    %v1042 = vld [vmem:[#allocation7 + $0xcf8] sm:$0xff]
    %v1043 = vld [vmem:[#allocation7 + $0xd00] sm:$0xff]
    %v1044 = vld [vmem:[#allocation7 + $0xd08] sm:$0xff]
    %v1045 = vld [vmem:[#allocation7 + $0xd10] sm:$0xff]
    %v1046 = vld [vmem:[#allocation7 + $0xd18] sm:$0xff]
    %v1047 = vld [vmem:[#allocation7 + $0xd20] sm:$0xff]
    %v1048 = vld [vmem:[#allocation7 + $0xd28] sm:$0xff]
    %v1049 = vld [vmem:[#allocation7 + $0xd30] sm:$0xff]
    %v1050 = vld [vmem:[#allocation7 + $0xd38] sm:$0xff]
    %v1051 = vld [vmem:[#allocation7 + $0xd40] sm:$0xff]
    %v1052 = vld [vmem:[#allocation7 + $0xd48] sm:$0xff]
    %v1053 = vld [vmem:[#allocation7 + $0xd50] sm:$0xff]
    %v1054 = vld [vmem:[#allocation7 + $0xd58] sm:$0xff]
    %v1055 = vld [vmem:[#allocation7 + $0xd60] sm:$0xff]
    %v1056 = vld [vmem:[#allocation7 + $0xd68] sm:$0xff]
    %v1057 = vld [vmem:[#allocation7 + $0xd70] sm:$0xff]
    %v1058 = vld [vmem:[#allocation7 + $0xd78] sm:$0xff]
    %v1059 = vld [vmem:[#allocation7 + $0xd80] sm:$0xff]
    %v1060 = vld [vmem:[#allocation7 + $0xd88] sm:$0xff]
    %v1061 = vld [vmem:[#allocation7 + $0xd90] sm:$0xff]
    %v1062 = vld [vmem:[#allocation7 + $0xd98] sm:$0xff]
    %v1063 = vld [vmem:[#allocation7 + $0xda0] sm:$0xff]
    %v1064 = vld [vmem:[#allocation7 + $0xda8] sm:$0xff]
    %v1065 = vld [vmem:[#allocation7 + $0xdb0] sm:$0xff]
    %v1066 = vld [vmem:[#allocation7 + $0xdb8] sm:$0xff]
    %v1067 = vld [vmem:[#allocation7 + $0xdc0] sm:$0xff]
    %v1068 = vld [vmem:[#allocation7 + $0xdc8] sm:$0xff]
    %v1069 = vld [vmem:[#allocation7 + $0xdd0] sm:$0xff]
    %v1070 = vld [vmem:[#allocation7 + $0xdd8] sm:$0xff]
    %v1071 = vld [vmem:[#allocation7 + $0xde0] sm:$0xff]
    %v1072 = vld [vmem:[#allocation7 + $0xde8] sm:$0xff]
    %v1073 = vld [vmem:[#allocation7 + $0xdf0] sm:$0xff]
    %v1074 = vld [vmem:[#allocation7 + $0xdf8] sm:$0xff]
    %v1075 = vld [vmem:[#allocation7 + $0xe00] sm:$0xff]
    %v1076 = vld [vmem:[#allocation7 + $0xe08] sm:$0xff]
    %v1077 = vld [vmem:[#allocation7 + $0xe10] sm:$0xff]
    %v1078 = vld [vmem:[#allocation7 + $0xe18] sm:$0xff]
    %v1079 = vld [vmem:[#allocation7 + $0xe20] sm:$0xff]
    %v1080 = vld [vmem:[#allocation7 + $0xe28] sm:$0xff]
    %v1081 = vld [vmem:[#allocation7 + $0xe30] sm:$0xff]
    %v1082 = vld [vmem:[#allocation7 + $0xe38] sm:$0xff]
    %v1083 = vld [vmem:[#allocation7 + $0xe40] sm:$0xff]
    %v1084 = vld [vmem:[#allocation7 + $0xe48] sm:$0xff]
    %v1085 = vld [vmem:[#allocation7 + $0xe50] sm:$0xff]
    %v1086 = vld [vmem:[#allocation7 + $0xe58] sm:$0xff]
    %v1087 = vld [vmem:[#allocation7 + $0xe60] sm:$0xff]
    %v1088 = vld [vmem:[#allocation7 + $0xe68] sm:$0xff]
    %v1089 = vld [vmem:[#allocation7 + $0xe70] sm:$0xff]
    %v1090 = vld [vmem:[#allocation7 + $0xe78] sm:$0xff]
    %v1091 = vld [vmem:[#allocation7 + $0xe80] sm:$0xff]
    %v1092 = vld [vmem:[#allocation7 + $0xe88] sm:$0xff]
    %v1093 = vld [vmem:[#allocation7 + $0xe90] sm:$0xff]
    %v1094 = vld [vmem:[#allocation7 + $0xe98] sm:$0xff]
    %v1095 = vld [vmem:[#allocation7 + $0xea0] sm:$0xff]
    %v1096 = vld [vmem:[#allocation7 + $0xea8] sm:$0xff]
    %v1097 = vld [vmem:[#allocation7 + $0xeb0] sm:$0xff]
    %v1098 = vld [vmem:[#allocation7 + $0xeb8] sm:$0xff]
    %v1099 = vld [vmem:[#allocation7 + $0xec0] sm:$0xff]
    %v1100 = vld [vmem:[#allocation7 + $0xec8] sm:$0xff]
    %v1101 = vld [vmem:[#allocation7 + $0xed0] sm:$0xff]
    %v1102 = vld [vmem:[#allocation7 + $0xed8] sm:$0xff]
    %v1103 = vld [vmem:[#allocation7 + $0xee0] sm:$0xff]
    %v1104 = vld [vmem:[#allocation7 + $0xee8] sm:$0xff]
    %v1105 = vld [vmem:[#allocation7 + $0xef0] sm:$0xff]
    %v1106 = vld [vmem:[#allocation7 + $0xef8] sm:$0xff]
    %v1107 = vld [vmem:[#allocation7 + $0xf00] sm:$0xff]
    %v1108 = vld [vmem:[#allocation7 + $0xf08] sm:$0xff]
    %v1109 = vld [vmem:[#allocation7 + $0xf10] sm:$0xff]
    %v1110 = vld [vmem:[#allocation7 + $0xf18] sm:$0xff]
    %v1111 = vld [vmem:[#allocation7 + $0xf20] sm:$0xff]
    %v1112 = vld [vmem:[#allocation7 + $0xf28] sm:$0xff]
    %v1113 = vld [vmem:[#allocation7 + $0xf30] sm:$0xff]
    %v1114 = vld [vmem:[#allocation7 + $0xf38] sm:$0xff]
    %v1115 = vld [vmem:[#allocation7 + $0xf40] sm:$0xff]
    %v1116 = vld [vmem:[#allocation7 + $0xf48] sm:$0xff]
    %v1117 = vld [vmem:[#allocation7 + $0xf50] sm:$0xff]
    %v1118 = vld [vmem:[#allocation7 + $0xf58] sm:$0xff]
    %v1119 = vld [vmem:[#allocation7 + $0xf60] sm:$0xff]
    %v1120 = vld [vmem:[#allocation7 + $0xf68] sm:$0xff]
    %v1121 = vld [vmem:[#allocation7 + $0xf70] sm:$0xff]
    %v1122 = vld [vmem:[#allocation7 + $0xf78] sm:$0xff]
    %v1123 = vld [vmem:[#allocation7 + $0xf80] sm:$0xff]
    %v1124 = vld [vmem:[#allocation7 + $0xf88] sm:$0xff]
    %v1125 = vld [vmem:[#allocation7 + $0xf90] sm:$0xff]
    %v1126 = vld [vmem:[#allocation7 + $0xf98] sm:$0xff]
    %v1127 = vld [vmem:[#allocation7 + $0xfa0] sm:$0xff]
    %v1128 = vld [vmem:[#allocation7 + $0xfa8] sm:$0xff]
    %v1129 = vld [vmem:[#allocation7 + $0xfb0] sm:$0xff]
    %v1130 = vld [vmem:[#allocation7 + $0xfb8] sm:$0xff]
    %v1131 = vld [vmem:[#allocation7 + $0xfc0] sm:$0xff]
    %v1132 = vld [vmem:[#allocation7 + $0xfc8] sm:$0xff]
    %v1133 = vld [vmem:[#allocation7 + $0xfd0] sm:$0xff]
    %v1134 = vld [vmem:[#allocation7 + $0xfd8] sm:$0xff]
    %v1135 = vld [vmem:[#allocation7 + $0xfe0] sm:$0xff]
    %v1136 = vld [vmem:[#allocation7 + $0xfe8] sm:$0xff]
    %v1137 = vld [vmem:[#allocation7 + $0xff0] sm:$0xff]
    %v1138 = vld [vmem:[#allocation7 + $0xff8] sm:$0xff]
    %v1139 = vld [vmem:[#allocation7 + $0x1000] sm:$0xff]
    %v1140 = vld [vmem:[#allocation7 + $0x1008] sm:$0xff]
    %v1141 = vld [vmem:[#allocation7 + $0x1010] sm:$0xff]
    %v1142 = vld [vmem:[#allocation7 + $0x1018] sm:$0xff]
    %v1143 = vld [vmem:[#allocation7 + $0x1020] sm:$0xff]
    %v1144 = vld [vmem:[#allocation7 + $0x1028] sm:$0xff]
    %v1145 = vld [vmem:[#allocation7 + $0x1030] sm:$0xff]
    %v1146 = vld [vmem:[#allocation7 + $0x1038] sm:$0xff]
    %v1147 = vld [vmem:[#allocation7 + $0x1040] sm:$0xff]
    %v1148 = vld [vmem:[#allocation7 + $0x1048] sm:$0xff]
    %v1149 = vld [vmem:[#allocation7 + $0x1050] sm:$0xff]
    %v1150 = vld [vmem:[#allocation7 + $0x1058] sm:$0xff]
    %v1151 = vld [vmem:[#allocation7 + $0x1060] sm:$0xff]
    %v1152 = vld [vmem:[#allocation7 + $0x1068] sm:$0xff]
    %v1153 = vld [vmem:[#allocation7 + $0x1070] sm:$0xff]
    %v1154 = vld [vmem:[#allocation7 + $0x1078] sm:$0xff]
    %v1155 = vld [vmem:[#allocation7 + $0x1080] sm:$0xff]
    %v1156 = vld [vmem:[#allocation7 + $0x1088] sm:$0xff]
    %v1157 = vld [vmem:[#allocation7 + $0x1090] sm:$0xff]
    %v1158 = vld [vmem:[#allocation7 + $0x1098] sm:$0xff]
    %v1159 = vld [vmem:[#allocation7 + $0x10a0] sm:$0xff]
    %v1160 = vld [vmem:[#allocation7 + $0x10a8] sm:$0xff]
    %v1161 = vld [vmem:[#allocation7 + $0x10b0] sm:$0xff]
    %v1162 = vld [vmem:[#allocation7 + $0x10b8] sm:$0xff]
    %v1163 = vld [vmem:[#allocation7 + $0x10c0] sm:$0xff]
    %v1164 = vld [vmem:[#allocation7 + $0x10c8] sm:$0xff]
    %v1165 = vld [vmem:[#allocation7 + $0x10d0] sm:$0xff]
    %v1166 = vld [vmem:[#allocation7 + $0x10d8] sm:$0xff]
    %v1167 = vld [vmem:[#allocation7 + $0x10e0] sm:$0xff]
    %v1168 = vld [vmem:[#allocation7 + $0x10e8] sm:$0xff]
    %v1169 = vld [vmem:[#allocation7 + $0x10f0] sm:$0xff]
    %v1170 = vld [vmem:[#allocation7 + $0x10f8] sm:$0xff]
    %v1171 = vld [vmem:[#allocation7 + $0x1100] sm:$0xff]
    %v1172 = vld [vmem:[#allocation7 + $0x1108] sm:$0xff]
    %v1173 = vld [vmem:[#allocation7 + $0x1110] sm:$0xff]
    %v1174 = vld [vmem:[#allocation7 + $0x1118] sm:$0xff]
    %v1175 = vld [vmem:[#allocation7 + $0x1120] sm:$0xff]
    %v1176 = vld [vmem:[#allocation7 + $0x1128] sm:$0xff]
    %v1177 = vld [vmem:[#allocation7 + $0x1130] sm:$0xff]
    %v1178 = vld [vmem:[#allocation7 + $0x1138] sm:$0xff]
    %v1179 = vld [vmem:[#allocation7 + $0x1140] sm:$0xff]
    %v1180 = vld [vmem:[#allocation7 + $0x1148] sm:$0xff]
    %v1181 = vld [vmem:[#allocation7 + $0x1150] sm:$0xff]
    %v1182 = vld [vmem:[#allocation7 + $0x1158] sm:$0xff]
    %v1183 = vld [vmem:[#allocation7 + $0x1160] sm:$0xff]
    %v1184 = vld [vmem:[#allocation7 + $0x1168] sm:$0xff]
    %v1185 = vld [vmem:[#allocation7 + $0x1170] sm:$0xff]
    %v1186 = vld [vmem:[#allocation7 + $0x1178] sm:$0xff]
    %v1187 = vld [vmem:[#allocation7 + $0x1180] sm:$0xff]
    %v1188 = vld [vmem:[#allocation7 + $0x1188] sm:$0xff]
    %v1189 = vld [vmem:[#allocation7 + $0x1190] sm:$0xff]
    %v1190 = vld [vmem:[#allocation7 + $0x1198] sm:$0xff]
    %v1191 = vld [vmem:[#allocation7 + $0x11a0] sm:$0xff]
    %v1192 = vld [vmem:[#allocation7 + $0x11a8] sm:$0xff]
    %v1193 = vld [vmem:[#allocation7 + $0x11b0] sm:$0xff]
    %v1194 = vld [vmem:[#allocation7 + $0x11b8] sm:$0xff]
    %v1195 = vld [vmem:[#allocation7 + $0x11c0] sm:$0xff]
    %v1196 = vld [vmem:[#allocation7 + $0x11c8] sm:$0xff]
    %v1197 = vld [vmem:[#allocation7 + $0x11d0] sm:$0xff]
    %v1198 = vld [vmem:[#allocation7 + $0x11d8] sm:$0xff]
    %v1199 = vld [vmem:[#allocation7 + $0x11e0] sm:$0xff]
    %v1200 = vld [vmem:[#allocation7 + $0x11e8] sm:$0xff]
    %v1201 = vld [vmem:[#allocation7 + $0x11f0] sm:$0xff]
    %v1202 = vld [vmem:[#allocation7 + $0x11f8] sm:$0xff]
    %v1203 = vld [vmem:[#allocation7 + $0x1200] sm:$0xff]
    %v1204 = vld [vmem:[#allocation7 + $0x1208] sm:$0xff]
    %v1205 = vld [vmem:[#allocation7 + $0x1210] sm:$0xff]
    %v1206 = vld [vmem:[#allocation7 + $0x1218] sm:$0xff]
    %v1207 = vld [vmem:[#allocation7 + $0x1220] sm:$0xff]
    %v1208 = vld [vmem:[#allocation7 + $0x1228] sm:$0xff]
    %v1209 = vld [vmem:[#allocation7 + $0x1230] sm:$0xff]
    %v1210 = vld [vmem:[#allocation7 + $0x1238] sm:$0xff]
    %v1211 = vld [vmem:[#allocation7 + $0x1240] sm:$0xff]
    %v1212 = vld [vmem:[#allocation7 + $0x1248] sm:$0xff]
    %v1213 = vld [vmem:[#allocation7 + $0x1250] sm:$0xff]
    %v1214 = vld [vmem:[#allocation7 + $0x1258] sm:$0xff]
    %v1215 = vld [vmem:[#allocation7 + $0x1260] sm:$0xff]
    %v1216 = vld [vmem:[#allocation7 + $0x1268] sm:$0xff]
    %v1217 = vld [vmem:[#allocation7 + $0x1270] sm:$0xff]
    %v1218 = vld [vmem:[#allocation7 + $0x1278] sm:$0xff]
    %v1219 = vld [vmem:[#allocation7 + $0x1280] sm:$0xff]
    %v1220 = vld [vmem:[#allocation7 + $0x1288] sm:$0xff]
    %v1221 = vld [vmem:[#allocation7 + $0x1290] sm:$0xff]
    %v1222 = vld [vmem:[#allocation7 + $0x1298] sm:$0xff]
    %v1223 = vld [vmem:[#allocation7 + $0x12a0] sm:$0xff]
    %v1224 = vld [vmem:[#allocation7 + $0x12a8] sm:$0xff]
    %v1225 = vld [vmem:[#allocation7 + $0x12b0] sm:$0xff]
    %v1226 = vld [vmem:[#allocation7 + $0x12b8] sm:$0xff]
    %v1227 = vld [vmem:[#allocation9] sm:$0xff]
    %v1229 = vlaneseq
    %v1230 = vshrl.u32 %v1229, 7
    %v1231 = vsub.s32 0, %v1230
    %v1232 = vrot.slane %v1227, %v1231
    %v1233 = vlaneseq
    %v1234 = vshrl.u32 %v1233, 7
    %v1235 = vsub.s32 1, %v1234
    %v1236 = vrot.slane %v1227, %v1235
    %v1237 = vlaneseq
    %v1238 = vshrl.u32 %v1237, 7
    %v1239 = vsub.s32 2, %v1238
    %v1240 = vrot.slane %v1227, %v1239
    %v1241 = vlaneseq
    %v1242 = vshrl.u32 %v1241, 7
    %v1243 = vsub.s32 3, %v1242
    %v1244 = vrot.slane %v1227, %v1243
    %v1245 = vlaneseq
    %v1246 = vshrl.u32 %v1245, 7
    %v1247 = vsub.s32 4, %v1246
    %v1248 = vrot.slane %v1227, %v1247
    %v1249 = vlaneseq
    %v1250 = vshrl.u32 %v1249, 7
    %v1251 = vsub.s32 5, %v1250
    %v1252 = vrot.slane %v1227, %v1251
    %v1253 = vlaneseq
    %v1254 = vshrl.u32 %v1253, 7
    %v1255 = vsub.s32 6, %v1254
    %v1256 = vrot.slane %v1227, %v1255
    %v1257 = vlaneseq
    %v1258 = vshrl.u32 %v1257, 7
    %v1259 = vsub.s32 7, %v1258
    %v1260 = vrot.slane %v1227, %v1259
    %v1869 = vunpack.c.l.b16 %v627
    %v1870 = vunpack.c.h.b16 %v627
    %v1871 = vunpack.c.l.b16 %v628
    %v1872 = vunpack.c.h.b16 %v628
    %v1873 = vunpack.c.l.b16 %v629
    %v1874 = vunpack.c.h.b16 %v629
    %v1875 = vunpack.c.l.b16 %v630
    %v1876 = vunpack.c.h.b16 %v630
    %v1877 = vunpack.c.l.b16 %v631
    %v1878 = vunpack.c.h.b16 %v631
    %v1879 = vunpack.c.l.b16 %v632
    %v1880 = vunpack.c.h.b16 %v632
    %v1881 = vunpack.c.l.b16 %v633
    %v1882 = vunpack.c.h.b16 %v633
    %v1883 = vunpack.c.l.b16 %v634
    %v1884 = vunpack.c.h.b16 %v634
    %v1885 = vunpack.c.l.b16 %v635
    %v1886 = vunpack.c.h.b16 %v635
    %v1887 = vunpack.c.l.b16 %v636
    %v1888 = vunpack.c.h.b16 %v636
    %v1889 = vunpack.c.l.b16 %v637
    %v1890 = vunpack.c.h.b16 %v637
    %v1891 = vunpack.c.l.b16 %v638
    %v1892 = vunpack.c.h.b16 %v638
    %v1893 = vunpack.c.l.b16 %v639
    %v1894 = vunpack.c.h.b16 %v639
    %v1895 = vunpack.c.l.b16 %v640
    %v1896 = vunpack.c.h.b16 %v640
    %v1897 = vunpack.c.l.b16 %v641
    %v1898 = vunpack.c.h.b16 %v641
    %v1899 = vunpack.c.l.b16 %v642
    %v1900 = vunpack.c.h.b16 %v642
    %v1901 = vunpack.c.l.b16 %v643
    %v1902 = vunpack.c.h.b16 %v643
    %v1903 = vunpack.c.l.b16 %v644
    %v1904 = vunpack.c.h.b16 %v644
    %v1905 = vunpack.c.l.b16 %v645
    %v1906 = vunpack.c.h.b16 %v645
    %v1907 = vunpack.c.l.b16 %v646
    %v1908 = vunpack.c.h.b16 %v646
    %v1909 = vunpack.c.l.b16 %v647
    %v1910 = vunpack.c.h.b16 %v647
    %v1911 = vunpack.c.l.b16 %v648
    %v1912 = vunpack.c.h.b16 %v648
    %v1913 = vunpack.c.l.b16 %v649
    %v1914 = vunpack.c.h.b16 %v649
    %v1915 = vunpack.c.l.b16 %v650
    %v1916 = vunpack.c.h.b16 %v650
    %v1917 = vunpack.c.l.b16 %v651
    %v1918 = vunpack.c.h.b16 %v651
    %v1919 = vunpack.c.l.b16 %v652
    %v1920 = vunpack.c.h.b16 %v652
    %v1921 = vunpack.c.l.b16 %v653
    %v1922 = vunpack.c.h.b16 %v653
    %v1923 = vunpack.c.l.b16 %v654
    %v1924 = vunpack.c.h.b16 %v654
    %v1925 = vunpack.c.l.b16 %v655
    %v1926 = vunpack.c.h.b16 %v655
    %v1927 = vunpack.c.l.b16 %v656
    %v1928 = vunpack.c.h.b16 %v656
    %v1929 = vunpack.c.l.b16 %v657
    %v1930 = vunpack.c.h.b16 %v657
    %v1931 = vunpack.c.l.b16 %v658
    %v1932 = vunpack.c.h.b16 %v658
    %v1933 = vunpack.c.l.b16 %v659
    %v1934 = vunpack.c.h.b16 %v659
    %v1935 = vunpack.c.l.b16 %v660
    %v1936 = vunpack.c.h.b16 %v660
    %v1937 = vunpack.c.l.b16 %v661
    %v1938 = vunpack.c.h.b16 %v661
    %v1939 = vunpack.c.l.b16 %v662
    %v1940 = vunpack.c.h.b16 %v662
    %v1941 = vunpack.c.l.b16 %v663
    %v1942 = vunpack.c.h.b16 %v663
    %v1943 = vunpack.c.l.b16 %v664
    %v1944 = vunpack.c.h.b16 %v664
    %v1945 = vunpack.c.l.b16 %v665
    %v1946 = vunpack.c.h.b16 %v665
    %v1947 = vunpack.c.l.b16 %v666
    %v1948 = vunpack.c.h.b16 %v666
    %v1949 = vunpack.c.l.b16 %v667
    %v1950 = vunpack.c.h.b16 %v667
    %v1951 = vunpack.c.l.b16 %v668
    %v1952 = vunpack.c.h.b16 %v668
    %v1953 = vunpack.c.l.b16 %v669
    %v1954 = vunpack.c.h.b16 %v669
    %v1955 = vunpack.c.l.b16 %v670
    %v1956 = vunpack.c.h.b16 %v670
    %v1957 = vunpack.c.l.b16 %v671
    %v1958 = vunpack.c.h.b16 %v671
    %v1959 = vunpack.c.l.b16 %v672
    %v1960 = vunpack.c.h.b16 %v672
    %v1961 = vunpack.c.l.b16 %v673
    %v1962 = vunpack.c.h.b16 %v673
    %v1963 = vunpack.c.l.b16 %v674
    %v1964 = vunpack.c.h.b16 %v674
    %v1965 = vunpack.c.l.b16 %v675
    %v1966 = vunpack.c.h.b16 %v675
    %v1967 = vunpack.c.l.b16 %v676
    %v1968 = vunpack.c.h.b16 %v676
    %v1969 = vunpack.c.l.b16 %v677
    %v1970 = vunpack.c.h.b16 %v677
    %v1971 = vunpack.c.l.b16 %v678
    %v1972 = vunpack.c.h.b16 %v678
    %v1973 = vunpack.c.l.b16 %v679
    %v1974 = vunpack.c.h.b16 %v679
    %v1975 = vunpack.c.l.b16 %v680
    %v1976 = vunpack.c.h.b16 %v680
    %v1977 = vunpack.c.l.b16 %v681
    %v1978 = vunpack.c.h.b16 %v681
    %v1979 = vunpack.c.l.b16 %v682
    %v1980 = vunpack.c.h.b16 %v682
    %v1981 = vunpack.c.l.b16 %v683
    %v1982 = vunpack.c.h.b16 %v683
    %v1983 = vunpack.c.l.b16 %v684
    %v1984 = vunpack.c.h.b16 %v684
    %v1985 = vunpack.c.l.b16 %v685
    %v1986 = vunpack.c.h.b16 %v685
    %v1987 = vunpack.c.l.b16 %v686
    %v1988 = vunpack.c.h.b16 %v686
    %v1989 = vunpack.c.l.b16 %v687
    %v1990 = vunpack.c.h.b16 %v687
    %v1991 = vunpack.c.l.b16 %v688
    %v1992 = vunpack.c.h.b16 %v688
    %v1993 = vunpack.c.l.b16 %v689
    %v1994 = vunpack.c.h.b16 %v689
    %v1995 = vunpack.c.l.b16 %v690
    %v1996 = vunpack.c.h.b16 %v690
    %v1997 = vunpack.c.l.b16 %v691
    %v1998 = vunpack.c.h.b16 %v691
    %v1999 = vunpack.c.l.b16 %v692
    %v2000 = vunpack.c.h.b16 %v692
    %v2001 = vunpack.c.l.b16 %v693
    %v2002 = vunpack.c.h.b16 %v693
    %v2003 = vunpack.c.l.b16 %v694
    %v2004 = vunpack.c.h.b16 %v694
    %v2005 = vunpack.c.l.b16 %v695
    %v2006 = vunpack.c.h.b16 %v695
    %v2007 = vunpack.c.l.b16 %v696
    %v2008 = vunpack.c.h.b16 %v696
    %v2009 = vunpack.c.l.b16 %v697
    %v2010 = vunpack.c.h.b16 %v697
    %v2011 = vunpack.c.l.b16 %v698
    %v2012 = vunpack.c.h.b16 %v698
    %v2013 = vunpack.c.l.b16 %v699
    %v2014 = vunpack.c.h.b16 %v699
    %v2015 = vunpack.c.l.b16 %v700
    %v2016 = vunpack.c.h.b16 %v700
    %v2017 = vunpack.c.l.b16 %v701
    %v2018 = vunpack.c.h.b16 %v701
    %v2019 = vunpack.c.l.b16 %v702
    %v2020 = vunpack.c.h.b16 %v702
    %v2021 = vunpack.c.l.b16 %v703
    %v2022 = vunpack.c.h.b16 %v703
    %v2023 = vunpack.c.l.b16 %v704
    %v2024 = vunpack.c.h.b16 %v704
    %v2025 = vunpack.c.l.b16 %v705
    %v2026 = vunpack.c.h.b16 %v705
    %v2027 = vunpack.c.l.b16 %v706
    %v2028 = vunpack.c.h.b16 %v706
    %v2029 = vunpack.c.l.b16 %v707
    %v2030 = vunpack.c.h.b16 %v707
    %v2031 = vunpack.c.l.b16 %v708
    %v2032 = vunpack.c.h.b16 %v708
    %v2033 = vunpack.c.l.b16 %v709
    %v2034 = vunpack.c.h.b16 %v709
    %v2035 = vunpack.c.l.b16 %v710
    %v2036 = vunpack.c.h.b16 %v710
    %v2037 = vunpack.c.l.b16 %v711
    %v2038 = vunpack.c.h.b16 %v711
    %v2039 = vunpack.c.l.b16 %v712
    %v2040 = vunpack.c.h.b16 %v712
    %v2041 = vunpack.c.l.b16 %v713
    %v2042 = vunpack.c.h.b16 %v713
    %v2043 = vunpack.c.l.b16 %v714
    %v2044 = vunpack.c.h.b16 %v714
    %v2045 = vunpack.c.l.b16 %v715
    %v2046 = vunpack.c.h.b16 %v715
    %v2047 = vunpack.c.l.b16 %v716
    %v2048 = vunpack.c.h.b16 %v716
    %v2049 = vunpack.c.l.b16 %v717
    %v2050 = vunpack.c.h.b16 %v717
    %v2051 = vunpack.c.l.b16 %v718
    %v2052 = vunpack.c.h.b16 %v718
    %v2053 = vunpack.c.l.b16 %v719
    %v2054 = vunpack.c.h.b16 %v719
    %v2055 = vunpack.c.l.b16 %v720
    %v2056 = vunpack.c.h.b16 %v720
    %v2057 = vunpack.c.l.b16 %v721
    %v2058 = vunpack.c.h.b16 %v721
    %v2059 = vunpack.c.l.b16 %v722
    %v2060 = vunpack.c.h.b16 %v722
    %v2061 = vunpack.c.l.b16 %v723
    %v2062 = vunpack.c.h.b16 %v723
    %v2063 = vunpack.c.l.b16 %v724
    %v2064 = vunpack.c.h.b16 %v724
    %v2065 = vunpack.c.l.b16 %v725
    %v2066 = vunpack.c.h.b16 %v725
    %v2067 = vunpack.c.l.b16 %v726
    %v2068 = vunpack.c.h.b16 %v726
    %v2069 = vunpack.c.l.b16 %v727
    %v2070 = vunpack.c.h.b16 %v727
    %v2071 = vunpack.c.l.b16 %v728
    %v2072 = vunpack.c.h.b16 %v728
    %v2073 = vunpack.c.l.b16 %v729
    %v2074 = vunpack.c.h.b16 %v729
    %v2075 = vunpack.c.l.b16 %v730
    %v2076 = vunpack.c.h.b16 %v730
    %v2077 = vunpack.c.l.b16 %v731
    %v2078 = vunpack.c.h.b16 %v731
    %v2079 = vunpack.c.l.b16 %v732
    %v2080 = vunpack.c.h.b16 %v732
    %v2081 = vunpack.c.l.b16 %v733
    %v2082 = vunpack.c.h.b16 %v733
    %v2083 = vunpack.c.l.b16 %v734
    %v2084 = vunpack.c.h.b16 %v734
    %v2085 = vunpack.c.l.b16 %v735
    %v2086 = vunpack.c.h.b16 %v735
    %v2087 = vunpack.c.l.b16 %v736
    %v2088 = vunpack.c.h.b16 %v736
    %v2089 = vunpack.c.l.b16 %v737
    %v2090 = vunpack.c.h.b16 %v737
    %v2091 = vunpack.c.l.b16 %v738
    %v2092 = vunpack.c.h.b16 %v738
    %v2093 = vunpack.c.l.b16 %v739
    %v2094 = vunpack.c.h.b16 %v739
    %v2095 = vunpack.c.l.b16 %v740
    %v2096 = vunpack.c.h.b16 %v740
    %v2097 = vunpack.c.l.b16 %v741
    %v2098 = vunpack.c.h.b16 %v741
    %v2099 = vunpack.c.l.b16 %v742
    %v2100 = vunpack.c.h.b16 %v742
    %v2101 = vunpack.c.l.b16 %v743
    %v2102 = vunpack.c.h.b16 %v743
    %v2103 = vunpack.c.l.b16 %v744
    %v2104 = vunpack.c.h.b16 %v744
    %v2105 = vunpack.c.l.b16 %v745
    %v2106 = vunpack.c.h.b16 %v745
    %v2107 = vunpack.c.l.b16 %v746
    %v2108 = vunpack.c.h.b16 %v746
    %v2109 = vunpack.c.l.b16 %v747
    %v2110 = vunpack.c.h.b16 %v747
    %v2111 = vunpack.c.l.b16 %v748
    %v2112 = vunpack.c.h.b16 %v748
    %v2113 = vunpack.c.l.b16 %v749
    %v2114 = vunpack.c.h.b16 %v749
    %v2115 = vunpack.c.l.b16 %v750
    %v2116 = vunpack.c.h.b16 %v750
    %v2117 = vunpack.c.l.b16 %v751
    %v2118 = vunpack.c.h.b16 %v751
    %v2119 = vunpack.c.l.b16 %v752
    %v2120 = vunpack.c.h.b16 %v752
    %v2121 = vunpack.c.l.b16 %v753
    %v2122 = vunpack.c.h.b16 %v753
    %v2123 = vunpack.c.l.b16 %v754
    %v2124 = vunpack.c.h.b16 %v754
    %v2125 = vunpack.c.l.b16 %v755
    %v2126 = vunpack.c.h.b16 %v755
    %v2127 = vunpack.c.l.b16 %v756
    %v2128 = vunpack.c.h.b16 %v756
    %v2129 = vunpack.c.l.b16 %v757
    %v2130 = vunpack.c.h.b16 %v757
    %v2131 = vunpack.c.l.b16 %v758
    %v2132 = vunpack.c.h.b16 %v758
    %v2133 = vunpack.c.l.b16 %v759
    %v2134 = vunpack.c.h.b16 %v759
    %v2135 = vunpack.c.l.b16 %v760
    %v2136 = vunpack.c.h.b16 %v760
    %v2137 = vunpack.c.l.b16 %v761
    %v2138 = vunpack.c.h.b16 %v761
    %v2139 = vunpack.c.l.b16 %v762
    %v2140 = vunpack.c.h.b16 %v762
    %v2141 = vunpack.c.l.b16 %v763
    %v2142 = vunpack.c.h.b16 %v763
    %v2143 = vunpack.c.l.b16 %v764
    %v2144 = vunpack.c.h.b16 %v764
    %v2145 = vunpack.c.l.b16 %v765
    %v2146 = vunpack.c.h.b16 %v765
    %v2147 = vunpack.c.l.b16 %v766
    %v2148 = vunpack.c.h.b16 %v766
    %v2149 = vunpack.c.l.b16 %v767
    %v2150 = vunpack.c.h.b16 %v767
    %v2151 = vunpack.c.l.b16 %v768
    %v2152 = vunpack.c.h.b16 %v768
    %v2153 = vunpack.c.l.b16 %v769
    %v2154 = vunpack.c.h.b16 %v769
    %v2155 = vunpack.c.l.b16 %v770
    %v2156 = vunpack.c.h.b16 %v770
    %v2157 = vunpack.c.l.b16 %v771
    %v2158 = vunpack.c.h.b16 %v771
    %v2159 = vunpack.c.l.b16 %v772
    %v2160 = vunpack.c.h.b16 %v772
    %v2161 = vunpack.c.l.b16 %v773
    %v2162 = vunpack.c.h.b16 %v773
    %v2163 = vunpack.c.l.b16 %v774
    %v2164 = vunpack.c.h.b16 %v774
    %v2165 = vunpack.c.l.b16 %v775
    %v2166 = vunpack.c.h.b16 %v775
    %v2167 = vunpack.c.l.b16 %v776
    %v2168 = vunpack.c.h.b16 %v776
    %v2169 = vunpack.c.l.b16 %v777
    %v2170 = vunpack.c.h.b16 %v777
    %v2171 = vunpack.c.l.b16 %v778
    %v2172 = vunpack.c.h.b16 %v778
    %v2173 = vunpack.c.l.b16 %v779
    %v2174 = vunpack.c.h.b16 %v779
    %v2175 = vunpack.c.l.b16 %v780
    %v2176 = vunpack.c.h.b16 %v780
    %v2177 = vunpack.c.l.b16 %v781
    %v2178 = vunpack.c.h.b16 %v781
    %v2179 = vunpack.c.l.b16 %v782
    %v2180 = vunpack.c.h.b16 %v782
    %v2181 = vunpack.c.l.b16 %v783
    %v2182 = vunpack.c.h.b16 %v783
    %v2183 = vunpack.c.l.b16 %v784
    %v2184 = vunpack.c.h.b16 %v784
    %v2185 = vunpack.c.l.b16 %v785
    %v2186 = vunpack.c.h.b16 %v785
    %v2187 = vunpack.c.l.b16 %v786
    %v2188 = vunpack.c.h.b16 %v786
    %v2189 = vunpack.c.l.b16 %v787
    %v2190 = vunpack.c.h.b16 %v787
    %v2191 = vunpack.c.l.b16 %v788
    %v2192 = vunpack.c.h.b16 %v788
    %v2193 = vunpack.c.l.b16 %v789
    %v2194 = vunpack.c.h.b16 %v789
    %v2195 = vunpack.c.l.b16 %v790
    %v2196 = vunpack.c.h.b16 %v790
    %v2197 = vunpack.c.l.b16 %v791
    %v2198 = vunpack.c.h.b16 %v791
    %v2199 = vunpack.c.l.b16 %v792
    %v2200 = vunpack.c.h.b16 %v792
    %v2201 = vunpack.c.l.b16 %v793
    %v2202 = vunpack.c.h.b16 %v793
    %v2203 = vunpack.c.l.b16 %v794
    %v2204 = vunpack.c.h.b16 %v794
    %v2205 = vunpack.c.l.b16 %v795
    %v2206 = vunpack.c.h.b16 %v795
    %v2207 = vunpack.c.l.b16 %v796
    %v2208 = vunpack.c.h.b16 %v796
    %v2209 = vunpack.c.l.b16 %v797
    %v2210 = vunpack.c.h.b16 %v797
    %v2211 = vunpack.c.l.b16 %v798
    %v2212 = vunpack.c.h.b16 %v798
    %v2213 = vunpack.c.l.b16 %v799
    %v2214 = vunpack.c.h.b16 %v799
    %v2215 = vunpack.c.l.b16 %v800
    %v2216 = vunpack.c.h.b16 %v800
    %v2217 = vunpack.c.l.b16 %v801
    %v2218 = vunpack.c.h.b16 %v801
    %v2219 = vunpack.c.l.b16 %v802
    %v2220 = vunpack.c.h.b16 %v802
    %v2221 = vunpack.c.l.b16 %v803
    %v2222 = vunpack.c.h.b16 %v803
    %v2223 = vunpack.c.l.b16 %v804
    %v2224 = vunpack.c.h.b16 %v804
    %v2225 = vunpack.c.l.b16 %v805
    %v2226 = vunpack.c.h.b16 %v805
    %v2227 = vunpack.c.l.b16 %v806
    %v2228 = vunpack.c.h.b16 %v806
    %v2229 = vunpack.c.l.b16 %v807
    %v2230 = vunpack.c.h.b16 %v807
    %v2231 = vunpack.c.l.b16 %v808
    %v2232 = vunpack.c.h.b16 %v808
    %v2233 = vunpack.c.l.b16 %v809
    %v2234 = vunpack.c.h.b16 %v809
    %v2235 = vunpack.c.l.b16 %v810
    %v2236 = vunpack.c.h.b16 %v810
    %v2237 = vunpack.c.l.b16 %v811
    %v2238 = vunpack.c.h.b16 %v811
    %v2239 = vunpack.c.l.b16 %v812
    %v2240 = vunpack.c.h.b16 %v812
    %v2241 = vunpack.c.l.b16 %v813
    %v2242 = vunpack.c.h.b16 %v813
    %v2243 = vunpack.c.l.b16 %v814
    %v2244 = vunpack.c.h.b16 %v814
    %v2245 = vunpack.c.l.b16 %v815
    %v2246 = vunpack.c.h.b16 %v815
    %v2247 = vunpack.c.l.b16 %v816
    %v2248 = vunpack.c.h.b16 %v816
    %v2249 = vunpack.c.l.b16 %v817
    %v2250 = vunpack.c.h.b16 %v817
    %v2251 = vunpack.c.l.b16 %v818
    %v2252 = vunpack.c.h.b16 %v818
    %v2253 = vunpack.c.l.b16 %v819
    %v2254 = vunpack.c.h.b16 %v819
    %v2255 = vunpack.c.l.b16 %v820
    %v2256 = vunpack.c.h.b16 %v820
    %v2257 = vunpack.c.l.b16 %v821
    %v2258 = vunpack.c.h.b16 %v821
    %v2259 = vunpack.c.l.b16 %v822
    %v2260 = vunpack.c.h.b16 %v822
    %v2261 = vunpack.c.l.b16 %v823
    %v2262 = vunpack.c.h.b16 %v823
    %v2263 = vunpack.c.l.b16 %v824
    %v2264 = vunpack.c.h.b16 %v824
    %v2265 = vunpack.c.l.b16 %v825
    %v2266 = vunpack.c.h.b16 %v825
    %v2267 = vunpack.c.l.b16 %v826
    %v2268 = vunpack.c.h.b16 %v826
    %v2269 = vunpack.c.l.b16 %v827
    %v2270 = vunpack.c.h.b16 %v827
    %v2271 = vunpack.c.l.b16 %v828
    %v2272 = vunpack.c.h.b16 %v828
    %v2273 = vunpack.c.l.b16 %v829
    %v2274 = vunpack.c.h.b16 %v829
    %v2275 = vunpack.c.l.b16 %v830
    %v2276 = vunpack.c.h.b16 %v830
    %v2277 = vunpack.c.l.b16 %v831
    %v2278 = vunpack.c.h.b16 %v831
    %v2279 = vunpack.c.l.b16 %v832
    %v2280 = vunpack.c.h.b16 %v832
    %v2281 = vunpack.c.l.b16 %v833
    %v2282 = vunpack.c.h.b16 %v833
    %v2283 = vunpack.c.l.b16 %v834
    %v2284 = vunpack.c.h.b16 %v834
    %v2285 = vunpack.c.l.b16 %v835
    %v2286 = vunpack.c.h.b16 %v835
    %v2287 = vunpack.c.l.b16 %v836
    %v2288 = vunpack.c.h.b16 %v836
    %v2289 = vunpack.c.l.b16 %v837
    %v2290 = vunpack.c.h.b16 %v837
    %v2291 = vunpack.c.l.b16 %v838
    %v2292 = vunpack.c.h.b16 %v838
    %v2293 = vunpack.c.l.b16 %v839
    %v2294 = vunpack.c.h.b16 %v839
    %v2295 = vunpack.c.l.b16 %v840
    %v2296 = vunpack.c.h.b16 %v840
    %v2297 = vunpack.c.l.b16 %v841
    %v2298 = vunpack.c.h.b16 %v841
    %v2299 = vunpack.c.l.b16 %v842
    %v2300 = vunpack.c.h.b16 %v842
    %v2301 = vunpack.c.l.b16 %v843
    %v2302 = vunpack.c.h.b16 %v843
    %v2303 = vunpack.c.l.b16 %v844
    %v2304 = vunpack.c.h.b16 %v844
    %v2305 = vunpack.c.l.b16 %v845
    %v2306 = vunpack.c.h.b16 %v845
    %v2307 = vunpack.c.l.b16 %v846
    %v2308 = vunpack.c.h.b16 %v846
    %v2309 = vunpack.c.l.b16 %v847
    %v2310 = vunpack.c.h.b16 %v847
    %v2311 = vunpack.c.l.b16 %v848
    %v2312 = vunpack.c.h.b16 %v848
    %v2313 = vunpack.c.l.b16 %v849
    %v2314 = vunpack.c.h.b16 %v849
    %v2315 = vunpack.c.l.b16 %v850
    %v2316 = vunpack.c.h.b16 %v850
    %v2317 = vunpack.c.l.b16 %v851
    %v2318 = vunpack.c.h.b16 %v851
    %v2319 = vunpack.c.l.b16 %v852
    %v2320 = vunpack.c.h.b16 %v852
    %v2321 = vunpack.c.l.b16 %v853
    %v2322 = vunpack.c.h.b16 %v853
    %v2323 = vunpack.c.l.b16 %v854
    %v2324 = vunpack.c.h.b16 %v854
    %v2325 = vunpack.c.l.b16 %v855
    %v2326 = vunpack.c.h.b16 %v855
    %v2327 = vunpack.c.l.b16 %v856
    %v2328 = vunpack.c.h.b16 %v856
    %v2329 = vunpack.c.l.b16 %v857
    %v2330 = vunpack.c.h.b16 %v857
    %v2331 = vunpack.c.l.b16 %v858
    %v2332 = vunpack.c.h.b16 %v858
    %v2333 = vunpack.c.l.b16 %v859
    %v2334 = vunpack.c.h.b16 %v859
    %v2335 = vunpack.c.l.b16 %v860
    %v2336 = vunpack.c.h.b16 %v860
    %v2337 = vunpack.c.l.b16 %v861
    %v2338 = vunpack.c.h.b16 %v861
    %v2339 = vunpack.c.l.b16 %v862
    %v2340 = vunpack.c.h.b16 %v862
    %v2341 = vunpack.c.l.b16 %v863
    %v2342 = vunpack.c.h.b16 %v863
    %v2343 = vunpack.c.l.b16 %v864
    %v2344 = vunpack.c.h.b16 %v864
    %v2345 = vunpack.c.l.b16 %v865
    %v2346 = vunpack.c.h.b16 %v865
    %v2347 = vunpack.c.l.b16 %v866
    %v2348 = vunpack.c.h.b16 %v866
    %v2349 = vunpack.c.l.b16 %v867
    %v2350 = vunpack.c.h.b16 %v867
    %v2351 = vunpack.c.l.b16 %v868
    %v2352 = vunpack.c.h.b16 %v868
    %v2353 = vunpack.c.l.b16 %v869
    %v2354 = vunpack.c.h.b16 %v869
    %v2355 = vunpack.c.l.b16 %v870
    %v2356 = vunpack.c.h.b16 %v870
    %v2357 = vunpack.c.l.b16 %v871
    %v2358 = vunpack.c.h.b16 %v871
    %v2359 = vunpack.c.l.b16 %v872
    %v2360 = vunpack.c.h.b16 %v872
    %v2361 = vunpack.c.l.b16 %v873
    %v2362 = vunpack.c.h.b16 %v873
    %v2363 = vunpack.c.l.b16 %v874
    %v2364 = vunpack.c.h.b16 %v874
    %v2365 = vunpack.c.l.b16 %v875
    %v2366 = vunpack.c.h.b16 %v875
    %v2367 = vunpack.c.l.b16 %v876
    %v2368 = vunpack.c.h.b16 %v876
    %v2369 = vunpack.c.l.b16 %v877
    %v2370 = vunpack.c.h.b16 %v877
    %v2371 = vunpack.c.l.b16 %v878
    %v2372 = vunpack.c.h.b16 %v878
    %v2373 = vunpack.c.l.b16 %v879
    %v2374 = vunpack.c.h.b16 %v879
    %v2375 = vunpack.c.l.b16 %v880
    %v2376 = vunpack.c.h.b16 %v880
    %v2377 = vunpack.c.l.b16 %v881
    %v2378 = vunpack.c.h.b16 %v881
    %v2379 = vunpack.c.l.b16 %v882
    %v2380 = vunpack.c.h.b16 %v882
    %v2381 = vunpack.c.l.b16 %v883
    %v2382 = vunpack.c.h.b16 %v883
    %v2383 = vunpack.c.l.b16 %v884
    %v2384 = vunpack.c.h.b16 %v884
    %v2385 = vunpack.c.l.b16 %v885
    %v2386 = vunpack.c.h.b16 %v885
    %v2387 = vunpack.c.l.b16 %v886
    %v2388 = vunpack.c.h.b16 %v886
    %v2389 = vunpack.c.l.b16 %v887
    %v2390 = vunpack.c.h.b16 %v887
    %v2391 = vunpack.c.l.b16 %v888
    %v2392 = vunpack.c.h.b16 %v888
    %v2393 = vunpack.c.l.b16 %v889
    %v2394 = vunpack.c.h.b16 %v889
    %v2395 = vunpack.c.l.b16 %v890
    %v2396 = vunpack.c.h.b16 %v890
    %v2397 = vunpack.c.l.b16 %v891
    %v2398 = vunpack.c.h.b16 %v891
    %v2399 = vunpack.c.l.b16 %v892
    %v2400 = vunpack.c.h.b16 %v892
    %v2401 = vunpack.c.l.b16 %v893
    %v2402 = vunpack.c.h.b16 %v893
    %v2403 = vunpack.c.l.b16 %v894
    %v2404 = vunpack.c.h.b16 %v894
    %v2405 = vunpack.c.l.b16 %v895
    %v2406 = vunpack.c.h.b16 %v895
    %v2407 = vunpack.c.l.b16 %v896
    %v2408 = vunpack.c.h.b16 %v896
    %v2409 = vunpack.c.l.b16 %v897
    %v2410 = vunpack.c.h.b16 %v897
    %v2411 = vunpack.c.l.b16 %v898
    %v2412 = vunpack.c.h.b16 %v898
    %v2413 = vunpack.c.l.b16 %v899
    %v2414 = vunpack.c.h.b16 %v899
    %v2415 = vunpack.c.l.b16 %v900
    %v2416 = vunpack.c.h.b16 %v900
    %v2417 = vunpack.c.l.b16 %v901
    %v2418 = vunpack.c.h.b16 %v901
    %v2419 = vunpack.c.l.b16 %v902
    %v2420 = vunpack.c.h.b16 %v902
    %v2421 = vunpack.c.l.b16 %v903
    %v2422 = vunpack.c.h.b16 %v903
    %v2423 = vunpack.c.l.b16 %v904
    %v2424 = vunpack.c.h.b16 %v904
    %v2425 = vunpack.c.l.b16 %v905
    %v2426 = vunpack.c.h.b16 %v905
    %v2427 = vunpack.c.l.b16 %v906
    %v2428 = vunpack.c.h.b16 %v906
    %v2429 = vunpack.c.l.b16 %v907
    %v2430 = vunpack.c.h.b16 %v907
    %v2431 = vunpack.c.l.b16 %v908
    %v2432 = vunpack.c.h.b16 %v908
    %v2433 = vunpack.c.l.b16 %v909
    %v2434 = vunpack.c.h.b16 %v909
    %v2435 = vunpack.c.l.b16 %v910
    %v2436 = vunpack.c.h.b16 %v910
    %v2437 = vunpack.c.l.b16 %v911
    %v2438 = vunpack.c.h.b16 %v911
    %v2439 = vunpack.c.l.b16 %v912
    %v2440 = vunpack.c.h.b16 %v912
    %v2441 = vunpack.c.l.b16 %v913
    %v2442 = vunpack.c.h.b16 %v913
    %v2443 = vunpack.c.l.b16 %v914
    %v2444 = vunpack.c.h.b16 %v914
    %v2445 = vunpack.c.l.b16 %v915
    %v2446 = vunpack.c.h.b16 %v915
    %v2447 = vunpack.c.l.b16 %v916
    %v2448 = vunpack.c.h.b16 %v916
    %v2449 = vunpack.c.l.b16 %v917
    %v2450 = vunpack.c.h.b16 %v917
    %v2451 = vunpack.c.l.b16 %v918
    %v2452 = vunpack.c.h.b16 %v918
    %v2453 = vunpack.c.l.b16 %v919
    %v2454 = vunpack.c.h.b16 %v919
    %v2455 = vunpack.c.l.b16 %v920
    %v2456 = vunpack.c.h.b16 %v920
    %v2457 = vunpack.c.l.b16 %v921
    %v2458 = vunpack.c.h.b16 %v921
    %v2459 = vunpack.c.l.b16 %v922
    %v2460 = vunpack.c.h.b16 %v922
    %v2461 = vunpack.c.l.b16 %v923
    %v2462 = vunpack.c.h.b16 %v923
    %v2463 = vunpack.c.l.b16 %v924
    %v2464 = vunpack.c.h.b16 %v924
    %v2465 = vunpack.c.l.b16 %v925
    %v2466 = vunpack.c.h.b16 %v925
    %v2467 = vunpack.c.l.b16 %v926
    %v2468 = vunpack.c.h.b16 %v926
    %v2469 = vunpack.c.l.b16 %v927
    %v2470 = vunpack.c.h.b16 %v927
    %v2471 = vunpack.c.l.b16 %v928
    %v2472 = vunpack.c.h.b16 %v928
    %v2473 = vunpack.c.l.b16 %v929
    %v2474 = vunpack.c.h.b16 %v929
    %v2475 = vunpack.c.l.b16 %v930
    %v2476 = vunpack.c.h.b16 %v930
    %v2477 = vunpack.c.l.b16 %v931
    %v2478 = vunpack.c.h.b16 %v931
    %v2479 = vunpack.c.l.b16 %v932
    %v2480 = vunpack.c.h.b16 %v932
    %v2481 = vunpack.c.l.b16 %v933
    %v2482 = vunpack.c.h.b16 %v933
    %v2483 = vunpack.c.l.b16 %v934
    %v2484 = vunpack.c.h.b16 %v934
    %v2485 = vunpack.c.l.b16 %v935
    %v2486 = vunpack.c.h.b16 %v935
    %v2487 = vunpack.c.l.b16 %v936
    %v2488 = vunpack.c.h.b16 %v936
    %v2489 = vunpack.c.l.b16 %v937
    %v2490 = vunpack.c.h.b16 %v937
    %v2491 = vunpack.c.l.b16 %v938
    %v2492 = vunpack.c.h.b16 %v938
    %v2493 = vunpack.c.l.b16 %v939
    %v2494 = vunpack.c.h.b16 %v939
    %v2495 = vunpack.c.l.b16 %v940
    %v2496 = vunpack.c.h.b16 %v940
    %v2497 = vunpack.c.l.b16 %v941
    %v2498 = vunpack.c.h.b16 %v941
    %v2499 = vunpack.c.l.b16 %v942
    %v2500 = vunpack.c.h.b16 %v942
    %v2501 = vunpack.c.l.b16 %v943
    %v2502 = vunpack.c.h.b16 %v943
    %v2503 = vunpack.c.l.b16 %v944
    %v2504 = vunpack.c.h.b16 %v944
    %v2505 = vunpack.c.l.b16 %v945
    %v2506 = vunpack.c.h.b16 %v945
    %v2507 = vunpack.c.l.b16 %v946
    %v2508 = vunpack.c.h.b16 %v946
    %v2509 = vunpack.c.l.b16 %v947
    %v2510 = vunpack.c.h.b16 %v947
    %v2511 = vunpack.c.l.b16 %v948
    %v2512 = vunpack.c.h.b16 %v948
    %v2513 = vunpack.c.l.b16 %v949
    %v2514 = vunpack.c.h.b16 %v949
    %v2515 = vunpack.c.l.b16 %v950
    %v2516 = vunpack.c.h.b16 %v950
    %v2517 = vunpack.c.l.b16 %v951
    %v2518 = vunpack.c.h.b16 %v951
    %v2519 = vunpack.c.l.b16 %v952
    %v2520 = vunpack.c.h.b16 %v952
    %v2521 = vunpack.c.l.b16 %v953
    %v2522 = vunpack.c.h.b16 %v953
    %v2523 = vunpack.c.l.b16 %v954
    %v2524 = vunpack.c.h.b16 %v954
    %v2525 = vunpack.c.l.b16 %v955
    %v2526 = vunpack.c.h.b16 %v955
    %v2527 = vunpack.c.l.b16 %v956
    %v2528 = vunpack.c.h.b16 %v956
    %v2529 = vunpack.c.l.b16 %v957
    %v2530 = vunpack.c.h.b16 %v957
    %v2531 = vunpack.c.l.b16 %v958
    %v2532 = vunpack.c.h.b16 %v958
    %v2533 = vunpack.c.l.b16 %v959
    %v2534 = vunpack.c.h.b16 %v959
    %v2535 = vunpack.c.l.b16 %v960
    %v2536 = vunpack.c.h.b16 %v960
    %v2537 = vunpack.c.l.b16 %v961
    %v2538 = vunpack.c.h.b16 %v961
    %v2539 = vunpack.c.l.b16 %v962
    %v2540 = vunpack.c.h.b16 %v962
    %v2541 = vunpack.c.l.b16 %v963
    %v2542 = vunpack.c.h.b16 %v963
    %v2543 = vunpack.c.l.b16 %v964
    %v2544 = vunpack.c.h.b16 %v964
    %v2545 = vunpack.c.l.b16 %v965
    %v2546 = vunpack.c.h.b16 %v965
    %v2547 = vunpack.c.l.b16 %v966
    %v2548 = vunpack.c.h.b16 %v966
    %v2549 = vunpack.c.l.b16 %v967
    %v2550 = vunpack.c.h.b16 %v967
    %v2551 = vunpack.c.l.b16 %v968
    %v2552 = vunpack.c.h.b16 %v968
    %v2553 = vunpack.c.l.b16 %v969
    %v2554 = vunpack.c.h.b16 %v969
    %v2555 = vunpack.c.l.b16 %v970
    %v2556 = vunpack.c.h.b16 %v970
    %v2557 = vunpack.c.l.b16 %v971
    %v2558 = vunpack.c.h.b16 %v971
    %v2559 = vunpack.c.l.b16 %v972
    %v2560 = vunpack.c.h.b16 %v972
    %v2561 = vunpack.c.l.b16 %v973
    %v2562 = vunpack.c.h.b16 %v973
    %v2563 = vunpack.c.l.b16 %v974
    %v2564 = vunpack.c.h.b16 %v974
    %v2565 = vunpack.c.l.b16 %v975
    %v2566 = vunpack.c.h.b16 %v975
    %v2567 = vunpack.c.l.b16 %v976
    %v2568 = vunpack.c.h.b16 %v976
    %v2569 = vunpack.c.l.b16 %v977
    %v2570 = vunpack.c.h.b16 %v977
    %v2571 = vunpack.c.l.b16 %v978
    %v2572 = vunpack.c.h.b16 %v978
    %v2573 = vunpack.c.l.b16 %v979
    %v2574 = vunpack.c.h.b16 %v979
    %v2575 = vunpack.c.l.b16 %v980
    %v2576 = vunpack.c.h.b16 %v980
    %v2577 = vunpack.c.l.b16 %v981
    %v2578 = vunpack.c.h.b16 %v981
    %v2579 = vunpack.c.l.b16 %v982
    %v2580 = vunpack.c.h.b16 %v982
    %v2581 = vunpack.c.l.b16 %v983
    %v2582 = vunpack.c.h.b16 %v983
    %v2583 = vunpack.c.l.b16 %v984
    %v2584 = vunpack.c.h.b16 %v984
    %v2585 = vunpack.c.l.b16 %v985
    %v2586 = vunpack.c.h.b16 %v985
    %v2587 = vunpack.c.l.b16 %v986
    %v2588 = vunpack.c.h.b16 %v986
    %v2589 = vunpack.c.l.b16 %v987
    %v2590 = vunpack.c.h.b16 %v987
    %v2591 = vunpack.c.l.b16 %v988
    %v2592 = vunpack.c.h.b16 %v988
    %v2593 = vunpack.c.l.b16 %v989
    %v2594 = vunpack.c.h.b16 %v989
    %v2595 = vunpack.c.l.b16 %v990
    %v2596 = vunpack.c.h.b16 %v990
    %v2597 = vunpack.c.l.b16 %v991
    %v2598 = vunpack.c.h.b16 %v991
    %v2599 = vunpack.c.l.b16 %v992
    %v2600 = vunpack.c.h.b16 %v992
    %v2601 = vunpack.c.l.b16 %v993
    %v2602 = vunpack.c.h.b16 %v993
    %v2603 = vunpack.c.l.b16 %v994
    %v2604 = vunpack.c.h.b16 %v994
    %v2605 = vunpack.c.l.b16 %v995
    %v2606 = vunpack.c.h.b16 %v995
    %v2607 = vunpack.c.l.b16 %v996
    %v2608 = vunpack.c.h.b16 %v996
    %v2609 = vunpack.c.l.b16 %v997
    %v2610 = vunpack.c.h.b16 %v997
    %v2611 = vunpack.c.l.b16 %v998
    %v2612 = vunpack.c.h.b16 %v998
    %v2613 = vunpack.c.l.b16 %v999
    %v2614 = vunpack.c.h.b16 %v999
    %v2615 = vunpack.c.l.b16 %v1000
    %v2616 = vunpack.c.h.b16 %v1000
    %v2617 = vunpack.c.l.b16 %v1001
    %v2618 = vunpack.c.h.b16 %v1001
    %v2619 = vunpack.c.l.b16 %v1002
    %v2620 = vunpack.c.h.b16 %v1002
    %v2621 = vunpack.c.l.b16 %v1003
    %v2622 = vunpack.c.h.b16 %v1003
    %v2623 = vunpack.c.l.b16 %v1004
    %v2624 = vunpack.c.h.b16 %v1004
    %v2625 = vunpack.c.l.b16 %v1005
    %v2626 = vunpack.c.h.b16 %v1005
    %v2627 = vunpack.c.l.b16 %v1006
    %v2628 = vunpack.c.h.b16 %v1006
    %v2629 = vunpack.c.l.b16 %v1007
    %v2630 = vunpack.c.h.b16 %v1007
    %v2631 = vunpack.c.l.b16 %v1008
    %v2632 = vunpack.c.h.b16 %v1008
    %v2633 = vunpack.c.l.b16 %v1009
    %v2634 = vunpack.c.h.b16 %v1009
    %v2635 = vunpack.c.l.b16 %v1010
    %v2636 = vunpack.c.h.b16 %v1010
    %v2637 = vunpack.c.l.b16 %v1011
    %v2638 = vunpack.c.h.b16 %v1011
    %v2639 = vunpack.c.l.b16 %v1012
    %v2640 = vunpack.c.h.b16 %v1012
    %v2641 = vunpack.c.l.b16 %v1013
    %v2642 = vunpack.c.h.b16 %v1013
    %v2643 = vunpack.c.l.b16 %v1014
    %v2644 = vunpack.c.h.b16 %v1014
    %v2645 = vunpack.c.l.b16 %v1015
    %v2646 = vunpack.c.h.b16 %v1015
    %v2647 = vunpack.c.l.b16 %v1016
    %v2648 = vunpack.c.h.b16 %v1016
    %v2649 = vunpack.c.l.b16 %v1017
    %v2650 = vunpack.c.h.b16 %v1017
    %v2651 = vunpack.c.l.b16 %v1018
    %v2652 = vunpack.c.h.b16 %v1018
    %v2653 = vunpack.c.l.b16 %v1019
    %v2654 = vunpack.c.h.b16 %v1019
    %v2655 = vunpack.c.l.b16 %v1020
    %v2656 = vunpack.c.h.b16 %v1020
    %v2657 = vunpack.c.l.b16 %v1021
    %v2658 = vunpack.c.h.b16 %v1021
    %v2659 = vunpack.c.l.b16 %v1022
    %v2660 = vunpack.c.h.b16 %v1022
    %v2661 = vunpack.c.l.b16 %v1023
    %v2662 = vunpack.c.h.b16 %v1023
    %v2663 = vunpack.c.l.b16 %v1024
    %v2664 = vunpack.c.h.b16 %v1024
    %v2665 = vunpack.c.l.b16 %v1025
    %v2666 = vunpack.c.h.b16 %v1025
    %v2667 = vunpack.c.l.b16 %v1026
    %v2668 = vunpack.c.h.b16 %v1026
    %v2669 = vunpack.c.l.b16 %v1027
    %v2670 = vunpack.c.h.b16 %v1027
    %v2671 = vunpack.c.l.b16 %v1028
    %v2672 = vunpack.c.h.b16 %v1028
    %v2673 = vunpack.c.l.b16 %v1029
    %v2674 = vunpack.c.h.b16 %v1029
    %v2675 = vunpack.c.l.b16 %v1030
    %v2676 = vunpack.c.h.b16 %v1030
    %v2677 = vunpack.c.l.b16 %v1031
    %v2678 = vunpack.c.h.b16 %v1031
    %v2679 = vunpack.c.l.b16 %v1032
    %v2680 = vunpack.c.h.b16 %v1032
    %v2681 = vunpack.c.l.b16 %v1033
    %v2682 = vunpack.c.h.b16 %v1033
    %v2683 = vunpack.c.l.b16 %v1034
    %v2684 = vunpack.c.h.b16 %v1034
    %v2685 = vunpack.c.l.b16 %v1035
    %v2686 = vunpack.c.h.b16 %v1035
    %v2687 = vunpack.c.l.b16 %v1036
    %v2688 = vunpack.c.h.b16 %v1036
    %v2689 = vunpack.c.l.b16 %v1037
    %v2690 = vunpack.c.h.b16 %v1037
    %v2691 = vunpack.c.l.b16 %v1038
    %v2692 = vunpack.c.h.b16 %v1038
    %v2693 = vunpack.c.l.b16 %v1039
    %v2694 = vunpack.c.h.b16 %v1039
    %v2695 = vunpack.c.l.b16 %v1040
    %v2696 = vunpack.c.h.b16 %v1040
    %v2697 = vunpack.c.l.b16 %v1041
    %v2698 = vunpack.c.h.b16 %v1041
    %v2699 = vunpack.c.l.b16 %v1042
    %v2700 = vunpack.c.h.b16 %v1042
    %v2701 = vunpack.c.l.b16 %v1043
    %v2702 = vunpack.c.h.b16 %v1043
    %v2703 = vunpack.c.l.b16 %v1044
    %v2704 = vunpack.c.h.b16 %v1044
    %v2705 = vunpack.c.l.b16 %v1045
    %v2706 = vunpack.c.h.b16 %v1045
    %v2707 = vunpack.c.l.b16 %v1046
    %v2708 = vunpack.c.h.b16 %v1046
    %v2709 = vunpack.c.l.b16 %v1047
    %v2710 = vunpack.c.h.b16 %v1047
    %v2711 = vunpack.c.l.b16 %v1048
    %v2712 = vunpack.c.h.b16 %v1048
    %v2713 = vunpack.c.l.b16 %v1049
    %v2714 = vunpack.c.h.b16 %v1049
    %v2715 = vunpack.c.l.b16 %v1050
    %v2716 = vunpack.c.h.b16 %v1050
    %v2717 = vunpack.c.l.b16 %v1051
    %v2718 = vunpack.c.h.b16 %v1051
    %v2719 = vunpack.c.l.b16 %v1052
    %v2720 = vunpack.c.h.b16 %v1052
    %v2721 = vunpack.c.l.b16 %v1053
    %v2722 = vunpack.c.h.b16 %v1053
    %v2723 = vunpack.c.l.b16 %v1054
    %v2724 = vunpack.c.h.b16 %v1054
    %v2725 = vunpack.c.l.b16 %v1055
    %v2726 = vunpack.c.h.b16 %v1055
    %v2727 = vunpack.c.l.b16 %v1056
    %v2728 = vunpack.c.h.b16 %v1056
    %v2729 = vunpack.c.l.b16 %v1057
    %v2730 = vunpack.c.h.b16 %v1057
    %v2731 = vunpack.c.l.b16 %v1058
    %v2732 = vunpack.c.h.b16 %v1058
    %v2733 = vunpack.c.l.b16 %v1059
    %v2734 = vunpack.c.h.b16 %v1059
    %v2735 = vunpack.c.l.b16 %v1060
    %v2736 = vunpack.c.h.b16 %v1060
    %v2737 = vunpack.c.l.b16 %v1061
    %v2738 = vunpack.c.h.b16 %v1061
    %v2739 = vunpack.c.l.b16 %v1062
    %v2740 = vunpack.c.h.b16 %v1062
    %v2741 = vunpack.c.l.b16 %v1063
    %v2742 = vunpack.c.h.b16 %v1063
    %v2743 = vunpack.c.l.b16 %v1064
    %v2744 = vunpack.c.h.b16 %v1064
    %v2745 = vunpack.c.l.b16 %v1065
    %v2746 = vunpack.c.h.b16 %v1065
    %v2747 = vunpack.c.l.b16 %v1066
    %v2748 = vunpack.c.h.b16 %v1066
    %v2749 = vunpack.c.l.b16 %v1067
    %v2750 = vunpack.c.h.b16 %v1067
    %v2751 = vunpack.c.l.b16 %v1068
    %v2752 = vunpack.c.h.b16 %v1068
    %v2753 = vunpack.c.l.b16 %v1069
    %v2754 = vunpack.c.h.b16 %v1069
    %v2755 = vunpack.c.l.b16 %v1070
    %v2756 = vunpack.c.h.b16 %v1070
    %v2757 = vunpack.c.l.b16 %v1071
    %v2758 = vunpack.c.h.b16 %v1071
    %v2759 = vunpack.c.l.b16 %v1072
    %v2760 = vunpack.c.h.b16 %v1072
    %v2761 = vunpack.c.l.b16 %v1073
    %v2762 = vunpack.c.h.b16 %v1073
    %v2763 = vunpack.c.l.b16 %v1074
    %v2764 = vunpack.c.h.b16 %v1074
    %v2765 = vunpack.c.l.b16 %v1075
    %v2766 = vunpack.c.h.b16 %v1075
    %v2767 = vunpack.c.l.b16 %v1076
    %v2768 = vunpack.c.h.b16 %v1076
    %v2769 = vunpack.c.l.b16 %v1077
    %v2770 = vunpack.c.h.b16 %v1077
    %v2771 = vunpack.c.l.b16 %v1078
    %v2772 = vunpack.c.h.b16 %v1078
    %v2773 = vunpack.c.l.b16 %v1079
    %v2774 = vunpack.c.h.b16 %v1079
    %v2775 = vunpack.c.l.b16 %v1080
    %v2776 = vunpack.c.h.b16 %v1080
    %v2777 = vunpack.c.l.b16 %v1081
    %v2778 = vunpack.c.h.b16 %v1081
    %v2779 = vunpack.c.l.b16 %v1082
    %v2780 = vunpack.c.h.b16 %v1082
    %v2781 = vunpack.c.l.b16 %v1083
    %v2782 = vunpack.c.h.b16 %v1083
    %v2783 = vunpack.c.l.b16 %v1084
    %v2784 = vunpack.c.h.b16 %v1084
    %v2785 = vunpack.c.l.b16 %v1085
    %v2786 = vunpack.c.h.b16 %v1085
    %v2787 = vunpack.c.l.b16 %v1086
    %v2788 = vunpack.c.h.b16 %v1086
    %v2789 = vunpack.c.l.b16 %v1087
    %v2790 = vunpack.c.h.b16 %v1087
    %v2791 = vunpack.c.l.b16 %v1088
    %v2792 = vunpack.c.h.b16 %v1088
    %v2793 = vunpack.c.l.b16 %v1089
    %v2794 = vunpack.c.h.b16 %v1089
    %v2795 = vunpack.c.l.b16 %v1090
    %v2796 = vunpack.c.h.b16 %v1090
    %v2797 = vunpack.c.l.b16 %v1091
    %v2798 = vunpack.c.h.b16 %v1091
    %v2799 = vunpack.c.l.b16 %v1092
    %v2800 = vunpack.c.h.b16 %v1092
    %v2801 = vunpack.c.l.b16 %v1093
    %v2802 = vunpack.c.h.b16 %v1093
    %v2803 = vunpack.c.l.b16 %v1094
    %v2804 = vunpack.c.h.b16 %v1094
    %v2805 = vunpack.c.l.b16 %v1095
    %v2806 = vunpack.c.h.b16 %v1095
    %v2807 = vunpack.c.l.b16 %v1096
    %v2808 = vunpack.c.h.b16 %v1096
    %v2809 = vunpack.c.l.b16 %v1097
    %v2810 = vunpack.c.h.b16 %v1097
    %v2811 = vunpack.c.l.b16 %v1098
    %v2812 = vunpack.c.h.b16 %v1098
    %v2813 = vunpack.c.l.b16 %v1099
    %v2814 = vunpack.c.h.b16 %v1099
    %v2815 = vunpack.c.l.b16 %v1100
    %v2816 = vunpack.c.h.b16 %v1100
    %v2817 = vunpack.c.l.b16 %v1101
    %v2818 = vunpack.c.h.b16 %v1101
    %v2819 = vunpack.c.l.b16 %v1102
    %v2820 = vunpack.c.h.b16 %v1102
    %v2821 = vunpack.c.l.b16 %v1103
    %v2822 = vunpack.c.h.b16 %v1103
    %v2823 = vunpack.c.l.b16 %v1104
    %v2824 = vunpack.c.h.b16 %v1104
    %v2825 = vunpack.c.l.b16 %v1105
    %v2826 = vunpack.c.h.b16 %v1105
    %v2827 = vunpack.c.l.b16 %v1106
    %v2828 = vunpack.c.h.b16 %v1106
    %v2829 = vunpack.c.l.b16 %v1107
    %v2830 = vunpack.c.h.b16 %v1107
    %v2831 = vunpack.c.l.b16 %v1108
    %v2832 = vunpack.c.h.b16 %v1108
    %v2833 = vunpack.c.l.b16 %v1109
    %v2834 = vunpack.c.h.b16 %v1109
    %v2835 = vunpack.c.l.b16 %v1110
    %v2836 = vunpack.c.h.b16 %v1110
    %v2837 = vunpack.c.l.b16 %v1111
    %v2838 = vunpack.c.h.b16 %v1111
    %v2839 = vunpack.c.l.b16 %v1112
    %v2840 = vunpack.c.h.b16 %v1112
    %v2841 = vunpack.c.l.b16 %v1113
    %v2842 = vunpack.c.h.b16 %v1113
    %v2843 = vunpack.c.l.b16 %v1114
    %v2844 = vunpack.c.h.b16 %v1114
    %v2845 = vunpack.c.l.b16 %v1115
    %v2846 = vunpack.c.h.b16 %v1115
    %v2847 = vunpack.c.l.b16 %v1116
    %v2848 = vunpack.c.h.b16 %v1116
    %v2849 = vunpack.c.l.b16 %v1117
    %v2850 = vunpack.c.h.b16 %v1117
    %v2851 = vunpack.c.l.b16 %v1118
    %v2852 = vunpack.c.h.b16 %v1118
    %v2853 = vunpack.c.l.b16 %v1119
    %v2854 = vunpack.c.h.b16 %v1119
    %v2855 = vunpack.c.l.b16 %v1120
    %v2856 = vunpack.c.h.b16 %v1120
    %v2857 = vunpack.c.l.b16 %v1121
    %v2858 = vunpack.c.h.b16 %v1121
    %v2859 = vunpack.c.l.b16 %v1122
    %v2860 = vunpack.c.h.b16 %v1122
    %v2861 = vunpack.c.l.b16 %v1123
    %v2862 = vunpack.c.h.b16 %v1123
    %v2863 = vunpack.c.l.b16 %v1124
    %v2864 = vunpack.c.h.b16 %v1124
    %v2865 = vunpack.c.l.b16 %v1125
    %v2866 = vunpack.c.h.b16 %v1125
    %v2867 = vunpack.c.l.b16 %v1126
    %v2868 = vunpack.c.h.b16 %v1126
    %v2869 = vunpack.c.l.b16 %v1127
    %v2870 = vunpack.c.h.b16 %v1127
    %v2871 = vunpack.c.l.b16 %v1128
    %v2872 = vunpack.c.h.b16 %v1128
    %v2873 = vunpack.c.l.b16 %v1129
    %v2874 = vunpack.c.h.b16 %v1129
    %v2875 = vunpack.c.l.b16 %v1130
    %v2876 = vunpack.c.h.b16 %v1130
    %v2877 = vunpack.c.l.b16 %v1131
    %v2878 = vunpack.c.h.b16 %v1131
    %v2879 = vunpack.c.l.b16 %v1132
    %v2880 = vunpack.c.h.b16 %v1132
    %v2881 = vunpack.c.l.b16 %v1133
    %v2882 = vunpack.c.h.b16 %v1133
    %v2883 = vunpack.c.l.b16 %v1134
    %v2884 = vunpack.c.h.b16 %v1134
    %v2885 = vunpack.c.l.b16 %v1135
    %v2886 = vunpack.c.h.b16 %v1135
    %v2887 = vunpack.c.l.b16 %v1136
    %v2888 = vunpack.c.h.b16 %v1136
    %v2889 = vunpack.c.l.b16 %v1137
    %v2890 = vunpack.c.h.b16 %v1137
    %v2891 = vunpack.c.l.b16 %v1138
    %v2892 = vunpack.c.h.b16 %v1138
    %v2893 = vunpack.c.l.b16 %v1139
    %v2894 = vunpack.c.h.b16 %v1139
    %v2895 = vunpack.c.l.b16 %v1140
    %v2896 = vunpack.c.h.b16 %v1140
    %v2897 = vunpack.c.l.b16 %v1141
    %v2898 = vunpack.c.h.b16 %v1141
    %v2899 = vunpack.c.l.b16 %v1142
    %v2900 = vunpack.c.h.b16 %v1142
    %v2901 = vunpack.c.l.b16 %v1143
    %v2902 = vunpack.c.h.b16 %v1143
    %v2903 = vunpack.c.l.b16 %v1144
    %v2904 = vunpack.c.h.b16 %v1144
    %v2905 = vunpack.c.l.b16 %v1145
    %v2906 = vunpack.c.h.b16 %v1145
    %v2907 = vunpack.c.l.b16 %v1146
    %v2908 = vunpack.c.h.b16 %v1146
    %v2909 = vunpack.c.l.b16 %v1147
    %v2910 = vunpack.c.h.b16 %v1147
    %v2911 = vunpack.c.l.b16 %v1148
    %v2912 = vunpack.c.h.b16 %v1148
    %v2913 = vunpack.c.l.b16 %v1149
    %v2914 = vunpack.c.h.b16 %v1149
    %v2915 = vunpack.c.l.b16 %v1150
    %v2916 = vunpack.c.h.b16 %v1150
    %v2917 = vunpack.c.l.b16 %v1151
    %v2918 = vunpack.c.h.b16 %v1151
    %v2919 = vunpack.c.l.b16 %v1152
    %v2920 = vunpack.c.h.b16 %v1152
    %v2921 = vunpack.c.l.b16 %v1153
    %v2922 = vunpack.c.h.b16 %v1153
    %v2923 = vunpack.c.l.b16 %v1154
    %v2924 = vunpack.c.h.b16 %v1154
    %v2925 = vunpack.c.l.b16 %v1155
    %v2926 = vunpack.c.h.b16 %v1155
    %v2927 = vunpack.c.l.b16 %v1156
    %v2928 = vunpack.c.h.b16 %v1156
    %v2929 = vunpack.c.l.b16 %v1157
    %v2930 = vunpack.c.h.b16 %v1157
    %v2931 = vunpack.c.l.b16 %v1158
    %v2932 = vunpack.c.h.b16 %v1158
    %v2933 = vunpack.c.l.b16 %v1159
    %v2934 = vunpack.c.h.b16 %v1159
    %v2935 = vunpack.c.l.b16 %v1160
    %v2936 = vunpack.c.h.b16 %v1160
    %v2937 = vunpack.c.l.b16 %v1161
    %v2938 = vunpack.c.h.b16 %v1161
    %v2939 = vunpack.c.l.b16 %v1162
    %v2940 = vunpack.c.h.b16 %v1162
    %v2941 = vunpack.c.l.b16 %v1163
    %v2942 = vunpack.c.h.b16 %v1163
    %v2943 = vunpack.c.l.b16 %v1164
    %v2944 = vunpack.c.h.b16 %v1164
    %v2945 = vunpack.c.l.b16 %v1165
    %v2946 = vunpack.c.h.b16 %v1165
    %v2947 = vunpack.c.l.b16 %v1166
    %v2948 = vunpack.c.h.b16 %v1166
    %v2949 = vunpack.c.l.b16 %v1167
    %v2950 = vunpack.c.h.b16 %v1167
    %v2951 = vunpack.c.l.b16 %v1168
    %v2952 = vunpack.c.h.b16 %v1168
    %v2953 = vunpack.c.l.b16 %v1169
    %v2954 = vunpack.c.h.b16 %v1169
    %v2955 = vunpack.c.l.b16 %v1170
    %v2956 = vunpack.c.h.b16 %v1170
    %v2957 = vunpack.c.l.b16 %v1171
    %v2958 = vunpack.c.h.b16 %v1171
    %v2959 = vunpack.c.l.b16 %v1172
    %v2960 = vunpack.c.h.b16 %v1172
    %v2961 = vunpack.c.l.b16 %v1173
    %v2962 = vunpack.c.h.b16 %v1173
    %v2963 = vunpack.c.l.b16 %v1174
    %v2964 = vunpack.c.h.b16 %v1174
    %v2965 = vunpack.c.l.b16 %v1175
    %v2966 = vunpack.c.h.b16 %v1175
    %v2967 = vunpack.c.l.b16 %v1176
    %v2968 = vunpack.c.h.b16 %v1176
    %v2969 = vunpack.c.l.b16 %v1177
    %v2970 = vunpack.c.h.b16 %v1177
    %v2971 = vunpack.c.l.b16 %v1178
    %v2972 = vunpack.c.h.b16 %v1178
    %v2973 = vunpack.c.l.b16 %v1179
    %v2974 = vunpack.c.h.b16 %v1179
    %v2975 = vunpack.c.l.b16 %v1180
    %v2976 = vunpack.c.h.b16 %v1180
    %v2977 = vunpack.c.l.b16 %v1181
    %v2978 = vunpack.c.h.b16 %v1181
    %v2979 = vunpack.c.l.b16 %v1182
    %v2980 = vunpack.c.h.b16 %v1182
    %v2981 = vunpack.c.l.b16 %v1183
    %v2982 = vunpack.c.h.b16 %v1183
    %v2983 = vunpack.c.l.b16 %v1184
    %v2984 = vunpack.c.h.b16 %v1184
    %v2985 = vunpack.c.l.b16 %v1185
    %v2986 = vunpack.c.h.b16 %v1185
    %v2987 = vunpack.c.l.b16 %v1186
    %v2988 = vunpack.c.h.b16 %v1186
    %v2989 = vunpack.c.l.b16 %v1187
    %v2990 = vunpack.c.h.b16 %v1187
    %v2991 = vunpack.c.l.b16 %v1188
    %v2992 = vunpack.c.h.b16 %v1188
    %v2993 = vunpack.c.l.b16 %v1189
    %v2994 = vunpack.c.h.b16 %v1189
    %v2995 = vunpack.c.l.b16 %v1190
    %v2996 = vunpack.c.h.b16 %v1190
    %v2997 = vunpack.c.l.b16 %v1191
    %v2998 = vunpack.c.h.b16 %v1191
    %v2999 = vunpack.c.l.b16 %v1192
    %v3000 = vunpack.c.h.b16 %v1192
    %v3001 = vunpack.c.l.b16 %v1193
    %v3002 = vunpack.c.h.b16 %v1193
    %v3003 = vunpack.c.l.b16 %v1194
    %v3004 = vunpack.c.h.b16 %v1194
    %v3005 = vunpack.c.l.b16 %v1195
    %v3006 = vunpack.c.h.b16 %v1195
    %v3007 = vunpack.c.l.b16 %v1196
    %v3008 = vunpack.c.h.b16 %v1196
    %v3009 = vunpack.c.l.b16 %v1197
    %v3010 = vunpack.c.h.b16 %v1197
    %v3011 = vunpack.c.l.b16 %v1198
    %v3012 = vunpack.c.h.b16 %v1198
    %v3013 = vunpack.c.l.b16 %v1199
    %v3014 = vunpack.c.h.b16 %v1199
    %v3015 = vunpack.c.l.b16 %v1200
    %v3016 = vunpack.c.h.b16 %v1200
    %v3017 = vunpack.c.l.b16 %v1201
    %v3018 = vunpack.c.h.b16 %v1201
    %v3019 = vunpack.c.l.b16 %v1202
    %v3020 = vunpack.c.h.b16 %v1202
    %v3021 = vunpack.c.l.b16 %v1203
    %v3022 = vunpack.c.h.b16 %v1203
    %v3023 = vunpack.c.l.b16 %v1204
    %v3024 = vunpack.c.h.b16 %v1204
    %v3025 = vunpack.c.l.b16 %v1205
    %v3026 = vunpack.c.h.b16 %v1205
    %v3027 = vunpack.c.l.b16 %v1206
    %v3028 = vunpack.c.h.b16 %v1206
    %v3029 = vunpack.c.l.b16 %v1207
    %v3030 = vunpack.c.h.b16 %v1207
    %v3031 = vunpack.c.l.b16 %v1208
    %v3032 = vunpack.c.h.b16 %v1208
    %v3033 = vunpack.c.l.b16 %v1209
    %v3034 = vunpack.c.h.b16 %v1209
    %v3035 = vunpack.c.l.b16 %v1210
    %v3036 = vunpack.c.h.b16 %v1210
    %v3037 = vunpack.c.l.b16 %v1211
    %v3038 = vunpack.c.h.b16 %v1211
    %v3039 = vunpack.c.l.b16 %v1212
    %v3040 = vunpack.c.h.b16 %v1212
    %v3041 = vunpack.c.l.b16 %v1213
    %v3042 = vunpack.c.h.b16 %v1213
    %v3043 = vunpack.c.l.b16 %v1214
    %v3044 = vunpack.c.h.b16 %v1214
    %v3045 = vunpack.c.l.b16 %v1215
    %v3046 = vunpack.c.h.b16 %v1215
    %v3047 = vunpack.c.l.b16 %v1216
    %v3048 = vunpack.c.h.b16 %v1216
    %v3049 = vunpack.c.l.b16 %v1217
    %v3050 = vunpack.c.h.b16 %v1217
    %v3051 = vunpack.c.l.b16 %v1218
    %v3052 = vunpack.c.h.b16 %v1218
    %v3053 = vunpack.c.l.b16 %v1219
    %v3054 = vunpack.c.h.b16 %v1219
    %v3055 = vunpack.c.l.b16 %v1220
    %v3056 = vunpack.c.h.b16 %v1220
    %v3057 = vunpack.c.l.b16 %v1221
    %v3058 = vunpack.c.h.b16 %v1221
    %v3059 = vunpack.c.l.b16 %v1222
    %v3060 = vunpack.c.h.b16 %v1222
    %v3061 = vunpack.c.l.b16 %v1223
    %v3062 = vunpack.c.h.b16 %v1223
    %v3063 = vunpack.c.l.b16 %v1224
    %v3064 = vunpack.c.h.b16 %v1224
    %v3065 = vunpack.c.l.b16 %v1225
    %v3066 = vunpack.c.h.b16 %v1225
    %v3067 = vunpack.c.l.b16 %v1226
    %v3068 = vunpack.c.h.b16 %v1226
    %v3069 = vpack.c.b16 %v1877, %v1869
    %v3070 = vpack.c.b16 %v1878, %v1870
    %v3071 = vpack.c.b16 %v1879, %v1871
    %v3072 = vpack.c.b16 %v1880, %v1872
    %v3073 = vpack.c.b16 %v1881, %v1873
    %v3074 = vpack.c.b16 %v1882, %v1874
    %v3075 = vpack.c.b16 %v1883, %v1875
    %v3076 = vpack.c.b16 %v1884, %v1876
    %v3077 = vpack.c.b16 %v1893, %v1885
    %v3078 = vpack.c.b16 %v1894, %v1886
    %v3079 = vpack.c.b16 %v1895, %v1887
    %v3080 = vpack.c.b16 %v1896, %v1888
    %v3081 = vpack.c.b16 %v1897, %v1889
    %v3082 = vpack.c.b16 %v1898, %v1890
    %v3083 = vpack.c.b16 %v1899, %v1891
    %v3084 = vpack.c.b16 %v1900, %v1892
    %v3085 = vpack.c.b16 %v1909, %v1901
    %v3086 = vpack.c.b16 %v1910, %v1902
    %v3087 = vpack.c.b16 %v1911, %v1903
    %v3088 = vpack.c.b16 %v1912, %v1904
    %v3089 = vpack.c.b16 %v1913, %v1905
    %v3090 = vpack.c.b16 %v1914, %v1906
    %v3091 = vpack.c.b16 %v1915, %v1907
    %v3092 = vpack.c.b16 %v1916, %v1908
    %v3093 = vpack.c.b16 %v1925, %v1917
    %v3094 = vpack.c.b16 %v1926, %v1918
    %v3095 = vpack.c.b16 %v1927, %v1919
    %v3096 = vpack.c.b16 %v1928, %v1920
    %v3097 = vpack.c.b16 %v1929, %v1921
    %v3098 = vpack.c.b16 %v1930, %v1922
    %v3099 = vpack.c.b16 %v1931, %v1923
    %v3100 = vpack.c.b16 %v1932, %v1924
    %v3101 = vpack.c.b16 %v1941, %v1933
    %v3102 = vpack.c.b16 %v1942, %v1934
    %v3103 = vpack.c.b16 %v1943, %v1935
    %v3104 = vpack.c.b16 %v1944, %v1936
    %v3105 = vpack.c.b16 %v1945, %v1937
    %v3106 = vpack.c.b16 %v1946, %v1938
    %v3107 = vpack.c.b16 %v1947, %v1939
    %v3108 = vpack.c.b16 %v1948, %v1940
    %v3109 = vpack.c.b16 %v1957, %v1949
    %v3110 = vpack.c.b16 %v1958, %v1950
    %v3111 = vpack.c.b16 %v1959, %v1951
    %v3112 = vpack.c.b16 %v1960, %v1952
    %v3113 = vpack.c.b16 %v1961, %v1953
    %v3114 = vpack.c.b16 %v1962, %v1954
    %v3115 = vpack.c.b16 %v1963, %v1955
    %v3116 = vpack.c.b16 %v1964, %v1956
    %v3117 = vpack.c.b16 %v1973, %v1965
    %v3118 = vpack.c.b16 %v1974, %v1966
    %v3119 = vpack.c.b16 %v1975, %v1967
    %v3120 = vpack.c.b16 %v1976, %v1968
    %v3121 = vpack.c.b16 %v1977, %v1969
    %v3122 = vpack.c.b16 %v1978, %v1970
    %v3123 = vpack.c.b16 %v1979, %v1971
    %v3124 = vpack.c.b16 %v1980, %v1972
    %v3125 = vpack.c.b16 %v1989, %v1981
    %v3126 = vpack.c.b16 %v1990, %v1982
    %v3127 = vpack.c.b16 %v1991, %v1983
    %v3128 = vpack.c.b16 %v1992, %v1984
    %v3129 = vpack.c.b16 %v1993, %v1985
    %v3130 = vpack.c.b16 %v1994, %v1986
    %v3131 = vpack.c.b16 %v1995, %v1987
    %v3132 = vpack.c.b16 %v1996, %v1988
    %v3133 = vpack.c.b16 %v2005, %v1997
    %v3134 = vpack.c.b16 %v2006, %v1998
    %v3135 = vpack.c.b16 %v2007, %v1999
    %v3136 = vpack.c.b16 %v2008, %v2000
    %v3137 = vpack.c.b16 %v2009, %v2001
    %v3138 = vpack.c.b16 %v2010, %v2002
    %v3139 = vpack.c.b16 %v2011, %v2003
    %v3140 = vpack.c.b16 %v2012, %v2004
    %v3141 = vpack.c.b16 %v2021, %v2013
    %v3142 = vpack.c.b16 %v2022, %v2014
    %v3143 = vpack.c.b16 %v2023, %v2015
    %v3144 = vpack.c.b16 %v2024, %v2016
    %v3145 = vpack.c.b16 %v2025, %v2017
    %v3146 = vpack.c.b16 %v2026, %v2018
    %v3147 = vpack.c.b16 %v2027, %v2019
    %v3148 = vpack.c.b16 %v2028, %v2020
    %v3149 = vpack.c.b16 %v2037, %v2029
    %v3150 = vpack.c.b16 %v2038, %v2030
    %v3151 = vpack.c.b16 %v2039, %v2031
    %v3152 = vpack.c.b16 %v2040, %v2032
    %v3153 = vpack.c.b16 %v2041, %v2033
    %v3154 = vpack.c.b16 %v2042, %v2034
    %v3155 = vpack.c.b16 %v2043, %v2035
    %v3156 = vpack.c.b16 %v2044, %v2036
    %v3157 = vpack.c.b16 %v2053, %v2045
    %v3158 = vpack.c.b16 %v2054, %v2046
    %v3159 = vpack.c.b16 %v2055, %v2047
    %v3160 = vpack.c.b16 %v2056, %v2048
    %v3161 = vpack.c.b16 %v2057, %v2049
    %v3162 = vpack.c.b16 %v2058, %v2050
    %v3163 = vpack.c.b16 %v2059, %v2051
    %v3164 = vpack.c.b16 %v2060, %v2052
    %v3165 = vpack.c.b16 %v2069, %v2061
    %v3166 = vpack.c.b16 %v2070, %v2062
    %v3167 = vpack.c.b16 %v2071, %v2063
    %v3168 = vpack.c.b16 %v2072, %v2064
    %v3169 = vpack.c.b16 %v2073, %v2065
    %v3170 = vpack.c.b16 %v2074, %v2066
    %v3171 = vpack.c.b16 %v2075, %v2067
    %v3172 = vpack.c.b16 %v2076, %v2068
    %v3173 = vpack.c.b16 %v2085, %v2077
    %v3174 = vpack.c.b16 %v2086, %v2078
    %v3175 = vpack.c.b16 %v2087, %v2079
    %v3176 = vpack.c.b16 %v2088, %v2080
    %v3177 = vpack.c.b16 %v2089, %v2081
    %v3178 = vpack.c.b16 %v2090, %v2082
    %v3179 = vpack.c.b16 %v2091, %v2083
    %v3180 = vpack.c.b16 %v2092, %v2084
    %v3181 = vpack.c.b16 %v2101, %v2093
    %v3182 = vpack.c.b16 %v2102, %v2094
    %v3183 = vpack.c.b16 %v2103, %v2095
    %v3184 = vpack.c.b16 %v2104, %v2096
    %v3185 = vpack.c.b16 %v2105, %v2097
    %v3186 = vpack.c.b16 %v2106, %v2098
    %v3187 = vpack.c.b16 %v2107, %v2099
    %v3188 = vpack.c.b16 %v2108, %v2100
    %v3189 = vpack.c.b16 %v2117, %v2109
    %v3190 = vpack.c.b16 %v2118, %v2110
    %v3191 = vpack.c.b16 %v2119, %v2111
    %v3192 = vpack.c.b16 %v2120, %v2112
    %v3193 = vpack.c.b16 %v2121, %v2113
    %v3194 = vpack.c.b16 %v2122, %v2114
    %v3195 = vpack.c.b16 %v2123, %v2115
    %v3196 = vpack.c.b16 %v2124, %v2116
    %v3197 = vpack.c.b16 %v2133, %v2125
    %v3198 = vpack.c.b16 %v2134, %v2126
    %v3199 = vpack.c.b16 %v2135, %v2127
    %v3200 = vpack.c.b16 %v2136, %v2128
    %v3201 = vpack.c.b16 %v2137, %v2129
    %v3202 = vpack.c.b16 %v2138, %v2130
    %v3203 = vpack.c.b16 %v2139, %v2131
    %v3204 = vpack.c.b16 %v2140, %v2132
    %v3205 = vpack.c.b16 %v2149, %v2141
    %v3206 = vpack.c.b16 %v2150, %v2142
    %v3207 = vpack.c.b16 %v2151, %v2143
    %v3208 = vpack.c.b16 %v2152, %v2144
    %v3209 = vpack.c.b16 %v2153, %v2145
    %v3210 = vpack.c.b16 %v2154, %v2146
    %v3211 = vpack.c.b16 %v2155, %v2147
    %v3212 = vpack.c.b16 %v2156, %v2148
    %v3213 = vpack.c.b16 %v2165, %v2157
    %v3214 = vpack.c.b16 %v2166, %v2158
    %v3215 = vpack.c.b16 %v2167, %v2159
    %v3216 = vpack.c.b16 %v2168, %v2160
    %v3217 = vpack.c.b16 %v2169, %v2161
    %v3218 = vpack.c.b16 %v2170, %v2162
    %v3219 = vpack.c.b16 %v2171, %v2163
    %v3220 = vpack.c.b16 %v2172, %v2164
    %v3221 = vpack.c.b16 %v2181, %v2173
    %v3222 = vpack.c.b16 %v2182, %v2174
    %v3223 = vpack.c.b16 %v2183, %v2175
    %v3224 = vpack.c.b16 %v2184, %v2176
    %v3225 = vpack.c.b16 %v2185, %v2177
    %v3226 = vpack.c.b16 %v2186, %v2178
    %v3227 = vpack.c.b16 %v2187, %v2179
    %v3228 = vpack.c.b16 %v2188, %v2180
    %v3229 = vpack.c.b16 %v2197, %v2189
    %v3230 = vpack.c.b16 %v2198, %v2190
    %v3231 = vpack.c.b16 %v2199, %v2191
    %v3232 = vpack.c.b16 %v2200, %v2192
    %v3233 = vpack.c.b16 %v2201, %v2193
    %v3234 = vpack.c.b16 %v2202, %v2194
    %v3235 = vpack.c.b16 %v2203, %v2195
    %v3236 = vpack.c.b16 %v2204, %v2196
    %v3237 = vpack.c.b16 %v2213, %v2205
    %v3238 = vpack.c.b16 %v2214, %v2206
    %v3239 = vpack.c.b16 %v2215, %v2207
    %v3240 = vpack.c.b16 %v2216, %v2208
    %v3241 = vpack.c.b16 %v2217, %v2209
    %v3242 = vpack.c.b16 %v2218, %v2210
    %v3243 = vpack.c.b16 %v2219, %v2211
    %v3244 = vpack.c.b16 %v2220, %v2212
    %v3245 = vpack.c.b16 %v2229, %v2221
    %v3246 = vpack.c.b16 %v2230, %v2222
    %v3247 = vpack.c.b16 %v2231, %v2223
    %v3248 = vpack.c.b16 %v2232, %v2224
    %v3249 = vpack.c.b16 %v2233, %v2225
    %v3250 = vpack.c.b16 %v2234, %v2226
    %v3251 = vpack.c.b16 %v2235, %v2227
    %v3252 = vpack.c.b16 %v2236, %v2228
    %v3253 = vpack.c.b16 %v2245, %v2237
    %v3254 = vpack.c.b16 %v2246, %v2238
    %v3255 = vpack.c.b16 %v2247, %v2239
    %v3256 = vpack.c.b16 %v2248, %v2240
    %v3257 = vpack.c.b16 %v2249, %v2241
    %v3258 = vpack.c.b16 %v2250, %v2242
    %v3259 = vpack.c.b16 %v2251, %v2243
    %v3260 = vpack.c.b16 %v2252, %v2244
    %v3261 = vpack.c.b16 %v2261, %v2253
    %v3262 = vpack.c.b16 %v2262, %v2254
    %v3263 = vpack.c.b16 %v2263, %v2255
    %v3264 = vpack.c.b16 %v2264, %v2256
    %v3265 = vpack.c.b16 %v2265, %v2257
    %v3266 = vpack.c.b16 %v2266, %v2258
    %v3267 = vpack.c.b16 %v2267, %v2259
    %v3268 = vpack.c.b16 %v2268, %v2260
    %v3269 = vpack.c.b16 %v2277, %v2269
    %v3270 = vpack.c.b16 %v2278, %v2270
    %v3271 = vpack.c.b16 %v2279, %v2271
    %v3272 = vpack.c.b16 %v2280, %v2272
    %v3273 = vpack.c.b16 %v2281, %v2273
    %v3274 = vpack.c.b16 %v2282, %v2274
    %v3275 = vpack.c.b16 %v2283, %v2275
    %v3276 = vpack.c.b16 %v2284, %v2276
    %v3277 = vpack.c.b16 %v2293, %v2285
    %v3278 = vpack.c.b16 %v2294, %v2286
    %v3279 = vpack.c.b16 %v2295, %v2287
    %v3280 = vpack.c.b16 %v2296, %v2288
    %v3281 = vpack.c.b16 %v2297, %v2289
    %v3282 = vpack.c.b16 %v2298, %v2290
    %v3283 = vpack.c.b16 %v2299, %v2291
    %v3284 = vpack.c.b16 %v2300, %v2292
    %v3285 = vpack.c.b16 %v2309, %v2301
    %v3286 = vpack.c.b16 %v2310, %v2302
    %v3287 = vpack.c.b16 %v2311, %v2303
    %v3288 = vpack.c.b16 %v2312, %v2304
    %v3289 = vpack.c.b16 %v2313, %v2305
    %v3290 = vpack.c.b16 %v2314, %v2306
    %v3291 = vpack.c.b16 %v2315, %v2307
    %v3292 = vpack.c.b16 %v2316, %v2308
    %v3293 = vpack.c.b16 %v2325, %v2317
    %v3294 = vpack.c.b16 %v2326, %v2318
    %v3295 = vpack.c.b16 %v2327, %v2319
    %v3296 = vpack.c.b16 %v2328, %v2320
    %v3297 = vpack.c.b16 %v2329, %v2321
    %v3298 = vpack.c.b16 %v2330, %v2322
    %v3299 = vpack.c.b16 %v2331, %v2323
    %v3300 = vpack.c.b16 %v2332, %v2324
    %v3301 = vpack.c.b16 %v2341, %v2333
    %v3302 = vpack.c.b16 %v2342, %v2334
    %v3303 = vpack.c.b16 %v2343, %v2335
    %v3304 = vpack.c.b16 %v2344, %v2336
    %v3305 = vpack.c.b16 %v2345, %v2337
    %v3306 = vpack.c.b16 %v2346, %v2338
    %v3307 = vpack.c.b16 %v2347, %v2339
    %v3308 = vpack.c.b16 %v2348, %v2340
    %v3309 = vpack.c.b16 %v2357, %v2349
    %v3310 = vpack.c.b16 %v2358, %v2350
    %v3311 = vpack.c.b16 %v2359, %v2351
    %v3312 = vpack.c.b16 %v2360, %v2352
    %v3313 = vpack.c.b16 %v2361, %v2353
    %v3314 = vpack.c.b16 %v2362, %v2354
    %v3315 = vpack.c.b16 %v2363, %v2355
    %v3316 = vpack.c.b16 %v2364, %v2356
    %v3317 = vpack.c.b16 %v2373, %v2365
    %v3318 = vpack.c.b16 %v2374, %v2366
    %v3319 = vpack.c.b16 %v2375, %v2367
    %v3320 = vpack.c.b16 %v2376, %v2368
    %v3321 = vpack.c.b16 %v2377, %v2369
    %v3322 = vpack.c.b16 %v2378, %v2370
    %v3323 = vpack.c.b16 %v2379, %v2371
    %v3324 = vpack.c.b16 %v2380, %v2372
    %v3325 = vpack.c.b16 %v2389, %v2381
    %v3326 = vpack.c.b16 %v2390, %v2382
    %v3327 = vpack.c.b16 %v2391, %v2383
    %v3328 = vpack.c.b16 %v2392, %v2384
    %v3329 = vpack.c.b16 %v2393, %v2385
    %v3330 = vpack.c.b16 %v2394, %v2386
    %v3331 = vpack.c.b16 %v2395, %v2387
    %v3332 = vpack.c.b16 %v2396, %v2388
    %v3333 = vpack.c.b16 %v2405, %v2397
    %v3334 = vpack.c.b16 %v2406, %v2398
    %v3335 = vpack.c.b16 %v2407, %v2399
    %v3336 = vpack.c.b16 %v2408, %v2400
    %v3337 = vpack.c.b16 %v2409, %v2401
    %v3338 = vpack.c.b16 %v2410, %v2402
    %v3339 = vpack.c.b16 %v2411, %v2403
    %v3340 = vpack.c.b16 %v2412, %v2404
    %v3341 = vpack.c.b16 %v2421, %v2413
    %v3342 = vpack.c.b16 %v2422, %v2414
    %v3343 = vpack.c.b16 %v2423, %v2415
    %v3344 = vpack.c.b16 %v2424, %v2416
    %v3345 = vpack.c.b16 %v2425, %v2417
    %v3346 = vpack.c.b16 %v2426, %v2418
    %v3347 = vpack.c.b16 %v2427, %v2419
    %v3348 = vpack.c.b16 %v2428, %v2420
    %v3349 = vpack.c.b16 %v2437, %v2429
    %v3350 = vpack.c.b16 %v2438, %v2430
    %v3351 = vpack.c.b16 %v2439, %v2431
    %v3352 = vpack.c.b16 %v2440, %v2432
    %v3353 = vpack.c.b16 %v2441, %v2433
    %v3354 = vpack.c.b16 %v2442, %v2434
    %v3355 = vpack.c.b16 %v2443, %v2435
    %v3356 = vpack.c.b16 %v2444, %v2436
    %v3357 = vpack.c.b16 %v2453, %v2445
    %v3358 = vpack.c.b16 %v2454, %v2446
    %v3359 = vpack.c.b16 %v2455, %v2447
    %v3360 = vpack.c.b16 %v2456, %v2448
    %v3361 = vpack.c.b16 %v2457, %v2449
    %v3362 = vpack.c.b16 %v2458, %v2450
    %v3363 = vpack.c.b16 %v2459, %v2451
    %v3364 = vpack.c.b16 %v2460, %v2452
    %v3365 = vpack.c.b16 %v2469, %v2461
    %v3366 = vpack.c.b16 %v2470, %v2462
    %v3367 = vpack.c.b16 %v2471, %v2463
    %v3368 = vpack.c.b16 %v2472, %v2464
    %v3369 = vpack.c.b16 %v2473, %v2465
    %v3370 = vpack.c.b16 %v2474, %v2466
    %v3371 = vpack.c.b16 %v2475, %v2467
    %v3372 = vpack.c.b16 %v2476, %v2468
    %v3373 = vpack.c.b16 %v2485, %v2477
    %v3374 = vpack.c.b16 %v2486, %v2478
    %v3375 = vpack.c.b16 %v2487, %v2479
    %v3376 = vpack.c.b16 %v2488, %v2480
    %v3377 = vpack.c.b16 %v2489, %v2481
    %v3378 = vpack.c.b16 %v2490, %v2482
    %v3379 = vpack.c.b16 %v2491, %v2483
    %v3380 = vpack.c.b16 %v2492, %v2484
    %v3381 = vpack.c.b16 %v2501, %v2493
    %v3382 = vpack.c.b16 %v2502, %v2494
    %v3383 = vpack.c.b16 %v2503, %v2495
    %v3384 = vpack.c.b16 %v2504, %v2496
    %v3385 = vpack.c.b16 %v2505, %v2497
    %v3386 = vpack.c.b16 %v2506, %v2498
    %v3387 = vpack.c.b16 %v2507, %v2499
    %v3388 = vpack.c.b16 %v2508, %v2500
    %v3389 = vpack.c.b16 %v2517, %v2509
    %v3390 = vpack.c.b16 %v2518, %v2510
    %v3391 = vpack.c.b16 %v2519, %v2511
    %v3392 = vpack.c.b16 %v2520, %v2512
    %v3393 = vpack.c.b16 %v2521, %v2513
    %v3394 = vpack.c.b16 %v2522, %v2514
    %v3395 = vpack.c.b16 %v2523, %v2515
    %v3396 = vpack.c.b16 %v2524, %v2516
    %v3397 = vpack.c.b16 %v2533, %v2525
    %v3398 = vpack.c.b16 %v2534, %v2526
    %v3399 = vpack.c.b16 %v2535, %v2527
    %v3400 = vpack.c.b16 %v2536, %v2528
    %v3401 = vpack.c.b16 %v2537, %v2529
    %v3402 = vpack.c.b16 %v2538, %v2530
    %v3403 = vpack.c.b16 %v2539, %v2531
    %v3404 = vpack.c.b16 %v2540, %v2532
    %v3405 = vpack.c.b16 %v2549, %v2541
    %v3406 = vpack.c.b16 %v2550, %v2542
    %v3407 = vpack.c.b16 %v2551, %v2543
    %v3408 = vpack.c.b16 %v2552, %v2544
    %v3409 = vpack.c.b16 %v2553, %v2545
    %v3410 = vpack.c.b16 %v2554, %v2546
    %v3411 = vpack.c.b16 %v2555, %v2547
    %v3412 = vpack.c.b16 %v2556, %v2548
    %v3413 = vpack.c.b16 %v2565, %v2557
    %v3414 = vpack.c.b16 %v2566, %v2558
    %v3415 = vpack.c.b16 %v2567, %v2559
    %v3416 = vpack.c.b16 %v2568, %v2560
    %v3417 = vpack.c.b16 %v2569, %v2561
    %v3418 = vpack.c.b16 %v2570, %v2562
    %v3419 = vpack.c.b16 %v2571, %v2563
    %v3420 = vpack.c.b16 %v2572, %v2564
    %v3421 = vpack.c.b16 %v2581, %v2573
    %v3422 = vpack.c.b16 %v2582, %v2574
    %v3423 = vpack.c.b16 %v2583, %v2575
    %v3424 = vpack.c.b16 %v2584, %v2576
    %v3425 = vpack.c.b16 %v2585, %v2577
    %v3426 = vpack.c.b16 %v2586, %v2578
    %v3427 = vpack.c.b16 %v2587, %v2579
    %v3428 = vpack.c.b16 %v2588, %v2580
    %v3429 = vpack.c.b16 %v2597, %v2589
    %v3430 = vpack.c.b16 %v2598, %v2590
    %v3431 = vpack.c.b16 %v2599, %v2591
    %v3432 = vpack.c.b16 %v2600, %v2592
    %v3433 = vpack.c.b16 %v2601, %v2593
    %v3434 = vpack.c.b16 %v2602, %v2594
    %v3435 = vpack.c.b16 %v2603, %v2595
    %v3436 = vpack.c.b16 %v2604, %v2596
    %v3437 = vpack.c.b16 %v2613, %v2605
    %v3438 = vpack.c.b16 %v2614, %v2606
    %v3439 = vpack.c.b16 %v2615, %v2607
    %v3440 = vpack.c.b16 %v2616, %v2608
    %v3441 = vpack.c.b16 %v2617, %v2609
    %v3442 = vpack.c.b16 %v2618, %v2610
    %v3443 = vpack.c.b16 %v2619, %v2611
    %v3444 = vpack.c.b16 %v2620, %v2612
    %v3445 = vpack.c.b16 %v2629, %v2621
    %v3446 = vpack.c.b16 %v2630, %v2622
    %v3447 = vpack.c.b16 %v2631, %v2623
    %v3448 = vpack.c.b16 %v2632, %v2624
    %v3449 = vpack.c.b16 %v2633, %v2625
    %v3450 = vpack.c.b16 %v2634, %v2626
    %v3451 = vpack.c.b16 %v2635, %v2627
    %v3452 = vpack.c.b16 %v2636, %v2628
    %v3453 = vpack.c.b16 %v2645, %v2637
    %v3454 = vpack.c.b16 %v2646, %v2638
    %v3455 = vpack.c.b16 %v2647, %v2639
    %v3456 = vpack.c.b16 %v2648, %v2640
    %v3457 = vpack.c.b16 %v2649, %v2641
    %v3458 = vpack.c.b16 %v2650, %v2642
    %v3459 = vpack.c.b16 %v2651, %v2643
    %v3460 = vpack.c.b16 %v2652, %v2644
    %v3461 = vpack.c.b16 %v2661, %v2653
    %v3462 = vpack.c.b16 %v2662, %v2654
    %v3463 = vpack.c.b16 %v2663, %v2655
    %v3464 = vpack.c.b16 %v2664, %v2656
    %v3465 = vpack.c.b16 %v2665, %v2657
    %v3466 = vpack.c.b16 %v2666, %v2658
    %v3467 = vpack.c.b16 %v2667, %v2659
    %v3468 = vpack.c.b16 %v2668, %v2660
    %v3469 = vpack.c.b16 %v2677, %v2669
    %v3470 = vpack.c.b16 %v2678, %v2670
    %v3471 = vpack.c.b16 %v2679, %v2671
    %v3472 = vpack.c.b16 %v2680, %v2672
    %v3473 = vpack.c.b16 %v2681, %v2673
    %v3474 = vpack.c.b16 %v2682, %v2674
    %v3475 = vpack.c.b16 %v2683, %v2675
    %v3476 = vpack.c.b16 %v2684, %v2676
    %v3477 = vpack.c.b16 %v2693, %v2685
    %v3478 = vpack.c.b16 %v2694, %v2686
    %v3479 = vpack.c.b16 %v2695, %v2687
    %v3480 = vpack.c.b16 %v2696, %v2688
    %v3481 = vpack.c.b16 %v2697, %v2689
    %v3482 = vpack.c.b16 %v2698, %v2690
    %v3483 = vpack.c.b16 %v2699, %v2691
    %v3484 = vpack.c.b16 %v2700, %v2692
    %v3485 = vpack.c.b16 %v2709, %v2701
    %v3486 = vpack.c.b16 %v2710, %v2702
    %v3487 = vpack.c.b16 %v2711, %v2703
    %v3488 = vpack.c.b16 %v2712, %v2704
    %v3489 = vpack.c.b16 %v2713, %v2705
    %v3490 = vpack.c.b16 %v2714, %v2706
    %v3491 = vpack.c.b16 %v2715, %v2707
    %v3492 = vpack.c.b16 %v2716, %v2708
    %v3493 = vpack.c.b16 %v2725, %v2717
    %v3494 = vpack.c.b16 %v2726, %v2718
    %v3495 = vpack.c.b16 %v2727, %v2719
    %v3496 = vpack.c.b16 %v2728, %v2720
    %v3497 = vpack.c.b16 %v2729, %v2721
    %v3498 = vpack.c.b16 %v2730, %v2722
    %v3499 = vpack.c.b16 %v2731, %v2723
    %v3500 = vpack.c.b16 %v2732, %v2724
    %v3501 = vpack.c.b16 %v2741, %v2733
    %v3502 = vpack.c.b16 %v2742, %v2734
    %v3503 = vpack.c.b16 %v2743, %v2735
    %v3504 = vpack.c.b16 %v2744, %v2736
    %v3505 = vpack.c.b16 %v2745, %v2737
    %v3506 = vpack.c.b16 %v2746, %v2738
    %v3507 = vpack.c.b16 %v2747, %v2739
    %v3508 = vpack.c.b16 %v2748, %v2740
    %v3509 = vpack.c.b16 %v2757, %v2749
    %v3510 = vpack.c.b16 %v2758, %v2750
    %v3511 = vpack.c.b16 %v2759, %v2751
    %v3512 = vpack.c.b16 %v2760, %v2752
    %v3513 = vpack.c.b16 %v2761, %v2753
    %v3514 = vpack.c.b16 %v2762, %v2754
    %v3515 = vpack.c.b16 %v2763, %v2755
    %v3516 = vpack.c.b16 %v2764, %v2756
    %v3517 = vpack.c.b16 %v2773, %v2765
    %v3518 = vpack.c.b16 %v2774, %v2766
    %v3519 = vpack.c.b16 %v2775, %v2767
    %v3520 = vpack.c.b16 %v2776, %v2768
    %v3521 = vpack.c.b16 %v2777, %v2769
    %v3522 = vpack.c.b16 %v2778, %v2770
    %v3523 = vpack.c.b16 %v2779, %v2771
    %v3524 = vpack.c.b16 %v2780, %v2772
    %v3525 = vpack.c.b16 %v2789, %v2781
    %v3526 = vpack.c.b16 %v2790, %v2782
    %v3527 = vpack.c.b16 %v2791, %v2783
    %v3528 = vpack.c.b16 %v2792, %v2784
    %v3529 = vpack.c.b16 %v2793, %v2785
    %v3530 = vpack.c.b16 %v2794, %v2786
    %v3531 = vpack.c.b16 %v2795, %v2787
    %v3532 = vpack.c.b16 %v2796, %v2788
    %v3533 = vpack.c.b16 %v2805, %v2797
    %v3534 = vpack.c.b16 %v2806, %v2798
    %v3535 = vpack.c.b16 %v2807, %v2799
    %v3536 = vpack.c.b16 %v2808, %v2800
    %v3537 = vpack.c.b16 %v2809, %v2801
    %v3538 = vpack.c.b16 %v2810, %v2802
    %v3539 = vpack.c.b16 %v2811, %v2803
    %v3540 = vpack.c.b16 %v2812, %v2804
    %v3541 = vpack.c.b16 %v2821, %v2813
    %v3542 = vpack.c.b16 %v2822, %v2814
    %v3543 = vpack.c.b16 %v2823, %v2815
    %v3544 = vpack.c.b16 %v2824, %v2816
    %v3545 = vpack.c.b16 %v2825, %v2817
    %v3546 = vpack.c.b16 %v2826, %v2818
    %v3547 = vpack.c.b16 %v2827, %v2819
    %v3548 = vpack.c.b16 %v2828, %v2820
    %v3549 = vpack.c.b16 %v2837, %v2829
    %v3550 = vpack.c.b16 %v2838, %v2830
    %v3551 = vpack.c.b16 %v2839, %v2831
    %v3552 = vpack.c.b16 %v2840, %v2832
    %v3553 = vpack.c.b16 %v2841, %v2833
    %v3554 = vpack.c.b16 %v2842, %v2834
    %v3555 = vpack.c.b16 %v2843, %v2835
    %v3556 = vpack.c.b16 %v2844, %v2836
    %v3557 = vpack.c.b16 %v2853, %v2845
    %v3558 = vpack.c.b16 %v2854, %v2846
    %v3559 = vpack.c.b16 %v2855, %v2847
    %v3560 = vpack.c.b16 %v2856, %v2848
    %v3561 = vpack.c.b16 %v2857, %v2849
    %v3562 = vpack.c.b16 %v2858, %v2850
    %v3563 = vpack.c.b16 %v2859, %v2851
    %v3564 = vpack.c.b16 %v2860, %v2852
    %v3565 = vpack.c.b16 %v2869, %v2861
    %v3566 = vpack.c.b16 %v2870, %v2862
    %v3567 = vpack.c.b16 %v2871, %v2863
    %v3568 = vpack.c.b16 %v2872, %v2864
    %v3569 = vpack.c.b16 %v2873, %v2865
    %v3570 = vpack.c.b16 %v2874, %v2866
    %v3571 = vpack.c.b16 %v2875, %v2867
    %v3572 = vpack.c.b16 %v2876, %v2868
    %v3573 = vpack.c.b16 %v2885, %v2877
    %v3574 = vpack.c.b16 %v2886, %v2878
    %v3575 = vpack.c.b16 %v2887, %v2879
    %v3576 = vpack.c.b16 %v2888, %v2880
    %v3577 = vpack.c.b16 %v2889, %v2881
    %v3578 = vpack.c.b16 %v2890, %v2882
    %v3579 = vpack.c.b16 %v2891, %v2883
    %v3580 = vpack.c.b16 %v2892, %v2884
    %v3581 = vpack.c.b16 %v2901, %v2893
    %v3582 = vpack.c.b16 %v2902, %v2894
    %v3583 = vpack.c.b16 %v2903, %v2895
    %v3584 = vpack.c.b16 %v2904, %v2896
    %v3585 = vpack.c.b16 %v2905, %v2897
    %v3586 = vpack.c.b16 %v2906, %v2898
    %v3587 = vpack.c.b16 %v2907, %v2899
    %v3588 = vpack.c.b16 %v2908, %v2900
    %v3589 = vpack.c.b16 %v2917, %v2909
    %v3590 = vpack.c.b16 %v2918, %v2910
    %v3591 = vpack.c.b16 %v2919, %v2911
    %v3592 = vpack.c.b16 %v2920, %v2912
    %v3593 = vpack.c.b16 %v2921, %v2913
    %v3594 = vpack.c.b16 %v2922, %v2914
    %v3595 = vpack.c.b16 %v2923, %v2915
    %v3596 = vpack.c.b16 %v2924, %v2916
    %v3597 = vpack.c.b16 %v2933, %v2925
    %v3598 = vpack.c.b16 %v2934, %v2926
    %v3599 = vpack.c.b16 %v2935, %v2927
    %v3600 = vpack.c.b16 %v2936, %v2928
    %v3601 = vpack.c.b16 %v2937, %v2929
    %v3602 = vpack.c.b16 %v2938, %v2930
    %v3603 = vpack.c.b16 %v2939, %v2931
    %v3604 = vpack.c.b16 %v2940, %v2932
    %v3605 = vpack.c.b16 %v2949, %v2941
    %v3606 = vpack.c.b16 %v2950, %v2942
    %v3607 = vpack.c.b16 %v2951, %v2943
    %v3608 = vpack.c.b16 %v2952, %v2944
    %v3609 = vpack.c.b16 %v2953, %v2945
    %v3610 = vpack.c.b16 %v2954, %v2946
    %v3611 = vpack.c.b16 %v2955, %v2947
    %v3612 = vpack.c.b16 %v2956, %v2948
    %v3613 = vpack.c.b16 %v2965, %v2957
    %v3614 = vpack.c.b16 %v2966, %v2958
    %v3615 = vpack.c.b16 %v2967, %v2959
    %v3616 = vpack.c.b16 %v2968, %v2960
    %v3617 = vpack.c.b16 %v2969, %v2961
    %v3618 = vpack.c.b16 %v2970, %v2962
    %v3619 = vpack.c.b16 %v2971, %v2963
    %v3620 = vpack.c.b16 %v2972, %v2964
    %v3621 = vpack.c.b16 %v2981, %v2973
    %v3622 = vpack.c.b16 %v2982, %v2974
    %v3623 = vpack.c.b16 %v2983, %v2975
    %v3624 = vpack.c.b16 %v2984, %v2976
    %v3625 = vpack.c.b16 %v2985, %v2977
    %v3626 = vpack.c.b16 %v2986, %v2978
    %v3627 = vpack.c.b16 %v2987, %v2979
    %v3628 = vpack.c.b16 %v2988, %v2980
    %v3629 = vpack.c.b16 %v2997, %v2989
    %v3630 = vpack.c.b16 %v2998, %v2990
    %v3631 = vpack.c.b16 %v2999, %v2991
    %v3632 = vpack.c.b16 %v3000, %v2992
    %v3633 = vpack.c.b16 %v3001, %v2993
    %v3634 = vpack.c.b16 %v3002, %v2994
    %v3635 = vpack.c.b16 %v3003, %v2995
    %v3636 = vpack.c.b16 %v3004, %v2996
    %v3637 = vpack.c.b16 %v3013, %v3005
    %v3638 = vpack.c.b16 %v3014, %v3006
    %v3639 = vpack.c.b16 %v3015, %v3007
    %v3640 = vpack.c.b16 %v3016, %v3008
    %v3641 = vpack.c.b16 %v3017, %v3009
    %v3642 = vpack.c.b16 %v3018, %v3010
    %v3643 = vpack.c.b16 %v3019, %v3011
    %v3644 = vpack.c.b16 %v3020, %v3012
    %v3645 = vpack.c.b16 %v3029, %v3021
    %v3646 = vpack.c.b16 %v3030, %v3022
    %v3647 = vpack.c.b16 %v3031, %v3023
    %v3648 = vpack.c.b16 %v3032, %v3024
    %v3649 = vpack.c.b16 %v3033, %v3025
    %v3650 = vpack.c.b16 %v3034, %v3026
    %v3651 = vpack.c.b16 %v3035, %v3027
    %v3652 = vpack.c.b16 %v3036, %v3028
    %v3653 = vpack.c.b16 %v3045, %v3037
    %v3654 = vpack.c.b16 %v3046, %v3038
    %v3655 = vpack.c.b16 %v3047, %v3039
    %v3656 = vpack.c.b16 %v3048, %v3040
    %v3657 = vpack.c.b16 %v3049, %v3041
    %v3658 = vpack.c.b16 %v3050, %v3042
    %v3659 = vpack.c.b16 %v3051, %v3043
    %v3660 = vpack.c.b16 %v3052, %v3044
    %v3661 = vpack.c.b16 %v3061, %v3053
    %v3662 = vpack.c.b16 %v3062, %v3054
    %v3663 = vpack.c.b16 %v3063, %v3055
    %v3664 = vpack.c.b16 %v3064, %v3056
    %v3665 = vpack.c.b16 %v3065, %v3057
    %v3666 = vpack.c.b16 %v3066, %v3058
    %v3667 = vpack.c.b16 %v3067, %v3059
    %v3668 = vpack.c.b16 %v3068, %v3060
    %vm4269 = vcmask 392192
    %v4271 = vsel %vm4269, %v626, 0
    %4273 = vmatprep.subr.bf16.mxu0 %v3126
    %4274 = vmatpush1.bf16.msra.mxu0 %v3125
    %4275 = vmatprep.subr.bf16.mxu0 %v3118
    %4276 = vmatpush1.bf16.msra.mxu0 %v3117
    %4277 = vmatprep.subr.bf16.mxu0 %v3110
    %4278 = vmatpush1.bf16.msra.mxu0 %v3109
    %4279 = vmatprep.subr.bf16.mxu0 %v3102
    %4280 = vmatpush1.bf16.msra.mxu0 %v3101
    %4281 = vmatprep.subr.bf16.mxu0 %v3094
    %4282 = vmatpush1.bf16.msra.mxu0 %v3093
    %4283 = vmatprep.subr.bf16.mxu0 %v3086
    %4284 = vmatpush1.bf16.msra.mxu0 %v3085
    %4285 = vmatprep.subr.bf16.mxu0 %v3078
    %4286 = vmatpush1.bf16.msra.mxu0 %v3077
    %4287 = vmatprep.subr.bf16.mxu0 %v3070
    %4288 = vmatpush1.bf16.msra.mxu0 %v3069
    %4289 = vmatprep.subr.bf16.mxu0 %v3190
    %4290 = vmatpush2.bf16.msra.mxu0 %v3189
    %4291 = vmatprep.subr.bf16.mxu0 %v3182
    %4292 = vmatpush2.bf16.msra.mxu0 %v3181
    %4293 = vmatprep.subr.bf16.mxu0 %v3174
    %4294 = vmatpush2.bf16.msra.mxu0 %v3173
    %4295 = vmatprep.subr.bf16.mxu0 %v3166
    %4296 = vmatpush2.bf16.msra.mxu0 %v3165
    %4297 = vmatprep.subr.bf16.mxu0 %v3158
    %4298 = vmatpush2.bf16.msra.mxu0 %v3157
    %4299 = vmatprep.subr.bf16.mxu0 %v3150
    %4300 = vmatpush2.bf16.msra.mxu0 %v3149
    %4301 = vmatprep.subr.bf16.mxu0 %v3142
    %4302 = vmatpush2.bf16.msra.mxu0 %v3141
    %4303 = vmatprep.subr.bf16.mxu0 %v3134
    %4304 = vmatpush2.bf16.msra.mxu0 %v3133
    %4305 = vmatprep.mubr.bf16.mxu0 %v618
    %4306 = vmatmul.mubr.bf16.gmra.mxu0 %v617
    %v4307 = vpop.f32.mrf.mxu0
    %v4308 = vadd.f32 %v1232, %v4307
    %v4309 = vpop.f32.mrf.mxu0
    %v4310 = vadd.f32 %v1236, %v4309
    %v4311 = vpop.f32.mrf.mxu0
    %v4312 = vpop.f32.mrf.mxu0
    %4313 = vdwg.mxu0
    %4314 = vmatprep.subr.bf16.mxu0 %v3254
    %4315 = vmatpush1.bf16.msra.mxu0 %v3253
    %4316 = vmatprep.subr.bf16.mxu0 %v3246
    %4317 = vmatpush1.bf16.msra.mxu0 %v3245
    %4318 = vmatprep.subr.bf16.mxu0 %v3238
    %4319 = vmatpush1.bf16.msra.mxu0 %v3237
    %4320 = vmatprep.subr.bf16.mxu0 %v3230
    %4321 = vmatpush1.bf16.msra.mxu0 %v3229
    %4322 = vmatprep.subr.bf16.mxu0 %v3222
    %4323 = vmatpush1.bf16.msra.mxu0 %v3221
    %4324 = vmatprep.subr.bf16.mxu0 %v3214
    %4325 = vmatpush1.bf16.msra.mxu0 %v3213
    %4326 = vmatprep.subr.bf16.mxu0 %v3206
    %4327 = vmatpush1.bf16.msra.mxu0 %v3205
    %4328 = vmatprep.subr.bf16.mxu0 %v3198
    %4329 = vmatpush1.bf16.msra.mxu0 %v3197
    %4330 = vmatprep.subr.bf16.mxu0 %v3318
    %4331 = vmatpush2.bf16.msra.mxu0 %v3317
    %4332 = vmatprep.subr.bf16.mxu0 %v3310
    %4333 = vmatpush2.bf16.msra.mxu0 %v3309
    %4334 = vmatprep.subr.bf16.mxu0 %v3302
    %4335 = vmatpush2.bf16.msra.mxu0 %v3301
    %4336 = vmatprep.subr.bf16.mxu0 %v3294
    %4337 = vmatpush2.bf16.msra.mxu0 %v3293
    %4338 = vmatprep.subr.bf16.mxu0 %v3286
    %4339 = vmatpush2.bf16.msra.mxu0 %v3285
    %4340 = vmatprep.subr.bf16.mxu0 %v3278
    %4341 = vmatpush2.bf16.msra.mxu0 %v3277
    %4342 = vmatprep.subr.bf16.mxu0 %v3270
    %4343 = vmatpush2.bf16.msra.mxu0 %v3269
    %4344 = vmatprep.subr.bf16.mxu0 %v3262
    %4345 = vmatpush2.bf16.msra.mxu0 %v3261
    %4346 = vmatprep.mubr.bf16.mxu0 %v620
    %4347 = vmatmul.mubr.bf16.gmra.mxu0 %v619
    %v4348 = vpop.f32.mrf.mxu0
    %v4349 = vadd.f32 %v4308, %v4348
    %v4350 = vpop.f32.mrf.mxu0
    %v4351 = vadd.f32 %v4310, %v4350
    %v4352 = vpop.f32.mrf.mxu0
    %v4353 = vpop.f32.mrf.mxu0
    %4354 = vdwg.mxu0
    %4355 = vmatprep.subr.bf16.mxu0 %v3382
    %4356 = vmatpush1.bf16.msra.mxu0 %v3381
    %4357 = vmatprep.subr.bf16.mxu0 %v3374
    %4358 = vmatpush1.bf16.msra.mxu0 %v3373
    %4359 = vmatprep.subr.bf16.mxu0 %v3366
    %4360 = vmatpush1.bf16.msra.mxu0 %v3365
    %4361 = vmatprep.subr.bf16.mxu0 %v3358
    %4362 = vmatpush1.bf16.msra.mxu0 %v3357
    %4363 = vmatprep.subr.bf16.mxu0 %v3350
    %4364 = vmatpush1.bf16.msra.mxu0 %v3349
    %4365 = vmatprep.subr.bf16.mxu0 %v3342
    %4366 = vmatpush1.bf16.msra.mxu0 %v3341
    %4367 = vmatprep.subr.bf16.mxu0 %v3334
    %4368 = vmatpush1.bf16.msra.mxu0 %v3333
    %4369 = vmatprep.subr.bf16.mxu0 %v3326
    %4370 = vmatpush1.bf16.msra.mxu0 %v3325
    %4371 = vmatprep.subr.bf16.mxu0 %v3446
    %4372 = vmatpush2.bf16.msra.mxu0 %v3445
    %4373 = vmatprep.subr.bf16.mxu0 %v3438
    %4374 = vmatpush2.bf16.msra.mxu0 %v3437
    %4375 = vmatprep.subr.bf16.mxu0 %v3430
    %4376 = vmatpush2.bf16.msra.mxu0 %v3429
    %4377 = vmatprep.subr.bf16.mxu0 %v3422
    %4378 = vmatpush2.bf16.msra.mxu0 %v3421
    %4379 = vmatprep.subr.bf16.mxu0 %v3414
    %4380 = vmatpush2.bf16.msra.mxu0 %v3413
    %4381 = vmatprep.subr.bf16.mxu0 %v3406
    %4382 = vmatpush2.bf16.msra.mxu0 %v3405
    %4383 = vmatprep.subr.bf16.mxu0 %v3398
    %4384 = vmatpush2.bf16.msra.mxu0 %v3397
    %4385 = vmatprep.subr.bf16.mxu0 %v3390
    %4386 = vmatpush2.bf16.msra.mxu0 %v3389
    %4387 = vmatprep.mubr.bf16.mxu0 %v622
    %4388 = vmatmul.mubr.bf16.gmra.mxu0 %v621
    %v4389 = vpop.f32.mrf.mxu0
    %v4390 = vadd.f32 %v4349, %v4389
    %v4391 = vpop.f32.mrf.mxu0
    %v4392 = vadd.f32 %v4351, %v4391
    %v4393 = vpop.f32.mrf.mxu0
    %v4394 = vpop.f32.mrf.mxu0
    %4395 = vdwg.mxu0
    %4396 = vmatprep.subr.bf16.mxu0 %v3510
    %4397 = vmatpush1.bf16.msra.mxu0 %v3509
    %4398 = vmatprep.subr.bf16.mxu0 %v3502
    %4399 = vmatpush1.bf16.msra.mxu0 %v3501
    %4400 = vmatprep.subr.bf16.mxu0 %v3494
    %4401 = vmatpush1.bf16.msra.mxu0 %v3493
    %4402 = vmatprep.subr.bf16.mxu0 %v3486
    %4403 = vmatpush1.bf16.msra.mxu0 %v3485
    %4404 = vmatprep.subr.bf16.mxu0 %v3478
    %4405 = vmatpush1.bf16.msra.mxu0 %v3477
    %4406 = vmatprep.subr.bf16.mxu0 %v3470
    %4407 = vmatpush1.bf16.msra.mxu0 %v3469
    %4408 = vmatprep.subr.bf16.mxu0 %v3462
    %4409 = vmatpush1.bf16.msra.mxu0 %v3461
    %4410 = vmatprep.subr.bf16.mxu0 %v3454
    %4411 = vmatpush1.bf16.msra.mxu0 %v3453
    %4412 = vmatprep.subr.bf16.mxu0 %v3574
    %4413 = vmatpush2.bf16.msra.mxu0 %v3573
    %4414 = vmatprep.subr.bf16.mxu0 %v3566
    %4415 = vmatpush2.bf16.msra.mxu0 %v3565
    %4416 = vmatprep.subr.bf16.mxu0 %v3558
    %4417 = vmatpush2.bf16.msra.mxu0 %v3557
    %4418 = vmatprep.subr.bf16.mxu0 %v3550
    %4419 = vmatpush2.bf16.msra.mxu0 %v3549
    %4420 = vmatprep.subr.bf16.mxu0 %v3542
    %4421 = vmatpush2.bf16.msra.mxu0 %v3541
    %4422 = vmatprep.subr.bf16.mxu0 %v3534
    %4423 = vmatpush2.bf16.msra.mxu0 %v3533
    %4424 = vmatprep.subr.bf16.mxu0 %v3526
    %4425 = vmatpush2.bf16.msra.mxu0 %v3525
    %4426 = vmatprep.subr.bf16.mxu0 %v3518
    %4427 = vmatpush2.bf16.msra.mxu0 %v3517
    %4428 = vmatprep.mubr.bf16.mxu0 %v624
    %4429 = vmatmul.mubr.bf16.gmra.mxu0 %v623
    %v4430 = vpop.f32.mrf.mxu0
    %v4431 = vadd.f32 %v4390, %v4430
    %v4432 = vpop.f32.mrf.mxu0
    %v4433 = vadd.f32 %v4392, %v4432
    %v4434 = vpop.f32.mrf.mxu0
    %v4435 = vpop.f32.mrf.mxu0
    %4436 = vdwg.mxu0
    %4437 = vmatprep.subr.bf16.mxu0 %v3638
    %4438 = vmatpush1.bf16.msra.mxu0 %v3637
    %4439 = vmatprep.subr.bf16.mxu0 %v3630
    %4440 = vmatpush1.bf16.msra.mxu0 %v3629
    %4441 = vmatprep.subr.bf16.mxu0 %v3622
    %4442 = vmatpush1.bf16.msra.mxu0 %v3621
    %4443 = vmatprep.subr.bf16.mxu0 %v3614
    %4444 = vmatpush1.bf16.msra.mxu0 %v3613
    %4445 = vmatprep.subr.bf16.mxu0 %v3606
    %4446 = vmatpush1.bf16.msra.mxu0 %v3605
    %4447 = vmatprep.subr.bf16.mxu0 %v3598
    %4448 = vmatpush1.bf16.msra.mxu0 %v3597
    %4449 = vmatprep.subr.bf16.mxu0 %v3590
    %4450 = vmatpush1.bf16.msra.mxu0 %v3589
    %4451 = vmatprep.subr.bf16.mxu0 %v3582
    %4452 = vmatpush1.bf16.msra.mxu0 %v3581
    %4453 = vmatprep.subr.bf16.mxu0 0
    %4454 = vmatpush2.bf16.msra.mxu0 0
    %4455 = vmatprep.subr.bf16.mxu0 0
    %4456 = vmatpush2.bf16.msra.mxu0 0
    %4457 = vmatprep.subr.bf16.mxu0 0
    %4458 = vmatpush2.bf16.msra.mxu0 0
    %4459 = vmatprep.subr.bf16.mxu0 0
    %4460 = vmatpush2.bf16.msra.mxu0 0
    %4461 = vmatprep.subr.bf16.mxu0 0
    %4462 = vmatpush2.bf16.msra.mxu0 0
    %4463 = vmatprep.subr.bf16.mxu0 %v3662
    %4464 = vmatpush2.bf16.msra.mxu0 %v3661
    %4465 = vmatprep.subr.bf16.mxu0 %v3654
    %4466 = vmatpush2.bf16.msra.mxu0 %v3653
    %4467 = vmatprep.subr.bf16.mxu0 %v3646
    %4468 = vmatpush2.bf16.msra.mxu0 %v3645
    %4469 = vmatprep.mubr.bf16.mxu0 %v4271
    %4470 = vmatmul.mubr.bf16.gmra.mxu0 %v625
    %v4471 = vpop.f32.mrf.mxu0
    %v4472 = vadd.f32 %v4431, %v4471
    %v4473 = vpop.f32.mrf.mxu0
    %v4474 = vadd.f32 %v4433, %v4473
    %v4475 = vpop.f32.mrf.mxu0
    %v4476 = vpop.f32.mrf.mxu0
    %4477 = vdwg.mxu0
    %4478 = vmatprep.subr.bf16.mxu0 %v3128
    %4479 = vmatpush1.bf16.msra.mxu0 %v3127
    %4480 = vmatprep.subr.bf16.mxu0 %v3120
    %4481 = vmatpush1.bf16.msra.mxu0 %v3119
    %4482 = vmatprep.subr.bf16.mxu0 %v3112
    %4483 = vmatpush1.bf16.msra.mxu0 %v3111
    %4484 = vmatprep.subr.bf16.mxu0 %v3104
    %4485 = vmatpush1.bf16.msra.mxu0 %v3103
    %4486 = vmatprep.subr.bf16.mxu0 %v3096
    %4487 = vmatpush1.bf16.msra.mxu0 %v3095
    %4488 = vmatprep.subr.bf16.mxu0 %v3088
    %4489 = vmatpush1.bf16.msra.mxu0 %v3087
    %4490 = vmatprep.subr.bf16.mxu0 %v3080
    %4491 = vmatpush1.bf16.msra.mxu0 %v3079
    %4492 = vmatprep.subr.bf16.mxu0 %v3072
    %4493 = vmatpush1.bf16.msra.mxu0 %v3071
    %4494 = vmatprep.subr.bf16.mxu0 %v3192
    %4495 = vmatpush2.bf16.msra.mxu0 %v3191
    %4496 = vmatprep.subr.bf16.mxu0 %v3184
    %4497 = vmatpush2.bf16.msra.mxu0 %v3183
    %4498 = vmatprep.subr.bf16.mxu0 %v3176
    %4499 = vmatpush2.bf16.msra.mxu0 %v3175
    %4500 = vmatprep.subr.bf16.mxu0 %v3168
    %4501 = vmatpush2.bf16.msra.mxu0 %v3167
    %4502 = vmatprep.subr.bf16.mxu0 %v3160
    %4503 = vmatpush2.bf16.msra.mxu0 %v3159
    %4504 = vmatprep.subr.bf16.mxu0 %v3152
    %4505 = vmatpush2.bf16.msra.mxu0 %v3151
    %4506 = vmatprep.subr.bf16.mxu0 %v3144
    %4507 = vmatpush2.bf16.msra.mxu0 %v3143
    %4508 = vmatprep.subr.bf16.mxu0 %v3136
    %4509 = vmatpush2.bf16.msra.mxu0 %v3135
    %4510 = vmatprep.mubr.bf16.mxu0 %v618
    %4511 = vmatmul.mubr.bf16.gmra.mxu0 %v617
    %v4512 = vpop.f32.mrf.mxu0
    %v4513 = vadd.f32 %v1240, %v4512
    %v4514 = vpop.f32.mrf.mxu0
    %v4515 = vadd.f32 %v1244, %v4514
    %v4516 = vpop.f32.mrf.mxu0
    %v4517 = vpop.f32.mrf.mxu0
    %4518 = vdwg.mxu0
    %4519 = vmatprep.subr.bf16.mxu0 %v3256
    %4520 = vmatpush1.bf16.msra.mxu0 %v3255
    %4521 = vmatprep.subr.bf16.mxu0 %v3248
    %4522 = vmatpush1.bf16.msra.mxu0 %v3247
    %4523 = vmatprep.subr.bf16.mxu0 %v3240
    %4524 = vmatpush1.bf16.msra.mxu0 %v3239
    %4525 = vmatprep.subr.bf16.mxu0 %v3232
    %4526 = vmatpush1.bf16.msra.mxu0 %v3231
    %4527 = vmatprep.subr.bf16.mxu0 %v3224
    %4528 = vmatpush1.bf16.msra.mxu0 %v3223
    %4529 = vmatprep.subr.bf16.mxu0 %v3216
    %4530 = vmatpush1.bf16.msra.mxu0 %v3215
    %4531 = vmatprep.subr.bf16.mxu0 %v3208
    %4532 = vmatpush1.bf16.msra.mxu0 %v3207
    %4533 = vmatprep.subr.bf16.mxu0 %v3200
    %4534 = vmatpush1.bf16.msra.mxu0 %v3199
    %4535 = vmatprep.subr.bf16.mxu0 %v3320
    %4536 = vmatpush2.bf16.msra.mxu0 %v3319
    %4537 = vmatprep.subr.bf16.mxu0 %v3312
    %4538 = vmatpush2.bf16.msra.mxu0 %v3311
    %4539 = vmatprep.subr.bf16.mxu0 %v3304
    %4540 = vmatpush2.bf16.msra.mxu0 %v3303
    %4541 = vmatprep.subr.bf16.mxu0 %v3296
    %4542 = vmatpush2.bf16.msra.mxu0 %v3295
    %4543 = vmatprep.subr.bf16.mxu0 %v3288
    %4544 = vmatpush2.bf16.msra.mxu0 %v3287
    %4545 = vmatprep.subr.bf16.mxu0 %v3280
    %4546 = vmatpush2.bf16.msra.mxu0 %v3279
    %4547 = vmatprep.subr.bf16.mxu0 %v3272
    %4548 = vmatpush2.bf16.msra.mxu0 %v3271
    %4549 = vmatprep.subr.bf16.mxu0 %v3264
    %4550 = vmatpush2.bf16.msra.mxu0 %v3263
    %4551 = vmatprep.mubr.bf16.mxu0 %v620
    %4552 = vmatmul.mubr.bf16.gmra.mxu0 %v619
    %v4553 = vpop.f32.mrf.mxu0
    %v4554 = vadd.f32 %v4513, %v4553
    %v4555 = vpop.f32.mrf.mxu0
    %v4556 = vadd.f32 %v4515, %v4555
    %v4557 = vpop.f32.mrf.mxu0
    %v4558 = vpop.f32.mrf.mxu0
    %4559 = vdwg.mxu0
    %4560 = vmatprep.subr.bf16.mxu0 %v3384
    %4561 = vmatpush1.bf16.msra.mxu0 %v3383
    %4562 = vmatprep.subr.bf16.mxu0 %v3376
    %4563 = vmatpush1.bf16.msra.mxu0 %v3375
    %4564 = vmatprep.subr.bf16.mxu0 %v3368
    %4565 = vmatpush1.bf16.msra.mxu0 %v3367
    %4566 = vmatprep.subr.bf16.mxu0 %v3360
    %4567 = vmatpush1.bf16.msra.mxu0 %v3359
    %4568 = vmatprep.subr.bf16.mxu0 %v3352
    %4569 = vmatpush1.bf16.msra.mxu0 %v3351
    %4570 = vmatprep.subr.bf16.mxu0 %v3344
    %4571 = vmatpush1.bf16.msra.mxu0 %v3343
    %4572 = vmatprep.subr.bf16.mxu0 %v3336
    %4573 = vmatpush1.bf16.msra.mxu0 %v3335
    %4574 = vmatprep.subr.bf16.mxu0 %v3328
    %4575 = vmatpush1.bf16.msra.mxu0 %v3327
    %4576 = vmatprep.subr.bf16.mxu0 %v3448
    %4577 = vmatpush2.bf16.msra.mxu0 %v3447
    %4578 = vmatprep.subr.bf16.mxu0 %v3440
    %4579 = vmatpush2.bf16.msra.mxu0 %v3439
    %4580 = vmatprep.subr.bf16.mxu0 %v3432
    %4581 = vmatpush2.bf16.msra.mxu0 %v3431
    %4582 = vmatprep.subr.bf16.mxu0 %v3424
    %4583 = vmatpush2.bf16.msra.mxu0 %v3423
    %4584 = vmatprep.subr.bf16.mxu0 %v3416
    %4585 = vmatpush2.bf16.msra.mxu0 %v3415
    %4586 = vmatprep.subr.bf16.mxu0 %v3408
    %4587 = vmatpush2.bf16.msra.mxu0 %v3407
    %4588 = vmatprep.subr.bf16.mxu0 %v3400
    %4589 = vmatpush2.bf16.msra.mxu0 %v3399
    %4590 = vmatprep.subr.bf16.mxu0 %v3392
    %4591 = vmatpush2.bf16.msra.mxu0 %v3391
    %4592 = vmatprep.mubr.bf16.mxu0 %v622
    %4593 = vmatmul.mubr.bf16.gmra.mxu0 %v621
    %v4594 = vpop.f32.mrf.mxu0
    %v4595 = vadd.f32 %v4554, %v4594
    %v4596 = vpop.f32.mrf.mxu0
    %v4597 = vadd.f32 %v4556, %v4596
    %v4598 = vpop.f32.mrf.mxu0
    %v4599 = vpop.f32.mrf.mxu0
    %4600 = vdwg.mxu0
    %4601 = vmatprep.subr.bf16.mxu0 %v3512
    %4602 = vmatpush1.bf16.msra.mxu0 %v3511
    %4603 = vmatprep.subr.bf16.mxu0 %v3504
    %4604 = vmatpush1.bf16.msra.mxu0 %v3503
    %4605 = vmatprep.subr.bf16.mxu0 %v3496
    %4606 = vmatpush1.bf16.msra.mxu0 %v3495
    %4607 = vmatprep.subr.bf16.mxu0 %v3488
    %4608 = vmatpush1.bf16.msra.mxu0 %v3487
    %4609 = vmatprep.subr.bf16.mxu0 %v3480
    %4610 = vmatpush1.bf16.msra.mxu0 %v3479
    %4611 = vmatprep.subr.bf16.mxu0 %v3472
    %4612 = vmatpush1.bf16.msra.mxu0 %v3471
    %4613 = vmatprep.subr.bf16.mxu0 %v3464
    %4614 = vmatpush1.bf16.msra.mxu0 %v3463
    %4615 = vmatprep.subr.bf16.mxu0 %v3456
    %4616 = vmatpush1.bf16.msra.mxu0 %v3455
    %4617 = vmatprep.subr.bf16.mxu0 %v3576
    %4618 = vmatpush2.bf16.msra.mxu0 %v3575
    %4619 = vmatprep.subr.bf16.mxu0 %v3568
    %4620 = vmatpush2.bf16.msra.mxu0 %v3567
    %4621 = vmatprep.subr.bf16.mxu0 %v3560
    %4622 = vmatpush2.bf16.msra.mxu0 %v3559
    %4623 = vmatprep.subr.bf16.mxu0 %v3552
    %4624 = vmatpush2.bf16.msra.mxu0 %v3551
    %4625 = vmatprep.subr.bf16.mxu0 %v3544
    %4626 = vmatpush2.bf16.msra.mxu0 %v3543
    %4627 = vmatprep.subr.bf16.mxu0 %v3536
    %4628 = vmatpush2.bf16.msra.mxu0 %v3535
    %4629 = vmatprep.subr.bf16.mxu0 %v3528
    %4630 = vmatpush2.bf16.msra.mxu0 %v3527
    %4631 = vmatprep.subr.bf16.mxu0 %v3520
    %4632 = vmatpush2.bf16.msra.mxu0 %v3519
    %4633 = vmatprep.mubr.bf16.mxu0 %v624
    %4634 = vmatmul.mubr.bf16.gmra.mxu0 %v623
    %v4635 = vpop.f32.mrf.mxu0
    %v4636 = vadd.f32 %v4595, %v4635
    %v4637 = vpop.f32.mrf.mxu0
    %v4638 = vadd.f32 %v4597, %v4637
    %v4639 = vpop.f32.mrf.mxu0
    %v4640 = vpop.f32.mrf.mxu0
    %4641 = vdwg.mxu0
    %4642 = vmatprep.subr.bf16.mxu0 %v3640
    %4643 = vmatpush1.bf16.msra.mxu0 %v3639
    %4644 = vmatprep.subr.bf16.mxu0 %v3632
    %4645 = vmatpush1.bf16.msra.mxu0 %v3631
    %4646 = vmatprep.subr.bf16.mxu0 %v3624
    %4647 = vmatpush1.bf16.msra.mxu0 %v3623
    %4648 = vmatprep.subr.bf16.mxu0 %v3616
    %4649 = vmatpush1.bf16.msra.mxu0 %v3615
    %4650 = vmatprep.subr.bf16.mxu0 %v3608
    %4651 = vmatpush1.bf16.msra.mxu0 %v3607
    %4652 = vmatprep.subr.bf16.mxu0 %v3600
    %4653 = vmatpush1.bf16.msra.mxu0 %v3599
    %4654 = vmatprep.subr.bf16.mxu0 %v3592
    %4655 = vmatpush1.bf16.msra.mxu0 %v3591
    %4656 = vmatprep.subr.bf16.mxu0 %v3584
    %4657 = vmatpush1.bf16.msra.mxu0 %v3583
    %4658 = vmatprep.subr.bf16.mxu0 0
    %4659 = vmatpush2.bf16.msra.mxu0 0
    %4660 = vmatprep.subr.bf16.mxu0 0
    %4661 = vmatpush2.bf16.msra.mxu0 0
    %4662 = vmatprep.subr.bf16.mxu0 0
    %4663 = vmatpush2.bf16.msra.mxu0 0
    %4664 = vmatprep.subr.bf16.mxu0 0
    %4665 = vmatpush2.bf16.msra.mxu0 0
    %4666 = vmatprep.subr.bf16.mxu0 0
    %4667 = vmatpush2.bf16.msra.mxu0 0
    %4668 = vmatprep.subr.bf16.mxu0 %v3664
    %4669 = vmatpush2.bf16.msra.mxu0 %v3663
    %4670 = vmatprep.subr.bf16.mxu0 %v3656
    %4671 = vmatpush2.bf16.msra.mxu0 %v3655
    %4672 = vmatprep.subr.bf16.mxu0 %v3648
    %4673 = vmatpush2.bf16.msra.mxu0 %v3647
    %4674 = vmatprep.mubr.bf16.mxu0 %v4271
    %4675 = vmatmul.mubr.bf16.gmra.mxu0 %v625
    %v4676 = vpop.f32.mrf.mxu0
    %v4677 = vadd.f32 %v4636, %v4676
    %v4678 = vpop.f32.mrf.mxu0
    %v4679 = vadd.f32 %v4638, %v4678
    %v4680 = vpop.f32.mrf.mxu0
    %v4681 = vpop.f32.mrf.mxu0
    %4682 = vdwg.mxu0
    %4683 = vmatprep.subr.bf16.mxu0 %v3130
    %4684 = vmatpush1.bf16.msra.mxu0 %v3129
    %4685 = vmatprep.subr.bf16.mxu0 %v3122
    %4686 = vmatpush1.bf16.msra.mxu0 %v3121
    %4687 = vmatprep.subr.bf16.mxu0 %v3114
    %4688 = vmatpush1.bf16.msra.mxu0 %v3113
    %4689 = vmatprep.subr.bf16.mxu0 %v3106
    %4690 = vmatpush1.bf16.msra.mxu0 %v3105
    %4691 = vmatprep.subr.bf16.mxu0 %v3098
    %4692 = vmatpush1.bf16.msra.mxu0 %v3097
    %4693 = vmatprep.subr.bf16.mxu0 %v3090
    %4694 = vmatpush1.bf16.msra.mxu0 %v3089
    %4695 = vmatprep.subr.bf16.mxu0 %v3082
    %4696 = vmatpush1.bf16.msra.mxu0 %v3081
    %4697 = vmatprep.subr.bf16.mxu0 %v3074
    %4698 = vmatpush1.bf16.msra.mxu0 %v3073
    %4699 = vmatprep.subr.bf16.mxu0 %v3194
    %4700 = vmatpush2.bf16.msra.mxu0 %v3193
    %4701 = vmatprep.subr.bf16.mxu0 %v3186
    %4702 = vmatpush2.bf16.msra.mxu0 %v3185
    %4703 = vmatprep.subr.bf16.mxu0 %v3178
    %4704 = vmatpush2.bf16.msra.mxu0 %v3177
    %4705 = vmatprep.subr.bf16.mxu0 %v3170
    %4706 = vmatpush2.bf16.msra.mxu0 %v3169
    %4707 = vmatprep.subr.bf16.mxu0 %v3162
    %4708 = vmatpush2.bf16.msra.mxu0 %v3161
    %4709 = vmatprep.subr.bf16.mxu0 %v3154
    %4710 = vmatpush2.bf16.msra.mxu0 %v3153
    %4711 = vmatprep.subr.bf16.mxu0 %v3146
    %4712 = vmatpush2.bf16.msra.mxu0 %v3145
    %4713 = vmatprep.subr.bf16.mxu0 %v3138
    %4714 = vmatpush2.bf16.msra.mxu0 %v3137
    %4715 = vmatprep.mubr.bf16.mxu0 %v618
    %4716 = vmatmul.mubr.bf16.gmra.mxu0 %v617
    %v4717 = vpop.f32.mrf.mxu0
    %v4718 = vadd.f32 %v1248, %v4717
    %v4719 = vpop.f32.mrf.mxu0
    %v4720 = vadd.f32 %v1252, %v4719
    %v4721 = vpop.f32.mrf.mxu0
    %v4722 = vpop.f32.mrf.mxu0
    %4723 = vdwg.mxu0
    %4724 = vmatprep.subr.bf16.mxu0 %v3258
    %4725 = vmatpush1.bf16.msra.mxu0 %v3257
    %4726 = vmatprep.subr.bf16.mxu0 %v3250
    %4727 = vmatpush1.bf16.msra.mxu0 %v3249
    %4728 = vmatprep.subr.bf16.mxu0 %v3242
    %4729 = vmatpush1.bf16.msra.mxu0 %v3241
    %4730 = vmatprep.subr.bf16.mxu0 %v3234
    %4731 = vmatpush1.bf16.msra.mxu0 %v3233
    %4732 = vmatprep.subr.bf16.mxu0 %v3226
    %4733 = vmatpush1.bf16.msra.mxu0 %v3225
    %4734 = vmatprep.subr.bf16.mxu0 %v3218
    %4735 = vmatpush1.bf16.msra.mxu0 %v3217
    %4736 = vmatprep.subr.bf16.mxu0 %v3210
    %4737 = vmatpush1.bf16.msra.mxu0 %v3209
    %4738 = vmatprep.subr.bf16.mxu0 %v3202
    %4739 = vmatpush1.bf16.msra.mxu0 %v3201
    %4740 = vmatprep.subr.bf16.mxu0 %v3322
    %4741 = vmatpush2.bf16.msra.mxu0 %v3321
    %4742 = vmatprep.subr.bf16.mxu0 %v3314
    %4743 = vmatpush2.bf16.msra.mxu0 %v3313
    %4744 = vmatprep.subr.bf16.mxu0 %v3306
    %4745 = vmatpush2.bf16.msra.mxu0 %v3305
    %4746 = vmatprep.subr.bf16.mxu0 %v3298
    %4747 = vmatpush2.bf16.msra.mxu0 %v3297
    %4748 = vmatprep.subr.bf16.mxu0 %v3290
    %4749 = vmatpush2.bf16.msra.mxu0 %v3289
    %4750 = vmatprep.subr.bf16.mxu0 %v3282
    %4751 = vmatpush2.bf16.msra.mxu0 %v3281
    %4752 = vmatprep.subr.bf16.mxu0 %v3274
    %4753 = vmatpush2.bf16.msra.mxu0 %v3273
    %4754 = vmatprep.subr.bf16.mxu0 %v3266
    %4755 = vmatpush2.bf16.msra.mxu0 %v3265
    %4756 = vmatprep.mubr.bf16.mxu0 %v620
    %4757 = vmatmul.mubr.bf16.gmra.mxu0 %v619
    %v4758 = vpop.f32.mrf.mxu0
    %v4759 = vadd.f32 %v4718, %v4758
    %v4760 = vpop.f32.mrf.mxu0
    %v4761 = vadd.f32 %v4720, %v4760
    %v4762 = vpop.f32.mrf.mxu0
    %v4763 = vpop.f32.mrf.mxu0
    %4764 = vdwg.mxu0
    %4765 = vmatprep.subr.bf16.mxu0 %v3386
    %4766 = vmatpush1.bf16.msra.mxu0 %v3385
    %4767 = vmatprep.subr.bf16.mxu0 %v3378
    %4768 = vmatpush1.bf16.msra.mxu0 %v3377
    %4769 = vmatprep.subr.bf16.mxu0 %v3370
    %4770 = vmatpush1.bf16.msra.mxu0 %v3369
    %4771 = vmatprep.subr.bf16.mxu0 %v3362
    %4772 = vmatpush1.bf16.msra.mxu0 %v3361
    %4773 = vmatprep.subr.bf16.mxu0 %v3354
    %4774 = vmatpush1.bf16.msra.mxu0 %v3353
    %4775 = vmatprep.subr.bf16.mxu0 %v3346
    %4776 = vmatpush1.bf16.msra.mxu0 %v3345
    %4777 = vmatprep.subr.bf16.mxu0 %v3338
    %4778 = vmatpush1.bf16.msra.mxu0 %v3337
    %4779 = vmatprep.subr.bf16.mxu0 %v3330
    %4780 = vmatpush1.bf16.msra.mxu0 %v3329
    %4781 = vmatprep.subr.bf16.mxu0 %v3450
    %4782 = vmatpush2.bf16.msra.mxu0 %v3449
    %4783 = vmatprep.subr.bf16.mxu0 %v3442
    %4784 = vmatpush2.bf16.msra.mxu0 %v3441
    %4785 = vmatprep.subr.bf16.mxu0 %v3434
    %4786 = vmatpush2.bf16.msra.mxu0 %v3433
    %4787 = vmatprep.subr.bf16.mxu0 %v3426
    %4788 = vmatpush2.bf16.msra.mxu0 %v3425
    %4789 = vmatprep.subr.bf16.mxu0 %v3418
    %4790 = vmatpush2.bf16.msra.mxu0 %v3417
    %4791 = vmatprep.subr.bf16.mxu0 %v3410
    %4792 = vmatpush2.bf16.msra.mxu0 %v3409
    %4793 = vmatprep.subr.bf16.mxu0 %v3402
    %4794 = vmatpush2.bf16.msra.mxu0 %v3401
    %4795 = vmatprep.subr.bf16.mxu0 %v3394
    %4796 = vmatpush2.bf16.msra.mxu0 %v3393
    %4797 = vmatprep.mubr.bf16.mxu0 %v622
    %4798 = vmatmul.mubr.bf16.gmra.mxu0 %v621
    %v4799 = vpop.f32.mrf.mxu0
    %v4800 = vadd.f32 %v4759, %v4799
    %v4801 = vpop.f32.mrf.mxu0
    %v4802 = vadd.f32 %v4761, %v4801
    %v4803 = vpop.f32.mrf.mxu0
    %v4804 = vpop.f32.mrf.mxu0
    %4805 = vdwg.mxu0
    %4806 = vmatprep.subr.bf16.mxu0 %v3514
    %4807 = vmatpush1.bf16.msra.mxu0 %v3513
    %4808 = vmatprep.subr.bf16.mxu0 %v3506
    %4809 = vmatpush1.bf16.msra.mxu0 %v3505
    %4810 = vmatprep.subr.bf16.mxu0 %v3498
    %4811 = vmatpush1.bf16.msra.mxu0 %v3497
    %4812 = vmatprep.subr.bf16.mxu0 %v3490
    %4813 = vmatpush1.bf16.msra.mxu0 %v3489
    %4814 = vmatprep.subr.bf16.mxu0 %v3482
    %4815 = vmatpush1.bf16.msra.mxu0 %v3481
    %4816 = vmatprep.subr.bf16.mxu0 %v3474
    %4817 = vmatpush1.bf16.msra.mxu0 %v3473
    %4818 = vmatprep.subr.bf16.mxu0 %v3466
    %4819 = vmatpush1.bf16.msra.mxu0 %v3465
    %4820 = vmatprep.subr.bf16.mxu0 %v3458
    %4821 = vmatpush1.bf16.msra.mxu0 %v3457
    %4822 = vmatprep.subr.bf16.mxu0 %v3578
    %4823 = vmatpush2.bf16.msra.mxu0 %v3577
    %4824 = vmatprep.subr.bf16.mxu0 %v3570
    %4825 = vmatpush2.bf16.msra.mxu0 %v3569
    %4826 = vmatprep.subr.bf16.mxu0 %v3562
    %4827 = vmatpush2.bf16.msra.mxu0 %v3561
    %4828 = vmatprep.subr.bf16.mxu0 %v3554
    %4829 = vmatpush2.bf16.msra.mxu0 %v3553
    %4830 = vmatprep.subr.bf16.mxu0 %v3546
    %4831 = vmatpush2.bf16.msra.mxu0 %v3545
    %4832 = vmatprep.subr.bf16.mxu0 %v3538
    %4833 = vmatpush2.bf16.msra.mxu0 %v3537
    %4834 = vmatprep.subr.bf16.mxu0 %v3530
    %4835 = vmatpush2.bf16.msra.mxu0 %v3529
    %4836 = vmatprep.subr.bf16.mxu0 %v3522
    %4837 = vmatpush2.bf16.msra.mxu0 %v3521
    %4838 = vmatprep.mubr.bf16.mxu0 %v624
    %4839 = vmatmul.mubr.bf16.gmra.mxu0 %v623
    %v4840 = vpop.f32.mrf.mxu0
    %v4841 = vadd.f32 %v4800, %v4840
    %v4842 = vpop.f32.mrf.mxu0
    %v4843 = vadd.f32 %v4802, %v4842
    %v4844 = vpop.f32.mrf.mxu0
    %v4845 = vpop.f32.mrf.mxu0
    %4846 = vdwg.mxu0
    %4847 = vmatprep.subr.bf16.mxu0 %v3642
    %4848 = vmatpush1.bf16.msra.mxu0 %v3641
    %4849 = vmatprep.subr.bf16.mxu0 %v3634
    %4850 = vmatpush1.bf16.msra.mxu0 %v3633
    %4851 = vmatprep.subr.bf16.mxu0 %v3626
    %4852 = vmatpush1.bf16.msra.mxu0 %v3625
    %4853 = vmatprep.subr.bf16.mxu0 %v3618
    %4854 = vmatpush1.bf16.msra.mxu0 %v3617
    %4855 = vmatprep.subr.bf16.mxu0 %v3610
    %4856 = vmatpush1.bf16.msra.mxu0 %v3609
    %4857 = vmatprep.subr.bf16.mxu0 %v3602
    %4858 = vmatpush1.bf16.msra.mxu0 %v3601
    %4859 = vmatprep.subr.bf16.mxu0 %v3594
    %4860 = vmatpush1.bf16.msra.mxu0 %v3593
    %4861 = vmatprep.subr.bf16.mxu0 %v3586
    %4862 = vmatpush1.bf16.msra.mxu0 %v3585
    %4863 = vmatprep.subr.bf16.mxu0 0
    %4864 = vmatpush2.bf16.msra.mxu0 0
    %4865 = vmatprep.subr.bf16.mxu0 0
    %4866 = vmatpush2.bf16.msra.mxu0 0
    %4867 = vmatprep.subr.bf16.mxu0 0
    %4868 = vmatpush2.bf16.msra.mxu0 0
    %4869 = vmatprep.subr.bf16.mxu0 0
    %4870 = vmatpush2.bf16.msra.mxu0 0
    %4871 = vmatprep.subr.bf16.mxu0 0
    %4872 = vmatpush2.bf16.msra.mxu0 0
    %4873 = vmatprep.subr.bf16.mxu0 %v3666
    %4874 = vmatpush2.bf16.msra.mxu0 %v3665
    %4875 = vmatprep.subr.bf16.mxu0 %v3658
    %4876 = vmatpush2.bf16.msra.mxu0 %v3657
    %4877 = vmatprep.subr.bf16.mxu0 %v3650
    %4878 = vmatpush2.bf16.msra.mxu0 %v3649
    %4879 = vmatprep.mubr.bf16.mxu0 %v4271
    %4880 = vmatmul.mubr.bf16.gmra.mxu0 %v625
    %v4881 = vpop.f32.mrf.mxu0
    %v4882 = vadd.f32 %v4841, %v4881
    %v4883 = vpop.f32.mrf.mxu0
    %v4884 = vadd.f32 %v4843, %v4883
    %v4885 = vpop.f32.mrf.mxu0
    %v4886 = vpop.f32.mrf.mxu0
    %4887 = vdwg.mxu0
    %4888 = vmatprep.subr.bf16.mxu0 %v3132
    %4889 = vmatpush1.bf16.msra.mxu0 %v3131
    %4890 = vmatprep.subr.bf16.mxu0 %v3124
    %4891 = vmatpush1.bf16.msra.mxu0 %v3123
    %4892 = vmatprep.subr.bf16.mxu0 %v3116
    %4893 = vmatpush1.bf16.msra.mxu0 %v3115
    %4894 = vmatprep.subr.bf16.mxu0 %v3108
    %4895 = vmatpush1.bf16.msra.mxu0 %v3107
    %4896 = vmatprep.subr.bf16.mxu0 %v3100
    %4897 = vmatpush1.bf16.msra.mxu0 %v3099
    %4898 = vmatprep.subr.bf16.mxu0 %v3092
    %4899 = vmatpush1.bf16.msra.mxu0 %v3091
    %4900 = vmatprep.subr.bf16.mxu0 %v3084
    %4901 = vmatpush1.bf16.msra.mxu0 %v3083
    %4902 = vmatprep.subr.bf16.mxu0 %v3076
    %4903 = vmatpush1.bf16.msra.mxu0 %v3075
    %4904 = vmatprep.subr.bf16.mxu0 %v3196
    %4905 = vmatpush2.bf16.msra.mxu0 %v3195
    %4906 = vmatprep.subr.bf16.mxu0 %v3188
    %4907 = vmatpush2.bf16.msra.mxu0 %v3187
    %4908 = vmatprep.subr.bf16.mxu0 %v3180
    %4909 = vmatpush2.bf16.msra.mxu0 %v3179
    %4910 = vmatprep.subr.bf16.mxu0 %v3172
    %4911 = vmatpush2.bf16.msra.mxu0 %v3171
    %4912 = vmatprep.subr.bf16.mxu0 %v3164
    %4913 = vmatpush2.bf16.msra.mxu0 %v3163
    %4914 = vmatprep.subr.bf16.mxu0 %v3156
    %4915 = vmatpush2.bf16.msra.mxu0 %v3155
    %4916 = vmatprep.subr.bf16.mxu0 %v3148
    %4917 = vmatpush2.bf16.msra.mxu0 %v3147
    %4918 = vmatprep.subr.bf16.mxu0 %v3140
    %4919 = vmatpush2.bf16.msra.mxu0 %v3139
    %4920 = vmatprep.mubr.bf16.mxu0 %v618
    %4921 = vmatmul.mubr.bf16.gmra.mxu0 %v617
    %v4922 = vpop.f32.mrf.mxu0
    %v4923 = vadd.f32 %v1256, %v4922
    %v4924 = vpop.f32.mrf.mxu0
    %v4925 = vadd.f32 %v1260, %v4924
    %v4926 = vpop.f32.mrf.mxu0
    %v4927 = vpop.f32.mrf.mxu0
    %4928 = vdwg.mxu0
    %4929 = vmatprep.subr.bf16.mxu0 %v3260
    %4930 = vmatpush1.bf16.msra.mxu0 %v3259
    %4931 = vmatprep.subr.bf16.mxu0 %v3252
    %4932 = vmatpush1.bf16.msra.mxu0 %v3251
    %4933 = vmatprep.subr.bf16.mxu0 %v3244
    %4934 = vmatpush1.bf16.msra.mxu0 %v3243
    %4935 = vmatprep.subr.bf16.mxu0 %v3236
    %4936 = vmatpush1.bf16.msra.mxu0 %v3235
    %4937 = vmatprep.subr.bf16.mxu0 %v3228
    %4938 = vmatpush1.bf16.msra.mxu0 %v3227
    %4939 = vmatprep.subr.bf16.mxu0 %v3220
    %4940 = vmatpush1.bf16.msra.mxu0 %v3219
    %4941 = vmatprep.subr.bf16.mxu0 %v3212
    %4942 = vmatpush1.bf16.msra.mxu0 %v3211
    %4943 = vmatprep.subr.bf16.mxu0 %v3204
    %4944 = vmatpush1.bf16.msra.mxu0 %v3203
    %4945 = vmatprep.subr.bf16.mxu0 %v3324
    %4946 = vmatpush2.bf16.msra.mxu0 %v3323
    %4947 = vmatprep.subr.bf16.mxu0 %v3316
    %4948 = vmatpush2.bf16.msra.mxu0 %v3315
    %4949 = vmatprep.subr.bf16.mxu0 %v3308
    %4950 = vmatpush2.bf16.msra.mxu0 %v3307
    %4951 = vmatprep.subr.bf16.mxu0 %v3300
    %4952 = vmatpush2.bf16.msra.mxu0 %v3299
    %4953 = vmatprep.subr.bf16.mxu0 %v3292
    %4954 = vmatpush2.bf16.msra.mxu0 %v3291
    %4955 = vmatprep.subr.bf16.mxu0 %v3284
    %4956 = vmatpush2.bf16.msra.mxu0 %v3283
    %4957 = vmatprep.subr.bf16.mxu0 %v3276
    %4958 = vmatpush2.bf16.msra.mxu0 %v3275
    %4959 = vmatprep.subr.bf16.mxu0 %v3268
    %4960 = vmatpush2.bf16.msra.mxu0 %v3267
    %4961 = vmatprep.mubr.bf16.mxu0 %v620
    %4962 = vmatmul.mubr.bf16.gmra.mxu0 %v619
    %v4963 = vpop.f32.mrf.mxu0
    %v4964 = vadd.f32 %v4923, %v4963
    %v4965 = vpop.f32.mrf.mxu0
    %v4966 = vadd.f32 %v4925, %v4965
    %v4967 = vpop.f32.mrf.mxu0
    %v4968 = vpop.f32.mrf.mxu0
    %4969 = vdwg.mxu0
    %4970 = vmatprep.subr.bf16.mxu0 %v3388
    %4971 = vmatpush1.bf16.msra.mxu0 %v3387
    %4972 = vmatprep.subr.bf16.mxu0 %v3380
    %4973 = vmatpush1.bf16.msra.mxu0 %v3379
    %4974 = vmatprep.subr.bf16.mxu0 %v3372
    %4975 = vmatpush1.bf16.msra.mxu0 %v3371
    %4976 = vmatprep.subr.bf16.mxu0 %v3364
    %4977 = vmatpush1.bf16.msra.mxu0 %v3363
    %4978 = vmatprep.subr.bf16.mxu0 %v3356
    %4979 = vmatpush1.bf16.msra.mxu0 %v3355
    %4980 = vmatprep.subr.bf16.mxu0 %v3348
    %4981 = vmatpush1.bf16.msra.mxu0 %v3347
    %4982 = vmatprep.subr.bf16.mxu0 %v3340
    %4983 = vmatpush1.bf16.msra.mxu0 %v3339
    %4984 = vmatprep.subr.bf16.mxu0 %v3332
    %4985 = vmatpush1.bf16.msra.mxu0 %v3331
    %4986 = vmatprep.subr.bf16.mxu0 %v3452
    %4987 = vmatpush2.bf16.msra.mxu0 %v3451
    %4988 = vmatprep.subr.bf16.mxu0 %v3444
    %4989 = vmatpush2.bf16.msra.mxu0 %v3443
    %4990 = vmatprep.subr.bf16.mxu0 %v3436
    %4991 = vmatpush2.bf16.msra.mxu0 %v3435
    %4992 = vmatprep.subr.bf16.mxu0 %v3428
    %4993 = vmatpush2.bf16.msra.mxu0 %v3427
    %4994 = vmatprep.subr.bf16.mxu0 %v3420
    %4995 = vmatpush2.bf16.msra.mxu0 %v3419
    %4996 = vmatprep.subr.bf16.mxu0 %v3412
    %4997 = vmatpush2.bf16.msra.mxu0 %v3411
    %4998 = vmatprep.subr.bf16.mxu0 %v3404
    %4999 = vmatpush2.bf16.msra.mxu0 %v3403
    %5000 = vmatprep.subr.bf16.mxu0 %v3396
    %5001 = vmatpush2.bf16.msra.mxu0 %v3395
    %5002 = vmatprep.mubr.bf16.mxu0 %v622
    %5003 = vmatmul.mubr.bf16.gmra.mxu0 %v621
    %v5004 = vpop.f32.mrf.mxu0
    %v5005 = vadd.f32 %v4964, %v5004
    %v5006 = vpop.f32.mrf.mxu0
    %v5007 = vadd.f32 %v4966, %v5006
    %v5008 = vpop.f32.mrf.mxu0
    %v5009 = vpop.f32.mrf.mxu0
    %5010 = vdwg.mxu0
    %5011 = vmatprep.subr.bf16.mxu0 %v3516
    %5012 = vmatpush1.bf16.msra.mxu0 %v3515
    %5013 = vmatprep.subr.bf16.mxu0 %v3508
    %5014 = vmatpush1.bf16.msra.mxu0 %v3507
    %5015 = vmatprep.subr.bf16.mxu0 %v3500
    %5016 = vmatpush1.bf16.msra.mxu0 %v3499
    %5017 = vmatprep.subr.bf16.mxu0 %v3492
    %5018 = vmatpush1.bf16.msra.mxu0 %v3491
    %5019 = vmatprep.subr.bf16.mxu0 %v3484
    %5020 = vmatpush1.bf16.msra.mxu0 %v3483
    %5021 = vmatprep.subr.bf16.mxu0 %v3476
    %5022 = vmatpush1.bf16.msra.mxu0 %v3475
    %5023 = vmatprep.subr.bf16.mxu0 %v3468
    %5024 = vmatpush1.bf16.msra.mxu0 %v3467
    %5025 = vmatprep.subr.bf16.mxu0 %v3460
    %5026 = vmatpush1.bf16.msra.mxu0 %v3459
    %5027 = vmatprep.subr.bf16.mxu0 %v3580
    %5028 = vmatpush2.bf16.msra.mxu0 %v3579
    %5029 = vmatprep.subr.bf16.mxu0 %v3572
    %5030 = vmatpush2.bf16.msra.mxu0 %v3571
    %5031 = vmatprep.subr.bf16.mxu0 %v3564
    %5032 = vmatpush2.bf16.msra.mxu0 %v3563
    %5033 = vmatprep.subr.bf16.mxu0 %v3556
    %5034 = vmatpush2.bf16.msra.mxu0 %v3555
    %5035 = vmatprep.subr.bf16.mxu0 %v3548
    %5036 = vmatpush2.bf16.msra.mxu0 %v3547
    %5037 = vmatprep.subr.bf16.mxu0 %v3540
    %5038 = vmatpush2.bf16.msra.mxu0 %v3539
    %5039 = vmatprep.subr.bf16.mxu0 %v3532
    %5040 = vmatpush2.bf16.msra.mxu0 %v3531
    %5041 = vmatprep.subr.bf16.mxu0 %v3524
    %5042 = vmatpush2.bf16.msra.mxu0 %v3523
    %5043 = vmatprep.mubr.bf16.mxu0 %v624
    %5044 = vmatmul.mubr.bf16.gmra.mxu0 %v623
    %v5045 = vpop.f32.mrf.mxu0
    %v5046 = vadd.f32 %v5005, %v5045
    %v5047 = vpop.f32.mrf.mxu0
    %v5048 = vadd.f32 %v5007, %v5047
    %v5049 = vpop.f32.mrf.mxu0
    %v5050 = vpop.f32.mrf.mxu0
    %5051 = vdwg.mxu0
    %5052 = vmatprep.subr.bf16.mxu0 %v3644
    %5053 = vmatpush1.bf16.msra.mxu0 %v3643
    %5054 = vmatprep.subr.bf16.mxu0 %v3636
    %5055 = vmatpush1.bf16.msra.mxu0 %v3635
    %5056 = vmatprep.subr.bf16.mxu0 %v3628
    %5057 = vmatpush1.bf16.msra.mxu0 %v3627
    %5058 = vmatprep.subr.bf16.mxu0 %v3620
    %5059 = vmatpush1.bf16.msra.mxu0 %v3619
    %5060 = vmatprep.subr.bf16.mxu0 %v3612
    %5061 = vmatpush1.bf16.msra.mxu0 %v3611
    %5062 = vmatprep.subr.bf16.mxu0 %v3604
    %5063 = vmatpush1.bf16.msra.mxu0 %v3603
    %5064 = vmatprep.subr.bf16.mxu0 %v3596
    %5065 = vmatpush1.bf16.msra.mxu0 %v3595
    %5066 = vmatprep.subr.bf16.mxu0 %v3588
    %5067 = vmatpush1.bf16.msra.mxu0 %v3587
    %5068 = vmatprep.subr.bf16.mxu0 0
    %5069 = vmatpush2.bf16.msra.mxu0 0
    %5070 = vmatprep.subr.bf16.mxu0 0
    %5071 = vmatpush2.bf16.msra.mxu0 0
    %5072 = vmatprep.subr.bf16.mxu0 0
    %5073 = vmatpush2.bf16.msra.mxu0 0
    %5074 = vmatprep.subr.bf16.mxu0 0
    %5075 = vmatpush2.bf16.msra.mxu0 0
    %5076 = vmatprep.subr.bf16.mxu0 0
    %5077 = vmatpush2.bf16.msra.mxu0 0
    %5078 = vmatprep.subr.bf16.mxu0 %v3668
    %5079 = vmatpush2.bf16.msra.mxu0 %v3667
    %5080 = vmatprep.subr.bf16.mxu0 %v3660
    %5081 = vmatpush2.bf16.msra.mxu0 %v3659
    %5082 = vmatprep.subr.bf16.mxu0 %v3652
    %5083 = vmatpush2.bf16.msra.mxu0 %v3651
    %5084 = vmatprep.mubr.bf16.mxu0 %v4271
    %5085 = vmatmul.mubr.bf16.gmra.mxu0 %v625
    %v5086 = vpop.f32.mrf.mxu0
    %v5087 = vadd.f32 %v5046, %v5086
    %v5088 = vpop.f32.mrf.mxu0
    %v5089 = vadd.f32 %v5048, %v5088
    %v5090 = vpop.f32.mrf.mxu0
    %v5091 = vpop.f32.mrf.mxu0
    %5092 = vdwg.mxu0
    %v5093 = vmax.f32 %v4472, 0.0
    %v5094 = vmax.f32 %v4474, 0.0
    %v5095 = vmax.f32 %v4677, 0.0
    %v5096 = vmax.f32 %v4679, 0.0
    %v5097 = vmax.f32 %v4882, 0.0
    %v5098 = vmax.f32 %v4884, 0.0
    %v5099 = vmax.f32 %v5087, 0.0
    %v5100 = vmax.f32 %v5089, 0.0
    %v5101 = vpack.c.bf16 %v5093, %v5093
    %v5102 = vpack.c.bf16 %v5094, %v5094
    %v5103 = vpack.c.bf16 %v5095, %v5095
    %v5104 = vpack.c.bf16 %v5096, %v5096
    %v5105 = vpack.c.bf16 %v5097, %v5097
    %v5106 = vpack.c.bf16 %v5098, %v5098
    %v5107 = vpack.c.bf16 %v5099, %v5099
    %v5108 = vpack.c.bf16 %v5100, %v5100
    %v5109 = vld [vmem:[#allocation10] sm:$0xff]
    %v5110 = vld [vmem:[#allocation10 + $0x8] sm:$0xff]
    %v5111 = vld [vmem:[#allocation10 + $0x10] sm:$0xff]
    %v5112 = vld [vmem:[#allocation10 + $0x18] sm:$0xff]
    %v5113 = vld [vmem:[#allocation10 + $0x20] sm:$0xff]
    %v5114 = vld [vmem:[#allocation10 + $0x28] sm:$0xff]
    %v5115 = vld [vmem:[#allocation10 + $0x30] sm:$0xff]
    %v5116 = vld [vmem:[#allocation10 + $0x38] sm:$0xff]
    %v5117 = vld [vmem:[#allocation10 + $0x40] sm:$0xff]
    %v5118 = vld [vmem:[#allocation10 + $0x48] sm:$0xff]
    %v5119 = vld [vmem:[#allocation10 + $0x50] sm:$0xff]
    %v5120 = vld [vmem:[#allocation10 + $0x58] sm:$0xff]
    %v5121 = vld [vmem:[#allocation10 + $0x60] sm:$0xff]
    %v5122 = vld [vmem:[#allocation10 + $0x68] sm:$0xff]
    %v5123 = vld [vmem:[#allocation10 + $0x70] sm:$0xff]
    %v5124 = vld [vmem:[#allocation10 + $0x78] sm:$0xff]
    %v5125 = vld [vmem:[#allocation10 + $0x80] sm:$0xff]
    %v5126 = vld [vmem:[#allocation10 + $0x88] sm:$0xff]
    %v5127 = vld [vmem:[#allocation10 + $0x90] sm:$0xff]
    %v5128 = vld [vmem:[#allocation10 + $0x98] sm:$0xff]
    %v5129 = vld [vmem:[#allocation10 + $0xa0] sm:$0xff]
    %v5130 = vld [vmem:[#allocation10 + $0xa8] sm:$0xff]
    %v5131 = vld [vmem:[#allocation10 + $0xb0] sm:$0xff]
    %v5132 = vld [vmem:[#allocation10 + $0xb8] sm:$0xff]
    %v5133 = vld [vmem:[#allocation10 + $0xc0] sm:$0xff]
    %v5134 = vld [vmem:[#allocation10 + $0xc8] sm:$0xff]
    %v5135 = vld [vmem:[#allocation10 + $0xd0] sm:$0xff]
    %v5136 = vld [vmem:[#allocation10 + $0xd8] sm:$0xff]
    %v5137 = vld [vmem:[#allocation10 + $0xe0] sm:$0xff]
    %v5138 = vld [vmem:[#allocation10 + $0xe8] sm:$0xff]
    %v5139 = vld [vmem:[#allocation10 + $0xf0] sm:$0xff]
    %v5140 = vld [vmem:[#allocation10 + $0xf8] sm:$0xff]
    %v5141 = vld [vmem:[#allocation10 + $0x100] sm:$0xff]
    %v5142 = vld [vmem:[#allocation10 + $0x108] sm:$0xff]
    %v5143 = vld [vmem:[#allocation10 + $0x110] sm:$0xff]
    %v5144 = vld [vmem:[#allocation10 + $0x118] sm:$0xff]
    %v5145 = vld [vmem:[#allocation10 + $0x120] sm:$0xff]
    %v5146 = vld [vmem:[#allocation10 + $0x128] sm:$0xff]
    %v5147 = vld [vmem:[#allocation10 + $0x130] sm:$0xff]
    %v5148 = vld [vmem:[#allocation10 + $0x138] sm:$0xff]
    %v5149 = vld [vmem:[#allocation10 + $0x140] sm:$0xff]
    %v5150 = vld [vmem:[#allocation10 + $0x148] sm:$0xff]
    %v5151 = vld [vmem:[#allocation10 + $0x150] sm:$0xff]
    %v5152 = vld [vmem:[#allocation10 + $0x158] sm:$0xff]
    %v5153 = vld [vmem:[#allocation10 + $0x160] sm:$0xff]
    %v5154 = vld [vmem:[#allocation10 + $0x168] sm:$0xff]
    %v5155 = vld [vmem:[#allocation10 + $0x170] sm:$0xff]
    %v5156 = vld [vmem:[#allocation10 + $0x178] sm:$0xff]
    %v5157 = vld [vmem:[#allocation10 + $0x180] sm:$0xff]
    %v5158 = vld [vmem:[#allocation10 + $0x188] sm:$0xff]
    %v5159 = vld [vmem:[#allocation10 + $0x190] sm:$0xff]
    %v5160 = vld [vmem:[#allocation10 + $0x198] sm:$0xff]
    %v5161 = vld [vmem:[#allocation10 + $0x1a0] sm:$0xff]
    %v5162 = vld [vmem:[#allocation10 + $0x1a8] sm:$0xff]
    %v5163 = vld [vmem:[#allocation10 + $0x1b0] sm:$0xff]
    %v5164 = vld [vmem:[#allocation10 + $0x1b8] sm:$0xff]
    %v5165 = vld [vmem:[#allocation10 + $0x1c0] sm:$0xff]
    %v5166 = vld [vmem:[#allocation10 + $0x1c8] sm:$0xff]
    %v5167 = vld [vmem:[#allocation10 + $0x1d0] sm:$0xff]
    %v5168 = vld [vmem:[#allocation10 + $0x1d8] sm:$0xff]
    %v5169 = vld [vmem:[#allocation10 + $0x1e0] sm:$0xff]
    %v5170 = vld [vmem:[#allocation10 + $0x1e8] sm:$0xff]
    %v5171 = vld [vmem:[#allocation10 + $0x1f0] sm:$0xff]
    %v5172 = vld [vmem:[#allocation10 + $0x1f8] sm:$0xff]
    %v5173 = vld [vmem:[#allocation10 + $0x200] sm:$0xff]
    %v5174 = vld [vmem:[#allocation10 + $0x208] sm:$0xff]
    %v5175 = vld [vmem:[#allocation10 + $0x210] sm:$0xff]
    %v5176 = vld [vmem:[#allocation10 + $0x218] sm:$0xff]
    %v5177 = vld [vmem:[#allocation10 + $0x220] sm:$0xff]
    %v5178 = vld [vmem:[#allocation10 + $0x228] sm:$0xff]
    %v5179 = vld [vmem:[#allocation10 + $0x230] sm:$0xff]
    %v5180 = vld [vmem:[#allocation10 + $0x238] sm:$0xff]
    %v5181 = vld [vmem:[#allocation10 + $0x240] sm:$0xff]
    %v5182 = vld [vmem:[#allocation10 + $0x248] sm:$0xff]
    %v5183 = vld [vmem:[#allocation10 + $0x250] sm:$0xff]
    %v5184 = vld [vmem:[#allocation10 + $0x258] sm:$0xff]
    %v5185 = vld [vmem:[#allocation10 + $0x260] sm:$0xff]
    %v5186 = vld [vmem:[#allocation10 + $0x268] sm:$0xff]
    %v5187 = vld [vmem:[#allocation10 + $0x270] sm:$0xff]
    %v5188 = vld [vmem:[#allocation10 + $0x278] sm:$0xff]
    %v5189 = vld [vmem:[#allocation10 + $0x280] sm:$0xff]
    %v5190 = vld [vmem:[#allocation10 + $0x288] sm:$0xff]
    %v5191 = vld [vmem:[#allocation10 + $0x290] sm:$0xff]
    %v5192 = vld [vmem:[#allocation10 + $0x298] sm:$0xff]
    %v5193 = vld [vmem:[#allocation10 + $0x2a0] sm:$0xff]
    %v5194 = vld [vmem:[#allocation10 + $0x2a8] sm:$0xff]
    %v5195 = vld [vmem:[#allocation10 + $0x2b0] sm:$0xff]
    %v5196 = vld [vmem:[#allocation10 + $0x2b8] sm:$0xff]
    %v5197 = vld [vmem:[#allocation10 + $0x2c0] sm:$0xff]
    %v5198 = vld [vmem:[#allocation10 + $0x2c8] sm:$0xff]
    %v5199 = vld [vmem:[#allocation10 + $0x2d0] sm:$0xff]
    %v5200 = vld [vmem:[#allocation10 + $0x2d8] sm:$0xff]
    %v5201 = vld [vmem:[#allocation10 + $0x2e0] sm:$0xff]
    %v5202 = vld [vmem:[#allocation10 + $0x2e8] sm:$0xff]
    %v5203 = vld [vmem:[#allocation10 + $0x2f0] sm:$0xff]
    %v5204 = vld [vmem:[#allocation10 + $0x2f8] sm:$0xff]
    %v5205 = vld [vmem:[#allocation10 + $0x300] sm:$0xff]
    %v5206 = vld [vmem:[#allocation10 + $0x308] sm:$0xff]
    %v5207 = vld [vmem:[#allocation10 + $0x310] sm:$0xff]
    %v5208 = vld [vmem:[#allocation10 + $0x318] sm:$0xff]
    %v5209 = vld [vmem:[#allocation10 + $0x320] sm:$0xff]
    %v5210 = vld [vmem:[#allocation10 + $0x328] sm:$0xff]
    %v5211 = vld [vmem:[#allocation10 + $0x330] sm:$0xff]
    %v5212 = vld [vmem:[#allocation10 + $0x338] sm:$0xff]
    %v5213 = vld [vmem:[#allocation10 + $0x340] sm:$0xff]
    %v5214 = vld [vmem:[#allocation10 + $0x348] sm:$0xff]
    %v5215 = vld [vmem:[#allocation10 + $0x350] sm:$0xff]
    %v5216 = vld [vmem:[#allocation10 + $0x358] sm:$0xff]
    %v5217 = vld [vmem:[#allocation10 + $0x360] sm:$0xff]
    %v5218 = vld [vmem:[#allocation10 + $0x368] sm:$0xff]
    %v5219 = vld [vmem:[#allocation10 + $0x370] sm:$0xff]
    %v5220 = vld [vmem:[#allocation10 + $0x378] sm:$0xff]
    %v5221 = vld [vmem:[#allocation10 + $0x380] sm:$0xff]
    %v5222 = vld [vmem:[#allocation10 + $0x388] sm:$0xff]
    %v5223 = vld [vmem:[#allocation10 + $0x390] sm:$0xff]
    %v5224 = vld [vmem:[#allocation10 + $0x398] sm:$0xff]
    %v5225 = vld [vmem:[#allocation10 + $0x3a0] sm:$0xff]
    %v5226 = vld [vmem:[#allocation10 + $0x3a8] sm:$0xff]
    %v5227 = vld [vmem:[#allocation10 + $0x3b0] sm:$0xff]
    %v5228 = vld [vmem:[#allocation10 + $0x3b8] sm:$0xff]
    %v5229 = vld [vmem:[#allocation10 + $0x3c0] sm:$0xff]
    %v5230 = vld [vmem:[#allocation10 + $0x3c8] sm:$0xff]
    %v5231 = vld [vmem:[#allocation10 + $0x3d0] sm:$0xff]
    %v5232 = vld [vmem:[#allocation10 + $0x3d8] sm:$0xff]
    %v5233 = vld [vmem:[#allocation10 + $0x3e0] sm:$0xff]
    %v5234 = vld [vmem:[#allocation10 + $0x3e8] sm:$0xff]
    %v5235 = vld [vmem:[#allocation10 + $0x3f0] sm:$0xff]
    %v5236 = vld [vmem:[#allocation10 + $0x3f8] sm:$0xff]
    %v5237 = vld [vmem:[#allocation10 + $0x400] sm:$0xff]
    %v5238 = vld [vmem:[#allocation10 + $0x408] sm:$0xff]
    %v5239 = vld [vmem:[#allocation10 + $0x410] sm:$0xff]
    %v5240 = vld [vmem:[#allocation10 + $0x418] sm:$0xff]
    %v5241 = vld [vmem:[#allocation10 + $0x420] sm:$0xff]
    %v5242 = vld [vmem:[#allocation10 + $0x428] sm:$0xff]
    %v5243 = vld [vmem:[#allocation10 + $0x430] sm:$0xff]
    %v5244 = vld [vmem:[#allocation10 + $0x438] sm:$0xff]
    %v5245 = vld [vmem:[#allocation10 + $0x440] sm:$0xff]
    %v5246 = vld [vmem:[#allocation10 + $0x448] sm:$0xff]
    %v5247 = vld [vmem:[#allocation10 + $0x450] sm:$0xff]
    %v5248 = vld [vmem:[#allocation10 + $0x458] sm:$0xff]
    %v5249 = vld [vmem:[#allocation10 + $0x460] sm:$0xff]
    %v5250 = vld [vmem:[#allocation10 + $0x468] sm:$0xff]
    %v5251 = vld [vmem:[#allocation10 + $0x470] sm:$0xff]
    %v5252 = vld [vmem:[#allocation10 + $0x478] sm:$0xff]
    %v5253 = vld [vmem:[#allocation10 + $0x480] sm:$0xff]
    %v5254 = vld [vmem:[#allocation10 + $0x488] sm:$0xff]
    %v5255 = vld [vmem:[#allocation10 + $0x490] sm:$0xff]
    %v5256 = vld [vmem:[#allocation10 + $0x498] sm:$0xff]
    %v5257 = vld [vmem:[#allocation10 + $0x4a0] sm:$0xff]
    %v5258 = vld [vmem:[#allocation10 + $0x4a8] sm:$0xff]
    %v5259 = vld [vmem:[#allocation10 + $0x4b0] sm:$0xff]
    %v5260 = vld [vmem:[#allocation10 + $0x4b8] sm:$0xff]
    %v5261 = vld [vmem:[#allocation10 + $0x4c0] sm:$0xff]
    %v5262 = vld [vmem:[#allocation10 + $0x4c8] sm:$0xff]
    %v5263 = vld [vmem:[#allocation10 + $0x4d0] sm:$0xff]
    %v5264 = vld [vmem:[#allocation10 + $0x4d8] sm:$0xff]
    %v5265 = vld [vmem:[#allocation10 + $0x4e0] sm:$0xff]
    %v5266 = vld [vmem:[#allocation10 + $0x4e8] sm:$0xff]
    %v5267 = vld [vmem:[#allocation10 + $0x4f0] sm:$0xff]
    %v5268 = vld [vmem:[#allocation10 + $0x4f8] sm:$0xff]
    %v5269 = vld [vmem:[#allocation10 + $0x500] sm:$0xff]
    %v5270 = vld [vmem:[#allocation10 + $0x508] sm:$0xff]
    %v5271 = vld [vmem:[#allocation10 + $0x510] sm:$0xff]
    %v5272 = vld [vmem:[#allocation10 + $0x518] sm:$0xff]
    %v5273 = vld [vmem:[#allocation10 + $0x520] sm:$0xff]
    %v5274 = vld [vmem:[#allocation10 + $0x528] sm:$0xff]
    %v5275 = vld [vmem:[#allocation10 + $0x530] sm:$0xff]
    %v5276 = vld [vmem:[#allocation10 + $0x538] sm:$0xff]
    %v5277 = vld [vmem:[#allocation10 + $0x540] sm:$0xff]
    %v5278 = vld [vmem:[#allocation10 + $0x548] sm:$0xff]
    %v5279 = vld [vmem:[#allocation10 + $0x550] sm:$0xff]
    %v5280 = vld [vmem:[#allocation10 + $0x558] sm:$0xff]
    %v5281 = vld [vmem:[#allocation10 + $0x560] sm:$0xff]
    %v5282 = vld [vmem:[#allocation10 + $0x568] sm:$0xff]
    %v5283 = vld [vmem:[#allocation10 + $0x570] sm:$0xff]
    %v5284 = vld [vmem:[#allocation10 + $0x578] sm:$0xff]
    %v5285 = vld [vmem:[#allocation10 + $0x580] sm:$0xff]
    %v5286 = vld [vmem:[#allocation10 + $0x588] sm:$0xff]
    %v5287 = vld [vmem:[#allocation10 + $0x590] sm:$0xff]
    %v5288 = vld [vmem:[#allocation10 + $0x598] sm:$0xff]
    %v5289 = vld [vmem:[#allocation10 + $0x5a0] sm:$0xff]
    %v5290 = vld [vmem:[#allocation10 + $0x5a8] sm:$0xff]
    %v5291 = vld [vmem:[#allocation10 + $0x5b0] sm:$0xff]
    %v5292 = vld [vmem:[#allocation10 + $0x5b8] sm:$0xff]
    %v5293 = vld [vmem:[#allocation10 + $0x5c0] sm:$0xff]
    %v5294 = vld [vmem:[#allocation10 + $0x5c8] sm:$0xff]
    %v5295 = vld [vmem:[#allocation10 + $0x5d0] sm:$0xff]
    %v5296 = vld [vmem:[#allocation10 + $0x5d8] sm:$0xff]
    %v5297 = vld [vmem:[#allocation10 + $0x5e0] sm:$0xff]
    %v5298 = vld [vmem:[#allocation10 + $0x5e8] sm:$0xff]
    %v5299 = vld [vmem:[#allocation10 + $0x5f0] sm:$0xff]
    %v5300 = vld [vmem:[#allocation10 + $0x5f8] sm:$0xff]
    %v5301 = vld [vmem:[#allocation10 + $0x600] sm:$0xff]
    %v5302 = vld [vmem:[#allocation10 + $0x608] sm:$0xff]
    %v5303 = vld [vmem:[#allocation10 + $0x610] sm:$0xff]
    %v5304 = vld [vmem:[#allocation10 + $0x618] sm:$0xff]
    %v5305 = vld [vmem:[#allocation10 + $0x620] sm:$0xff]
    %v5306 = vld [vmem:[#allocation10 + $0x628] sm:$0xff]
    %v5307 = vld [vmem:[#allocation10 + $0x630] sm:$0xff]
    %v5308 = vld [vmem:[#allocation10 + $0x638] sm:$0xff]
    %v5309 = vld [vmem:[#allocation10 + $0x640] sm:$0xff]
    %v5310 = vld [vmem:[#allocation10 + $0x648] sm:$0xff]
    %v5311 = vld [vmem:[#allocation10 + $0x650] sm:$0xff]
    %v5312 = vld [vmem:[#allocation10 + $0x658] sm:$0xff]
    %v5313 = vld [vmem:[#allocation10 + $0x660] sm:$0xff]
    %v5314 = vld [vmem:[#allocation10 + $0x668] sm:$0xff]
    %v5315 = vld [vmem:[#allocation10 + $0x670] sm:$0xff]
    %v5316 = vld [vmem:[#allocation10 + $0x678] sm:$0xff]
    %v5317 = vld [vmem:[#allocation10 + $0x680] sm:$0xff]
    %v5318 = vld [vmem:[#allocation10 + $0x688] sm:$0xff]
    %v5319 = vld [vmem:[#allocation10 + $0x690] sm:$0xff]
    %v5320 = vld [vmem:[#allocation10 + $0x698] sm:$0xff]
    %v5321 = vld [vmem:[#allocation10 + $0x6a0] sm:$0xff]
    %v5322 = vld [vmem:[#allocation10 + $0x6a8] sm:$0xff]
    %v5323 = vld [vmem:[#allocation10 + $0x6b0] sm:$0xff]
    %v5324 = vld [vmem:[#allocation10 + $0x6b8] sm:$0xff]
    %v5325 = vld [vmem:[#allocation10 + $0x6c0] sm:$0xff]
    %v5326 = vld [vmem:[#allocation10 + $0x6c8] sm:$0xff]
    %v5327 = vld [vmem:[#allocation10 + $0x6d0] sm:$0xff]
    %v5328 = vld [vmem:[#allocation10 + $0x6d8] sm:$0xff]
    %v5329 = vld [vmem:[#allocation10 + $0x6e0] sm:$0xff]
    %v5330 = vld [vmem:[#allocation10 + $0x6e8] sm:$0xff]
    %v5331 = vld [vmem:[#allocation10 + $0x6f0] sm:$0xff]
    %v5332 = vld [vmem:[#allocation10 + $0x6f8] sm:$0xff]
    %v5333 = vld [vmem:[#allocation10 + $0x700] sm:$0xff]
    %v5334 = vld [vmem:[#allocation10 + $0x708] sm:$0xff]
    %v5335 = vld [vmem:[#allocation10 + $0x710] sm:$0xff]
    %v5336 = vld [vmem:[#allocation10 + $0x718] sm:$0xff]
    %v5337 = vld [vmem:[#allocation10 + $0x720] sm:$0xff]
    %v5338 = vld [vmem:[#allocation10 + $0x728] sm:$0xff]
    %v5339 = vld [vmem:[#allocation10 + $0x730] sm:$0xff]
    %v5340 = vld [vmem:[#allocation10 + $0x738] sm:$0xff]
    %v5341 = vld [vmem:[#allocation10 + $0x740] sm:$0xff]
    %v5342 = vld [vmem:[#allocation10 + $0x748] sm:$0xff]
    %v5343 = vld [vmem:[#allocation10 + $0x750] sm:$0xff]
    %v5344 = vld [vmem:[#allocation10 + $0x758] sm:$0xff]
    %v5345 = vld [vmem:[#allocation10 + $0x760] sm:$0xff]
    %v5346 = vld [vmem:[#allocation10 + $0x768] sm:$0xff]
    %v5347 = vld [vmem:[#allocation10 + $0x770] sm:$0xff]
    %v5348 = vld [vmem:[#allocation10 + $0x778] sm:$0xff]
    %v5349 = vld [vmem:[#allocation10 + $0x780] sm:$0xff]
    %v5350 = vld [vmem:[#allocation10 + $0x788] sm:$0xff]
    %v5351 = vld [vmem:[#allocation10 + $0x790] sm:$0xff]
    %v5352 = vld [vmem:[#allocation10 + $0x798] sm:$0xff]
    %v5353 = vld [vmem:[#allocation10 + $0x7a0] sm:$0xff]
    %v5354 = vld [vmem:[#allocation10 + $0x7a8] sm:$0xff]
    %v5355 = vld [vmem:[#allocation10 + $0x7b0] sm:$0xff]
    %v5356 = vld [vmem:[#allocation10 + $0x7b8] sm:$0xff]
    %v5357 = vld [vmem:[#allocation10 + $0x7c0] sm:$0xff]
    %v5358 = vld [vmem:[#allocation10 + $0x7c8] sm:$0xff]
    %v5359 = vld [vmem:[#allocation12] sm:$0xf]
    %v5361 = vlaneseq
    %v5362 = vshrl.u32 %v5361, 7
    %v5363 = vsub.s32 0, %v5362
    %v5364 = vrot.slane %v5359, %v5363
    %v5365 = vlaneseq
    %v5366 = vshrl.u32 %v5365, 7
    %v5367 = vsub.s32 1, %v5366
    %v5368 = vrot.slane %v5359, %v5367
    %v5369 = vlaneseq
    %v5370 = vshrl.u32 %v5369, 7
    %v5371 = vsub.s32 2, %v5370
    %v5372 = vrot.slane %v5359, %v5371
    %v5373 = vlaneseq
    %v5374 = vshrl.u32 %v5373, 7
    %v5375 = vsub.s32 3, %v5374
    %v5376 = vrot.slane %v5359, %v5375
    %v5631 = vunpack.c.l.b16 %v5109
    %v5632 = vunpack.c.h.b16 %v5109
    %v5633 = vunpack.c.l.b16 %v5110
    %v5634 = vunpack.c.h.b16 %v5110
    %v5635 = vunpack.c.l.b16 %v5111
    %v5636 = vunpack.c.h.b16 %v5111
    %v5637 = vunpack.c.l.b16 %v5112
    %v5638 = vunpack.c.h.b16 %v5112
    %v5639 = vunpack.c.l.b16 %v5113
    %v5640 = vunpack.c.h.b16 %v5113
    %v5641 = vunpack.c.l.b16 %v5114
    %v5642 = vunpack.c.h.b16 %v5114
    %v5643 = vunpack.c.l.b16 %v5115
    %v5644 = vunpack.c.h.b16 %v5115
    %v5645 = vunpack.c.l.b16 %v5116
    %v5646 = vunpack.c.h.b16 %v5116
    %v5647 = vunpack.c.l.b16 %v5117
    %v5648 = vunpack.c.h.b16 %v5117
    %v5649 = vunpack.c.l.b16 %v5118
    %v5650 = vunpack.c.h.b16 %v5118
    %v5651 = vunpack.c.l.b16 %v5119
    %v5652 = vunpack.c.h.b16 %v5119
    %v5653 = vunpack.c.l.b16 %v5120
    %v5654 = vunpack.c.h.b16 %v5120
    %v5655 = vunpack.c.l.b16 %v5121
    %v5656 = vunpack.c.h.b16 %v5121
    %v5657 = vunpack.c.l.b16 %v5122
    %v5658 = vunpack.c.h.b16 %v5122
    %v5659 = vunpack.c.l.b16 %v5123
    %v5660 = vunpack.c.h.b16 %v5123
    %v5661 = vunpack.c.l.b16 %v5124
    %v5662 = vunpack.c.h.b16 %v5124
    %v5663 = vunpack.c.l.b16 %v5125
    %v5664 = vunpack.c.h.b16 %v5125
    %v5665 = vunpack.c.l.b16 %v5126
    %v5666 = vunpack.c.h.b16 %v5126
    %v5667 = vunpack.c.l.b16 %v5127
    %v5668 = vunpack.c.h.b16 %v5127
    %v5669 = vunpack.c.l.b16 %v5128
    %v5670 = vunpack.c.h.b16 %v5128
    %v5671 = vunpack.c.l.b16 %v5129
    %v5672 = vunpack.c.h.b16 %v5129
    %v5673 = vunpack.c.l.b16 %v5130
    %v5674 = vunpack.c.h.b16 %v5130
    %v5675 = vunpack.c.l.b16 %v5131
    %v5676 = vunpack.c.h.b16 %v5131
    %v5677 = vunpack.c.l.b16 %v5132
    %v5678 = vunpack.c.h.b16 %v5132
    %v5679 = vunpack.c.l.b16 %v5133
    %v5680 = vunpack.c.h.b16 %v5133
    %v5681 = vunpack.c.l.b16 %v5134
    %v5682 = vunpack.c.h.b16 %v5134
    %v5683 = vunpack.c.l.b16 %v5135
    %v5684 = vunpack.c.h.b16 %v5135
    %v5685 = vunpack.c.l.b16 %v5136
    %v5686 = vunpack.c.h.b16 %v5136
    %v5687 = vunpack.c.l.b16 %v5137
    %v5688 = vunpack.c.h.b16 %v5137
    %v5689 = vunpack.c.l.b16 %v5138
    %v5690 = vunpack.c.h.b16 %v5138
    %v5691 = vunpack.c.l.b16 %v5139
    %v5692 = vunpack.c.h.b16 %v5139
    %v5693 = vunpack.c.l.b16 %v5140
    %v5694 = vunpack.c.h.b16 %v5140
    %v5695 = vunpack.c.l.b16 %v5141
    %v5696 = vunpack.c.h.b16 %v5141
    %v5697 = vunpack.c.l.b16 %v5142
    %v5698 = vunpack.c.h.b16 %v5142
    %v5699 = vunpack.c.l.b16 %v5143
    %v5700 = vunpack.c.h.b16 %v5143
    %v5701 = vunpack.c.l.b16 %v5144
    %v5702 = vunpack.c.h.b16 %v5144
    %v5703 = vunpack.c.l.b16 %v5145
    %v5704 = vunpack.c.h.b16 %v5145
    %v5705 = vunpack.c.l.b16 %v5146
    %v5706 = vunpack.c.h.b16 %v5146
    %v5707 = vunpack.c.l.b16 %v5147
    %v5708 = vunpack.c.h.b16 %v5147
    %v5709 = vunpack.c.l.b16 %v5148
    %v5710 = vunpack.c.h.b16 %v5148
    %v5711 = vunpack.c.l.b16 %v5149
    %v5712 = vunpack.c.h.b16 %v5149
    %v5713 = vunpack.c.l.b16 %v5150
    %v5714 = vunpack.c.h.b16 %v5150
    %v5715 = vunpack.c.l.b16 %v5151
    %v5716 = vunpack.c.h.b16 %v5151
    %v5717 = vunpack.c.l.b16 %v5152
    %v5718 = vunpack.c.h.b16 %v5152
    %v5719 = vunpack.c.l.b16 %v5153
    %v5720 = vunpack.c.h.b16 %v5153
    %v5721 = vunpack.c.l.b16 %v5154
    %v5722 = vunpack.c.h.b16 %v5154
    %v5723 = vunpack.c.l.b16 %v5155
    %v5724 = vunpack.c.h.b16 %v5155
    %v5725 = vunpack.c.l.b16 %v5156
    %v5726 = vunpack.c.h.b16 %v5156
    %v5727 = vunpack.c.l.b16 %v5157
    %v5728 = vunpack.c.h.b16 %v5157
    %v5729 = vunpack.c.l.b16 %v5158
    %v5730 = vunpack.c.h.b16 %v5158
    %v5731 = vunpack.c.l.b16 %v5159
    %v5732 = vunpack.c.h.b16 %v5159
    %v5733 = vunpack.c.l.b16 %v5160
    %v5734 = vunpack.c.h.b16 %v5160
    %v5735 = vunpack.c.l.b16 %v5161
    %v5736 = vunpack.c.h.b16 %v5161
    %v5737 = vunpack.c.l.b16 %v5162
    %v5738 = vunpack.c.h.b16 %v5162
    %v5739 = vunpack.c.l.b16 %v5163
    %v5740 = vunpack.c.h.b16 %v5163
    %v5741 = vunpack.c.l.b16 %v5164
    %v5742 = vunpack.c.h.b16 %v5164
    %v5743 = vunpack.c.l.b16 %v5165
    %v5744 = vunpack.c.h.b16 %v5165
    %v5745 = vunpack.c.l.b16 %v5166
    %v5746 = vunpack.c.h.b16 %v5166
    %v5747 = vunpack.c.l.b16 %v5167
    %v5748 = vunpack.c.h.b16 %v5167
    %v5749 = vunpack.c.l.b16 %v5168
    %v5750 = vunpack.c.h.b16 %v5168
    %v5751 = vunpack.c.l.b16 %v5169
    %v5752 = vunpack.c.h.b16 %v5169
    %v5753 = vunpack.c.l.b16 %v5170
    %v5754 = vunpack.c.h.b16 %v5170
    %v5755 = vunpack.c.l.b16 %v5171
    %v5756 = vunpack.c.h.b16 %v5171
    %v5757 = vunpack.c.l.b16 %v5172
    %v5758 = vunpack.c.h.b16 %v5172
    %v5759 = vunpack.c.l.b16 %v5173
    %v5760 = vunpack.c.h.b16 %v5173
    %v5761 = vunpack.c.l.b16 %v5174
    %v5762 = vunpack.c.h.b16 %v5174
    %v5763 = vunpack.c.l.b16 %v5175
    %v5764 = vunpack.c.h.b16 %v5175
    %v5765 = vunpack.c.l.b16 %v5176
    %v5766 = vunpack.c.h.b16 %v5176
    %v5767 = vunpack.c.l.b16 %v5177
    %v5768 = vunpack.c.h.b16 %v5177
    %v5769 = vunpack.c.l.b16 %v5178
    %v5770 = vunpack.c.h.b16 %v5178
    %v5771 = vunpack.c.l.b16 %v5179
    %v5772 = vunpack.c.h.b16 %v5179
    %v5773 = vunpack.c.l.b16 %v5180
    %v5774 = vunpack.c.h.b16 %v5180
    %v5775 = vunpack.c.l.b16 %v5181
    %v5776 = vunpack.c.h.b16 %v5181
    %v5777 = vunpack.c.l.b16 %v5182
    %v5778 = vunpack.c.h.b16 %v5182
    %v5779 = vunpack.c.l.b16 %v5183
    %v5780 = vunpack.c.h.b16 %v5183
    %v5781 = vunpack.c.l.b16 %v5184
    %v5782 = vunpack.c.h.b16 %v5184
    %v5783 = vunpack.c.l.b16 %v5185
    %v5784 = vunpack.c.h.b16 %v5185
    %v5785 = vunpack.c.l.b16 %v5186
    %v5786 = vunpack.c.h.b16 %v5186
    %v5787 = vunpack.c.l.b16 %v5187
    %v5788 = vunpack.c.h.b16 %v5187
    %v5789 = vunpack.c.l.b16 %v5188
    %v5790 = vunpack.c.h.b16 %v5188
    %v5791 = vunpack.c.l.b16 %v5189
    %v5792 = vunpack.c.h.b16 %v5189
    %v5793 = vunpack.c.l.b16 %v5190
    %v5794 = vunpack.c.h.b16 %v5190
    %v5795 = vunpack.c.l.b16 %v5191
    %v5796 = vunpack.c.h.b16 %v5191
    %v5797 = vunpack.c.l.b16 %v5192
    %v5798 = vunpack.c.h.b16 %v5192
    %v5799 = vunpack.c.l.b16 %v5193
    %v5800 = vunpack.c.h.b16 %v5193
    %v5801 = vunpack.c.l.b16 %v5194
    %v5802 = vunpack.c.h.b16 %v5194
    %v5803 = vunpack.c.l.b16 %v5195
    %v5804 = vunpack.c.h.b16 %v5195
    %v5805 = vunpack.c.l.b16 %v5196
    %v5806 = vunpack.c.h.b16 %v5196
    %v5807 = vunpack.c.l.b16 %v5197
    %v5808 = vunpack.c.h.b16 %v5197
    %v5809 = vunpack.c.l.b16 %v5198
    %v5810 = vunpack.c.h.b16 %v5198
    %v5811 = vunpack.c.l.b16 %v5199
    %v5812 = vunpack.c.h.b16 %v5199
    %v5813 = vunpack.c.l.b16 %v5200
    %v5814 = vunpack.c.h.b16 %v5200
    %v5815 = vunpack.c.l.b16 %v5201
    %v5816 = vunpack.c.h.b16 %v5201
    %v5817 = vunpack.c.l.b16 %v5202
    %v5818 = vunpack.c.h.b16 %v5202
    %v5819 = vunpack.c.l.b16 %v5203
    %v5820 = vunpack.c.h.b16 %v5203
    %v5821 = vunpack.c.l.b16 %v5204
    %v5822 = vunpack.c.h.b16 %v5204
    %v5823 = vunpack.c.l.b16 %v5205
    %v5824 = vunpack.c.h.b16 %v5205
    %v5825 = vunpack.c.l.b16 %v5206
    %v5826 = vunpack.c.h.b16 %v5206
    %v5827 = vunpack.c.l.b16 %v5207
    %v5828 = vunpack.c.h.b16 %v5207
    %v5829 = vunpack.c.l.b16 %v5208
    %v5830 = vunpack.c.h.b16 %v5208
    %v5831 = vunpack.c.l.b16 %v5209
    %v5832 = vunpack.c.h.b16 %v5209
    %v5833 = vunpack.c.l.b16 %v5210
    %v5834 = vunpack.c.h.b16 %v5210
    %v5835 = vunpack.c.l.b16 %v5211
    %v5836 = vunpack.c.h.b16 %v5211
    %v5837 = vunpack.c.l.b16 %v5212
    %v5838 = vunpack.c.h.b16 %v5212
    %v5839 = vunpack.c.l.b16 %v5213
    %v5840 = vunpack.c.h.b16 %v5213
    %v5841 = vunpack.c.l.b16 %v5214
    %v5842 = vunpack.c.h.b16 %v5214
    %v5843 = vunpack.c.l.b16 %v5215
    %v5844 = vunpack.c.h.b16 %v5215
    %v5845 = vunpack.c.l.b16 %v5216
    %v5846 = vunpack.c.h.b16 %v5216
    %v5847 = vunpack.c.l.b16 %v5217
    %v5848 = vunpack.c.h.b16 %v5217
    %v5849 = vunpack.c.l.b16 %v5218
    %v5850 = vunpack.c.h.b16 %v5218
    %v5851 = vunpack.c.l.b16 %v5219
    %v5852 = vunpack.c.h.b16 %v5219
    %v5853 = vunpack.c.l.b16 %v5220
    %v5854 = vunpack.c.h.b16 %v5220
    %v5855 = vunpack.c.l.b16 %v5221
    %v5856 = vunpack.c.h.b16 %v5221
    %v5857 = vunpack.c.l.b16 %v5222
    %v5858 = vunpack.c.h.b16 %v5222
    %v5859 = vunpack.c.l.b16 %v5223
    %v5860 = vunpack.c.h.b16 %v5223
    %v5861 = vunpack.c.l.b16 %v5224
    %v5862 = vunpack.c.h.b16 %v5224
    %v5863 = vunpack.c.l.b16 %v5225
    %v5864 = vunpack.c.h.b16 %v5225
    %v5865 = vunpack.c.l.b16 %v5226
    %v5866 = vunpack.c.h.b16 %v5226
    %v5867 = vunpack.c.l.b16 %v5227
    %v5868 = vunpack.c.h.b16 %v5227
    %v5869 = vunpack.c.l.b16 %v5228
    %v5870 = vunpack.c.h.b16 %v5228
    %v5871 = vunpack.c.l.b16 %v5229
    %v5872 = vunpack.c.h.b16 %v5229
    %v5873 = vunpack.c.l.b16 %v5230
    %v5874 = vunpack.c.h.b16 %v5230
    %v5875 = vunpack.c.l.b16 %v5231
    %v5876 = vunpack.c.h.b16 %v5231
    %v5877 = vunpack.c.l.b16 %v5232
    %v5878 = vunpack.c.h.b16 %v5232
    %v5879 = vunpack.c.l.b16 %v5233
    %v5880 = vunpack.c.h.b16 %v5233
    %v5881 = vunpack.c.l.b16 %v5234
    %v5882 = vunpack.c.h.b16 %v5234
    %v5883 = vunpack.c.l.b16 %v5235
    %v5884 = vunpack.c.h.b16 %v5235
    %v5885 = vunpack.c.l.b16 %v5236
    %v5886 = vunpack.c.h.b16 %v5236
    %v5887 = vunpack.c.l.b16 %v5237
    %v5888 = vunpack.c.h.b16 %v5237
    %v5889 = vunpack.c.l.b16 %v5238
    %v5890 = vunpack.c.h.b16 %v5238
    %v5891 = vunpack.c.l.b16 %v5239
    %v5892 = vunpack.c.h.b16 %v5239
    %v5893 = vunpack.c.l.b16 %v5240
    %v5894 = vunpack.c.h.b16 %v5240
    %v5895 = vunpack.c.l.b16 %v5241
    %v5896 = vunpack.c.h.b16 %v5241
    %v5897 = vunpack.c.l.b16 %v5242
    %v5898 = vunpack.c.h.b16 %v5242
    %v5899 = vunpack.c.l.b16 %v5243
    %v5900 = vunpack.c.h.b16 %v5243
    %v5901 = vunpack.c.l.b16 %v5244
    %v5902 = vunpack.c.h.b16 %v5244
    %v5903 = vunpack.c.l.b16 %v5245
    %v5904 = vunpack.c.h.b16 %v5245
    %v5905 = vunpack.c.l.b16 %v5246
    %v5906 = vunpack.c.h.b16 %v5246
    %v5907 = vunpack.c.l.b16 %v5247
    %v5908 = vunpack.c.h.b16 %v5247
    %v5909 = vunpack.c.l.b16 %v5248
    %v5910 = vunpack.c.h.b16 %v5248
    %v5911 = vunpack.c.l.b16 %v5249
    %v5912 = vunpack.c.h.b16 %v5249
    %v5913 = vunpack.c.l.b16 %v5250
    %v5914 = vunpack.c.h.b16 %v5250
    %v5915 = vunpack.c.l.b16 %v5251
    %v5916 = vunpack.c.h.b16 %v5251
    %v5917 = vunpack.c.l.b16 %v5252
    %v5918 = vunpack.c.h.b16 %v5252
    %v5919 = vunpack.c.l.b16 %v5253
    %v5920 = vunpack.c.h.b16 %v5253
    %v5921 = vunpack.c.l.b16 %v5254
    %v5922 = vunpack.c.h.b16 %v5254
    %v5923 = vunpack.c.l.b16 %v5255
    %v5924 = vunpack.c.h.b16 %v5255
    %v5925 = vunpack.c.l.b16 %v5256
    %v5926 = vunpack.c.h.b16 %v5256
    %v5927 = vunpack.c.l.b16 %v5257
    %v5928 = vunpack.c.h.b16 %v5257
    %v5929 = vunpack.c.l.b16 %v5258
    %v5930 = vunpack.c.h.b16 %v5258
    %v5931 = vunpack.c.l.b16 %v5259
    %v5932 = vunpack.c.h.b16 %v5259
    %v5933 = vunpack.c.l.b16 %v5260
    %v5934 = vunpack.c.h.b16 %v5260
    %v5935 = vunpack.c.l.b16 %v5261
    %v5936 = vunpack.c.h.b16 %v5261
    %v5937 = vunpack.c.l.b16 %v5262
    %v5938 = vunpack.c.h.b16 %v5262
    %v5939 = vunpack.c.l.b16 %v5263
    %v5940 = vunpack.c.h.b16 %v5263
    %v5941 = vunpack.c.l.b16 %v5264
    %v5942 = vunpack.c.h.b16 %v5264
    %v5943 = vunpack.c.l.b16 %v5265
    %v5944 = vunpack.c.h.b16 %v5265
    %v5945 = vunpack.c.l.b16 %v5266
    %v5946 = vunpack.c.h.b16 %v5266
    %v5947 = vunpack.c.l.b16 %v5267
    %v5948 = vunpack.c.h.b16 %v5267
    %v5949 = vunpack.c.l.b16 %v5268
    %v5950 = vunpack.c.h.b16 %v5268
    %v5951 = vunpack.c.l.b16 %v5269
    %v5952 = vunpack.c.h.b16 %v5269
    %v5953 = vunpack.c.l.b16 %v5270
    %v5954 = vunpack.c.h.b16 %v5270
    %v5955 = vunpack.c.l.b16 %v5271
    %v5956 = vunpack.c.h.b16 %v5271
    %v5957 = vunpack.c.l.b16 %v5272
    %v5958 = vunpack.c.h.b16 %v5272
    %v5959 = vunpack.c.l.b16 %v5273
    %v5960 = vunpack.c.h.b16 %v5273
    %v5961 = vunpack.c.l.b16 %v5274
    %v5962 = vunpack.c.h.b16 %v5274
    %v5963 = vunpack.c.l.b16 %v5275
    %v5964 = vunpack.c.h.b16 %v5275
    %v5965 = vunpack.c.l.b16 %v5276
    %v5966 = vunpack.c.h.b16 %v5276
    %v5967 = vunpack.c.l.b16 %v5277
    %v5968 = vunpack.c.h.b16 %v5277
    %v5969 = vunpack.c.l.b16 %v5278
    %v5970 = vunpack.c.h.b16 %v5278
    %v5971 = vunpack.c.l.b16 %v5279
    %v5972 = vunpack.c.h.b16 %v5279
    %v5973 = vunpack.c.l.b16 %v5280
    %v5974 = vunpack.c.h.b16 %v5280
    %v5975 = vunpack.c.l.b16 %v5281
    %v5976 = vunpack.c.h.b16 %v5281
    %v5977 = vunpack.c.l.b16 %v5282
    %v5978 = vunpack.c.h.b16 %v5282
    %v5979 = vunpack.c.l.b16 %v5283
    %v5980 = vunpack.c.h.b16 %v5283
    %v5981 = vunpack.c.l.b16 %v5284
    %v5982 = vunpack.c.h.b16 %v5284
    %v5983 = vunpack.c.l.b16 %v5285
    %v5984 = vunpack.c.h.b16 %v5285
    %v5985 = vunpack.c.l.b16 %v5286
    %v5986 = vunpack.c.h.b16 %v5286
    %v5987 = vunpack.c.l.b16 %v5287
    %v5988 = vunpack.c.h.b16 %v5287
    %v5989 = vunpack.c.l.b16 %v5288
    %v5990 = vunpack.c.h.b16 %v5288
    %v5991 = vunpack.c.l.b16 %v5289
    %v5992 = vunpack.c.h.b16 %v5289
    %v5993 = vunpack.c.l.b16 %v5290
    %v5994 = vunpack.c.h.b16 %v5290
    %v5995 = vunpack.c.l.b16 %v5291
    %v5996 = vunpack.c.h.b16 %v5291
    %v5997 = vunpack.c.l.b16 %v5292
    %v5998 = vunpack.c.h.b16 %v5292
    %v5999 = vunpack.c.l.b16 %v5293
    %v6000 = vunpack.c.h.b16 %v5293
    %v6001 = vunpack.c.l.b16 %v5294
    %v6002 = vunpack.c.h.b16 %v5294
    %v6003 = vunpack.c.l.b16 %v5295
    %v6004 = vunpack.c.h.b16 %v5295
    %v6005 = vunpack.c.l.b16 %v5296
    %v6006 = vunpack.c.h.b16 %v5296
    %v6007 = vunpack.c.l.b16 %v5297
    %v6008 = vunpack.c.h.b16 %v5297
    %v6009 = vunpack.c.l.b16 %v5298
    %v6010 = vunpack.c.h.b16 %v5298
    %v6011 = vunpack.c.l.b16 %v5299
    %v6012 = vunpack.c.h.b16 %v5299
    %v6013 = vunpack.c.l.b16 %v5300
    %v6014 = vunpack.c.h.b16 %v5300
    %v6015 = vunpack.c.l.b16 %v5301
    %v6016 = vunpack.c.h.b16 %v5301
    %v6017 = vunpack.c.l.b16 %v5302
    %v6018 = vunpack.c.h.b16 %v5302
    %v6019 = vunpack.c.l.b16 %v5303
    %v6020 = vunpack.c.h.b16 %v5303
    %v6021 = vunpack.c.l.b16 %v5304
    %v6022 = vunpack.c.h.b16 %v5304
    %v6023 = vunpack.c.l.b16 %v5305
    %v6024 = vunpack.c.h.b16 %v5305
    %v6025 = vunpack.c.l.b16 %v5306
    %v6026 = vunpack.c.h.b16 %v5306
    %v6027 = vunpack.c.l.b16 %v5307
    %v6028 = vunpack.c.h.b16 %v5307
    %v6029 = vunpack.c.l.b16 %v5308
    %v6030 = vunpack.c.h.b16 %v5308
    %v6031 = vunpack.c.l.b16 %v5309
    %v6032 = vunpack.c.h.b16 %v5309
    %v6033 = vunpack.c.l.b16 %v5310
    %v6034 = vunpack.c.h.b16 %v5310
    %v6035 = vunpack.c.l.b16 %v5311
    %v6036 = vunpack.c.h.b16 %v5311
    %v6037 = vunpack.c.l.b16 %v5312
    %v6038 = vunpack.c.h.b16 %v5312
    %v6039 = vunpack.c.l.b16 %v5313
    %v6040 = vunpack.c.h.b16 %v5313
    %v6041 = vunpack.c.l.b16 %v5314
    %v6042 = vunpack.c.h.b16 %v5314
    %v6043 = vunpack.c.l.b16 %v5315
    %v6044 = vunpack.c.h.b16 %v5315
    %v6045 = vunpack.c.l.b16 %v5316
    %v6046 = vunpack.c.h.b16 %v5316
    %v6047 = vunpack.c.l.b16 %v5317
    %v6048 = vunpack.c.h.b16 %v5317
    %v6049 = vunpack.c.l.b16 %v5318
    %v6050 = vunpack.c.h.b16 %v5318
    %v6051 = vunpack.c.l.b16 %v5319
    %v6052 = vunpack.c.h.b16 %v5319
    %v6053 = vunpack.c.l.b16 %v5320
    %v6054 = vunpack.c.h.b16 %v5320
    %v6055 = vunpack.c.l.b16 %v5321
    %v6056 = vunpack.c.h.b16 %v5321
    %v6057 = vunpack.c.l.b16 %v5322
    %v6058 = vunpack.c.h.b16 %v5322
    %v6059 = vunpack.c.l.b16 %v5323
    %v6060 = vunpack.c.h.b16 %v5323
    %v6061 = vunpack.c.l.b16 %v5324
    %v6062 = vunpack.c.h.b16 %v5324
    %v6063 = vunpack.c.l.b16 %v5325
    %v6064 = vunpack.c.h.b16 %v5325
    %v6065 = vunpack.c.l.b16 %v5326
    %v6066 = vunpack.c.h.b16 %v5326
    %v6067 = vunpack.c.l.b16 %v5327
    %v6068 = vunpack.c.h.b16 %v5327
    %v6069 = vunpack.c.l.b16 %v5328
    %v6070 = vunpack.c.h.b16 %v5328
    %v6071 = vunpack.c.l.b16 %v5329
    %v6072 = vunpack.c.h.b16 %v5329
    %v6073 = vunpack.c.l.b16 %v5330
    %v6074 = vunpack.c.h.b16 %v5330
    %v6075 = vunpack.c.l.b16 %v5331
    %v6076 = vunpack.c.h.b16 %v5331
    %v6077 = vunpack.c.l.b16 %v5332
    %v6078 = vunpack.c.h.b16 %v5332
    %v6079 = vunpack.c.l.b16 %v5333
    %v6080 = vunpack.c.h.b16 %v5333
    %v6081 = vunpack.c.l.b16 %v5334
    %v6082 = vunpack.c.h.b16 %v5334
    %v6083 = vunpack.c.l.b16 %v5335
    %v6084 = vunpack.c.h.b16 %v5335
    %v6085 = vunpack.c.l.b16 %v5336
    %v6086 = vunpack.c.h.b16 %v5336
    %v6087 = vunpack.c.l.b16 %v5337
    %v6088 = vunpack.c.h.b16 %v5337
    %v6089 = vunpack.c.l.b16 %v5338
    %v6090 = vunpack.c.h.b16 %v5338
    %v6091 = vunpack.c.l.b16 %v5339
    %v6092 = vunpack.c.h.b16 %v5339
    %v6093 = vunpack.c.l.b16 %v5340
    %v6094 = vunpack.c.h.b16 %v5340
    %v6095 = vunpack.c.l.b16 %v5341
    %v6096 = vunpack.c.h.b16 %v5341
    %v6097 = vunpack.c.l.b16 %v5342
    %v6098 = vunpack.c.h.b16 %v5342
    %v6099 = vunpack.c.l.b16 %v5343
    %v6100 = vunpack.c.h.b16 %v5343
    %v6101 = vunpack.c.l.b16 %v5344
    %v6102 = vunpack.c.h.b16 %v5344
    %v6103 = vunpack.c.l.b16 %v5345
    %v6104 = vunpack.c.h.b16 %v5345
    %v6105 = vunpack.c.l.b16 %v5346
    %v6106 = vunpack.c.h.b16 %v5346
    %v6107 = vunpack.c.l.b16 %v5347
    %v6108 = vunpack.c.h.b16 %v5347
    %v6109 = vunpack.c.l.b16 %v5348
    %v6110 = vunpack.c.h.b16 %v5348
    %v6111 = vunpack.c.l.b16 %v5349
    %v6112 = vunpack.c.h.b16 %v5349
    %v6113 = vunpack.c.l.b16 %v5350
    %v6114 = vunpack.c.h.b16 %v5350
    %v6115 = vunpack.c.l.b16 %v5351
    %v6116 = vunpack.c.h.b16 %v5351
    %v6117 = vunpack.c.l.b16 %v5352
    %v6118 = vunpack.c.h.b16 %v5352
    %v6119 = vunpack.c.l.b16 %v5353
    %v6120 = vunpack.c.h.b16 %v5353
    %v6121 = vunpack.c.l.b16 %v5354
    %v6122 = vunpack.c.h.b16 %v5354
    %v6123 = vunpack.c.l.b16 %v5355
    %v6124 = vunpack.c.h.b16 %v5355
    %v6125 = vunpack.c.l.b16 %v5356
    %v6126 = vunpack.c.h.b16 %v5356
    %v6127 = vunpack.c.l.b16 %v5357
    %v6128 = vunpack.c.h.b16 %v5357
    %v6129 = vunpack.c.l.b16 %v5358
    %v6130 = vunpack.c.h.b16 %v5358
    %v6131 = vpack.c.b16 %v5635, %v5631
    %v6132 = vpack.c.b16 %v5636, %v5632
    %v6133 = vpack.c.b16 %v5637, %v5633
    %v6134 = vpack.c.b16 %v5638, %v5634
    %v6135 = vpack.c.b16 %v5643, %v5639
    %v6136 = vpack.c.b16 %v5644, %v5640
    %v6137 = vpack.c.b16 %v5645, %v5641
    %v6138 = vpack.c.b16 %v5646, %v5642
    %v6139 = vpack.c.b16 %v5651, %v5647
    %v6140 = vpack.c.b16 %v5652, %v5648
    %v6141 = vpack.c.b16 %v5653, %v5649
    %v6142 = vpack.c.b16 %v5654, %v5650
    %v6143 = vpack.c.b16 %v5659, %v5655
    %v6144 = vpack.c.b16 %v5660, %v5656
    %v6145 = vpack.c.b16 %v5661, %v5657
    %v6146 = vpack.c.b16 %v5662, %v5658
    %v6147 = vpack.c.b16 %v5667, %v5663
    %v6148 = vpack.c.b16 %v5668, %v5664
    %v6149 = vpack.c.b16 %v5669, %v5665
    %v6150 = vpack.c.b16 %v5670, %v5666
    %v6151 = vpack.c.b16 %v5675, %v5671
    %v6152 = vpack.c.b16 %v5676, %v5672
    %v6153 = vpack.c.b16 %v5677, %v5673
    %v6154 = vpack.c.b16 %v5678, %v5674
    %v6155 = vpack.c.b16 %v5683, %v5679
    %v6156 = vpack.c.b16 %v5684, %v5680
    %v6157 = vpack.c.b16 %v5685, %v5681
    %v6158 = vpack.c.b16 %v5686, %v5682
    %v6159 = vpack.c.b16 %v5691, %v5687
    %v6160 = vpack.c.b16 %v5692, %v5688
    %v6161 = vpack.c.b16 %v5693, %v5689
    %v6162 = vpack.c.b16 %v5694, %v5690
    %v6163 = vpack.c.b16 %v5699, %v5695
    %v6164 = vpack.c.b16 %v5700, %v5696
    %v6165 = vpack.c.b16 %v5701, %v5697
    %v6166 = vpack.c.b16 %v5702, %v5698
    %v6167 = vpack.c.b16 %v5707, %v5703
    %v6168 = vpack.c.b16 %v5708, %v5704
    %v6169 = vpack.c.b16 %v5709, %v5705
    %v6170 = vpack.c.b16 %v5710, %v5706
    %v6171 = vpack.c.b16 %v5715, %v5711
    %v6172 = vpack.c.b16 %v5716, %v5712
    %v6173 = vpack.c.b16 %v5717, %v5713
    %v6174 = vpack.c.b16 %v5718, %v5714
    %v6175 = vpack.c.b16 %v5723, %v5719
    %v6176 = vpack.c.b16 %v5724, %v5720
    %v6177 = vpack.c.b16 %v5725, %v5721
    %v6178 = vpack.c.b16 %v5726, %v5722
    %v6179 = vpack.c.b16 %v5731, %v5727
    %v6180 = vpack.c.b16 %v5732, %v5728
    %v6181 = vpack.c.b16 %v5733, %v5729
    %v6182 = vpack.c.b16 %v5734, %v5730
    %v6183 = vpack.c.b16 %v5739, %v5735
    %v6184 = vpack.c.b16 %v5740, %v5736
    %v6185 = vpack.c.b16 %v5741, %v5737
    %v6186 = vpack.c.b16 %v5742, %v5738
    %v6187 = vpack.c.b16 %v5747, %v5743
    %v6188 = vpack.c.b16 %v5748, %v5744
    %v6189 = vpack.c.b16 %v5749, %v5745
    %v6190 = vpack.c.b16 %v5750, %v5746
    %v6191 = vpack.c.b16 %v5755, %v5751
    %v6192 = vpack.c.b16 %v5756, %v5752
    %v6193 = vpack.c.b16 %v5757, %v5753
    %v6194 = vpack.c.b16 %v5758, %v5754
    %v6195 = vpack.c.b16 %v5763, %v5759
    %v6196 = vpack.c.b16 %v5764, %v5760
    %v6197 = vpack.c.b16 %v5765, %v5761
    %v6198 = vpack.c.b16 %v5766, %v5762
    %v6199 = vpack.c.b16 %v5771, %v5767
    %v6200 = vpack.c.b16 %v5772, %v5768
    %v6201 = vpack.c.b16 %v5773, %v5769
    %v6202 = vpack.c.b16 %v5774, %v5770
    %v6203 = vpack.c.b16 %v5779, %v5775
    %v6204 = vpack.c.b16 %v5780, %v5776
    %v6205 = vpack.c.b16 %v5781, %v5777
    %v6206 = vpack.c.b16 %v5782, %v5778
    %v6207 = vpack.c.b16 %v5787, %v5783
    %v6208 = vpack.c.b16 %v5788, %v5784
    %v6209 = vpack.c.b16 %v5789, %v5785
    %v6210 = vpack.c.b16 %v5790, %v5786
    %v6211 = vpack.c.b16 %v5795, %v5791
    %v6212 = vpack.c.b16 %v5796, %v5792
    %v6213 = vpack.c.b16 %v5797, %v5793
    %v6214 = vpack.c.b16 %v5798, %v5794
    %v6215 = vpack.c.b16 %v5803, %v5799
    %v6216 = vpack.c.b16 %v5804, %v5800
    %v6217 = vpack.c.b16 %v5805, %v5801
    %v6218 = vpack.c.b16 %v5806, %v5802
    %v6219 = vpack.c.b16 %v5811, %v5807
    %v6220 = vpack.c.b16 %v5812, %v5808
    %v6221 = vpack.c.b16 %v5813, %v5809
    %v6222 = vpack.c.b16 %v5814, %v5810
    %v6223 = vpack.c.b16 %v5819, %v5815
    %v6224 = vpack.c.b16 %v5820, %v5816
    %v6225 = vpack.c.b16 %v5821, %v5817
    %v6226 = vpack.c.b16 %v5822, %v5818
    %v6227 = vpack.c.b16 %v5827, %v5823
    %v6228 = vpack.c.b16 %v5828, %v5824
    %v6229 = vpack.c.b16 %v5829, %v5825
    %v6230 = vpack.c.b16 %v5830, %v5826
    %v6231 = vpack.c.b16 %v5835, %v5831
    %v6232 = vpack.c.b16 %v5836, %v5832
    %v6233 = vpack.c.b16 %v5837, %v5833
    %v6234 = vpack.c.b16 %v5838, %v5834
    %v6235 = vpack.c.b16 %v5843, %v5839
    %v6236 = vpack.c.b16 %v5844, %v5840
    %v6237 = vpack.c.b16 %v5845, %v5841
    %v6238 = vpack.c.b16 %v5846, %v5842
    %v6239 = vpack.c.b16 %v5851, %v5847
    %v6240 = vpack.c.b16 %v5852, %v5848
    %v6241 = vpack.c.b16 %v5853, %v5849
    %v6242 = vpack.c.b16 %v5854, %v5850
    %v6243 = vpack.c.b16 %v5859, %v5855
    %v6244 = vpack.c.b16 %v5860, %v5856
    %v6245 = vpack.c.b16 %v5861, %v5857
    %v6246 = vpack.c.b16 %v5862, %v5858
    %v6247 = vpack.c.b16 %v5867, %v5863
    %v6248 = vpack.c.b16 %v5868, %v5864
    %v6249 = vpack.c.b16 %v5869, %v5865
    %v6250 = vpack.c.b16 %v5870, %v5866
    %v6251 = vpack.c.b16 %v5875, %v5871
    %v6252 = vpack.c.b16 %v5876, %v5872
    %v6253 = vpack.c.b16 %v5877, %v5873
    %v6254 = vpack.c.b16 %v5878, %v5874
    %v6255 = vpack.c.b16 %v5883, %v5879
    %v6256 = vpack.c.b16 %v5884, %v5880
    %v6257 = vpack.c.b16 %v5885, %v5881
    %v6258 = vpack.c.b16 %v5886, %v5882
    %v6259 = vpack.c.b16 %v5891, %v5887
    %v6260 = vpack.c.b16 %v5892, %v5888
    %v6261 = vpack.c.b16 %v5893, %v5889
    %v6262 = vpack.c.b16 %v5894, %v5890
    %v6263 = vpack.c.b16 %v5899, %v5895
    %v6264 = vpack.c.b16 %v5900, %v5896
    %v6265 = vpack.c.b16 %v5901, %v5897
    %v6266 = vpack.c.b16 %v5902, %v5898
    %v6267 = vpack.c.b16 %v5907, %v5903
    %v6268 = vpack.c.b16 %v5908, %v5904
    %v6269 = vpack.c.b16 %v5909, %v5905
    %v6270 = vpack.c.b16 %v5910, %v5906
    %v6271 = vpack.c.b16 %v5915, %v5911
    %v6272 = vpack.c.b16 %v5916, %v5912
    %v6273 = vpack.c.b16 %v5917, %v5913
    %v6274 = vpack.c.b16 %v5918, %v5914
    %v6275 = vpack.c.b16 %v5923, %v5919
    %v6276 = vpack.c.b16 %v5924, %v5920
    %v6277 = vpack.c.b16 %v5925, %v5921
    %v6278 = vpack.c.b16 %v5926, %v5922
    %v6279 = vpack.c.b16 %v5931, %v5927
    %v6280 = vpack.c.b16 %v5932, %v5928
    %v6281 = vpack.c.b16 %v5933, %v5929
    %v6282 = vpack.c.b16 %v5934, %v5930
    %v6283 = vpack.c.b16 %v5939, %v5935
    %v6284 = vpack.c.b16 %v5940, %v5936
    %v6285 = vpack.c.b16 %v5941, %v5937
    %v6286 = vpack.c.b16 %v5942, %v5938
    %v6287 = vpack.c.b16 %v5947, %v5943
    %v6288 = vpack.c.b16 %v5948, %v5944
    %v6289 = vpack.c.b16 %v5949, %v5945
    %v6290 = vpack.c.b16 %v5950, %v5946
    %v6291 = vpack.c.b16 %v5955, %v5951
    %v6292 = vpack.c.b16 %v5956, %v5952
    %v6293 = vpack.c.b16 %v5957, %v5953
    %v6294 = vpack.c.b16 %v5958, %v5954
    %v6295 = vpack.c.b16 %v5963, %v5959
    %v6296 = vpack.c.b16 %v5964, %v5960
    %v6297 = vpack.c.b16 %v5965, %v5961
    %v6298 = vpack.c.b16 %v5966, %v5962
    %v6299 = vpack.c.b16 %v5971, %v5967
    %v6300 = vpack.c.b16 %v5972, %v5968
    %v6301 = vpack.c.b16 %v5973, %v5969
    %v6302 = vpack.c.b16 %v5974, %v5970
    %v6303 = vpack.c.b16 %v5979, %v5975
    %v6304 = vpack.c.b16 %v5980, %v5976
    %v6305 = vpack.c.b16 %v5981, %v5977
    %v6306 = vpack.c.b16 %v5982, %v5978
    %v6307 = vpack.c.b16 %v5987, %v5983
    %v6308 = vpack.c.b16 %v5988, %v5984
    %v6309 = vpack.c.b16 %v5989, %v5985
    %v6310 = vpack.c.b16 %v5990, %v5986
    %v6311 = vpack.c.b16 %v5995, %v5991
    %v6312 = vpack.c.b16 %v5996, %v5992
    %v6313 = vpack.c.b16 %v5997, %v5993
    %v6314 = vpack.c.b16 %v5998, %v5994
    %v6315 = vpack.c.b16 %v6003, %v5999
    %v6316 = vpack.c.b16 %v6004, %v6000
    %v6317 = vpack.c.b16 %v6005, %v6001
    %v6318 = vpack.c.b16 %v6006, %v6002
    %v6319 = vpack.c.b16 %v6011, %v6007
    %v6320 = vpack.c.b16 %v6012, %v6008
    %v6321 = vpack.c.b16 %v6013, %v6009
    %v6322 = vpack.c.b16 %v6014, %v6010
    %v6323 = vpack.c.b16 %v6019, %v6015
    %v6324 = vpack.c.b16 %v6020, %v6016
    %v6325 = vpack.c.b16 %v6021, %v6017
    %v6326 = vpack.c.b16 %v6022, %v6018
    %v6327 = vpack.c.b16 %v6027, %v6023
    %v6328 = vpack.c.b16 %v6028, %v6024
    %v6329 = vpack.c.b16 %v6029, %v6025
    %v6330 = vpack.c.b16 %v6030, %v6026
    %v6331 = vpack.c.b16 %v6035, %v6031
    %v6332 = vpack.c.b16 %v6036, %v6032
    %v6333 = vpack.c.b16 %v6037, %v6033
    %v6334 = vpack.c.b16 %v6038, %v6034
    %v6335 = vpack.c.b16 %v6043, %v6039
    %v6336 = vpack.c.b16 %v6044, %v6040
    %v6337 = vpack.c.b16 %v6045, %v6041
    %v6338 = vpack.c.b16 %v6046, %v6042
    %v6339 = vpack.c.b16 %v6051, %v6047
    %v6340 = vpack.c.b16 %v6052, %v6048
    %v6341 = vpack.c.b16 %v6053, %v6049
    %v6342 = vpack.c.b16 %v6054, %v6050
    %v6343 = vpack.c.b16 %v6059, %v6055
    %v6344 = vpack.c.b16 %v6060, %v6056
    %v6345 = vpack.c.b16 %v6061, %v6057
    %v6346 = vpack.c.b16 %v6062, %v6058
    %v6347 = vpack.c.b16 %v6067, %v6063
    %v6348 = vpack.c.b16 %v6068, %v6064
    %v6349 = vpack.c.b16 %v6069, %v6065
    %v6350 = vpack.c.b16 %v6070, %v6066
    %v6351 = vpack.c.b16 %v6075, %v6071
    %v6352 = vpack.c.b16 %v6076, %v6072
    %v6353 = vpack.c.b16 %v6077, %v6073
    %v6354 = vpack.c.b16 %v6078, %v6074
    %v6355 = vpack.c.b16 %v6083, %v6079
    %v6356 = vpack.c.b16 %v6084, %v6080
    %v6357 = vpack.c.b16 %v6085, %v6081
    %v6358 = vpack.c.b16 %v6086, %v6082
    %v6359 = vpack.c.b16 %v6091, %v6087
    %v6360 = vpack.c.b16 %v6092, %v6088
    %v6361 = vpack.c.b16 %v6093, %v6089
    %v6362 = vpack.c.b16 %v6094, %v6090
    %v6363 = vpack.c.b16 %v6099, %v6095
    %v6364 = vpack.c.b16 %v6100, %v6096
    %v6365 = vpack.c.b16 %v6101, %v6097
    %v6366 = vpack.c.b16 %v6102, %v6098
    %v6367 = vpack.c.b16 %v6107, %v6103
    %v6368 = vpack.c.b16 %v6108, %v6104
    %v6369 = vpack.c.b16 %v6109, %v6105
    %v6370 = vpack.c.b16 %v6110, %v6106
    %v6371 = vpack.c.b16 %v6115, %v6111
    %v6372 = vpack.c.b16 %v6116, %v6112
    %v6373 = vpack.c.b16 %v6117, %v6113
    %v6374 = vpack.c.b16 %v6118, %v6114
    %v6375 = vpack.c.b16 %v6123, %v6119
    %v6376 = vpack.c.b16 %v6124, %v6120
    %v6377 = vpack.c.b16 %v6125, %v6121
    %v6378 = vpack.c.b16 %v6126, %v6122
    %v6379 = vpack.c.b16 %v6127, %v6127
    %v6380 = vpack.c.b16 %v6128, %v6128
    %v6381 = vpack.c.b16 %v6129, %v6129
    %v6382 = vpack.c.b16 %v6130, %v6130
    %vm6631 = vcmask 850944
    %v6633 = vsel %vm6631, %v5108, 0
    %v6636 = vsel %vm221, %v6379, 0
    %v6639 = vsel %vm221, %v6380, 0
    %v6642 = vsel %vm221, %v6381, 0
    %v6645 = vsel %vm221, %v6382, 0
    %6647 = vmatprep.subr.bf16.mxu0 %v6160
    %6648 = vmatpush1.bf16.msra.mxu0 %v6159
    %6649 = vmatprep.subr.bf16.mxu0 %v6156
    %6650 = vmatpush1.bf16.msra.mxu0 %v6155
    %6651 = vmatprep.subr.bf16.mxu0 %v6152
    %6652 = vmatpush1.bf16.msra.mxu0 %v6151
    %6653 = vmatprep.subr.bf16.mxu0 %v6148
    %6654 = vmatpush1.bf16.msra.mxu0 %v6147
    %6655 = vmatprep.subr.bf16.mxu0 %v6144
    %6656 = vmatpush1.bf16.msra.mxu0 %v6143
    %6657 = vmatprep.subr.bf16.mxu0 %v6140
    %6658 = vmatpush1.bf16.msra.mxu0 %v6139
    %6659 = vmatprep.subr.bf16.mxu0 %v6136
    %6660 = vmatpush1.bf16.msra.mxu0 %v6135
    %6661 = vmatprep.subr.bf16.mxu0 %v6132
    %6662 = vmatpush1.bf16.msra.mxu0 %v6131
    %6663 = vmatprep.subr.bf16.mxu0 %v6192
    %6664 = vmatpush2.bf16.msra.mxu0 %v6191
    %6665 = vmatprep.subr.bf16.mxu0 %v6188
    %6666 = vmatpush2.bf16.msra.mxu0 %v6187
    %6667 = vmatprep.subr.bf16.mxu0 %v6184
    %6668 = vmatpush2.bf16.msra.mxu0 %v6183
    %6669 = vmatprep.subr.bf16.mxu0 %v6180
    %6670 = vmatpush2.bf16.msra.mxu0 %v6179
    %6671 = vmatprep.subr.bf16.mxu0 %v6176
    %6672 = vmatpush2.bf16.msra.mxu0 %v6175
    %6673 = vmatprep.subr.bf16.mxu0 %v6172
    %6674 = vmatpush2.bf16.msra.mxu0 %v6171
    %6675 = vmatprep.subr.bf16.mxu0 %v6168
    %6676 = vmatpush2.bf16.msra.mxu0 %v6167
    %6677 = vmatprep.subr.bf16.mxu0 %v6164
    %6678 = vmatpush2.bf16.msra.mxu0 %v6163
    %6679 = vmatprep.mubr.bf16.mxu0 %v5102
    %6680 = vmatmul.mubr.bf16.gmra.mxu0 %v5101
    %v6681 = vpop.f32.mrf.mxu0
    %v6682 = vadd.f32 %v5364, %v6681
    %v6683 = vpop.f32.mrf.mxu0
    %v6684 = vadd.f32 %v5368, %v6683
    %v6685 = vpop.f32.mrf.mxu0
    %v6686 = vpop.f32.mrf.mxu0
    %6687 = vdwg.mxu0
    %6688 = vmatprep.subr.bf16.mxu0 %v6224
    %6689 = vmatpush1.bf16.msra.mxu0 %v6223
    %6690 = vmatprep.subr.bf16.mxu0 %v6220
    %6691 = vmatpush1.bf16.msra.mxu0 %v6219
    %6692 = vmatprep.subr.bf16.mxu0 %v6216
    %6693 = vmatpush1.bf16.msra.mxu0 %v6215
    %6694 = vmatprep.subr.bf16.mxu0 %v6212
    %6695 = vmatpush1.bf16.msra.mxu0 %v6211
    %6696 = vmatprep.subr.bf16.mxu0 %v6208
    %6697 = vmatpush1.bf16.msra.mxu0 %v6207
    %6698 = vmatprep.subr.bf16.mxu0 %v6204
    %6699 = vmatpush1.bf16.msra.mxu0 %v6203
    %6700 = vmatprep.subr.bf16.mxu0 %v6200
    %6701 = vmatpush1.bf16.msra.mxu0 %v6199
    %6702 = vmatprep.subr.bf16.mxu0 %v6196
    %6703 = vmatpush1.bf16.msra.mxu0 %v6195
    %6704 = vmatprep.subr.bf16.mxu0 %v6256
    %6705 = vmatpush2.bf16.msra.mxu0 %v6255
    %6706 = vmatprep.subr.bf16.mxu0 %v6252
    %6707 = vmatpush2.bf16.msra.mxu0 %v6251
    %6708 = vmatprep.subr.bf16.mxu0 %v6248
    %6709 = vmatpush2.bf16.msra.mxu0 %v6247
    %6710 = vmatprep.subr.bf16.mxu0 %v6244
    %6711 = vmatpush2.bf16.msra.mxu0 %v6243
    %6712 = vmatprep.subr.bf16.mxu0 %v6240
    %6713 = vmatpush2.bf16.msra.mxu0 %v6239
    %6714 = vmatprep.subr.bf16.mxu0 %v6236
    %6715 = vmatpush2.bf16.msra.mxu0 %v6235
    %6716 = vmatprep.subr.bf16.mxu0 %v6232
    %6717 = vmatpush2.bf16.msra.mxu0 %v6231
    %6718 = vmatprep.subr.bf16.mxu0 %v6228
    %6719 = vmatpush2.bf16.msra.mxu0 %v6227
    %6720 = vmatprep.mubr.bf16.mxu0 %v5104
    %6721 = vmatmul.mubr.bf16.gmra.mxu0 %v5103
    %v6722 = vpop.f32.mrf.mxu0
    %v6723 = vadd.f32 %v6682, %v6722
    %v6724 = vpop.f32.mrf.mxu0
    %v6725 = vadd.f32 %v6684, %v6724
    %v6726 = vpop.f32.mrf.mxu0
    %v6727 = vpop.f32.mrf.mxu0
    %6728 = vdwg.mxu0
    %6729 = vmatprep.subr.bf16.mxu0 %v6288
    %6730 = vmatpush1.bf16.msra.mxu0 %v6287
    %6731 = vmatprep.subr.bf16.mxu0 %v6284
    %6732 = vmatpush1.bf16.msra.mxu0 %v6283
    %6733 = vmatprep.subr.bf16.mxu0 %v6280
    %6734 = vmatpush1.bf16.msra.mxu0 %v6279
    %6735 = vmatprep.subr.bf16.mxu0 %v6276
    %6736 = vmatpush1.bf16.msra.mxu0 %v6275
    %6737 = vmatprep.subr.bf16.mxu0 %v6272
    %6738 = vmatpush1.bf16.msra.mxu0 %v6271
    %6739 = vmatprep.subr.bf16.mxu0 %v6268
    %6740 = vmatpush1.bf16.msra.mxu0 %v6267
    %6741 = vmatprep.subr.bf16.mxu0 %v6264
    %6742 = vmatpush1.bf16.msra.mxu0 %v6263
    %6743 = vmatprep.subr.bf16.mxu0 %v6260
    %6744 = vmatpush1.bf16.msra.mxu0 %v6259
    %6745 = vmatprep.subr.bf16.mxu0 %v6320
    %6746 = vmatpush2.bf16.msra.mxu0 %v6319
    %6747 = vmatprep.subr.bf16.mxu0 %v6316
    %6748 = vmatpush2.bf16.msra.mxu0 %v6315
    %6749 = vmatprep.subr.bf16.mxu0 %v6312
    %6750 = vmatpush2.bf16.msra.mxu0 %v6311
    %6751 = vmatprep.subr.bf16.mxu0 %v6308
    %6752 = vmatpush2.bf16.msra.mxu0 %v6307
    %6753 = vmatprep.subr.bf16.mxu0 %v6304
    %6754 = vmatpush2.bf16.msra.mxu0 %v6303
    %6755 = vmatprep.subr.bf16.mxu0 %v6300
    %6756 = vmatpush2.bf16.msra.mxu0 %v6299
    %6757 = vmatprep.subr.bf16.mxu0 %v6296
    %6758 = vmatpush2.bf16.msra.mxu0 %v6295
    %6759 = vmatprep.subr.bf16.mxu0 %v6292
    %6760 = vmatpush2.bf16.msra.mxu0 %v6291
    %6761 = vmatprep.mubr.bf16.mxu0 %v5106
    %6762 = vmatmul.mubr.bf16.gmra.mxu0 %v5105
    %v6763 = vpop.f32.mrf.mxu0
    %v6764 = vadd.f32 %v6723, %v6763
    %v6765 = vpop.f32.mrf.mxu0
    %v6766 = vadd.f32 %v6725, %v6765
    %v6767 = vpop.f32.mrf.mxu0
    %v6768 = vpop.f32.mrf.mxu0
    %6769 = vdwg.mxu0
    %6770 = vmatprep.subr.bf16.mxu0 %v6352
    %6771 = vmatpush1.bf16.msra.mxu0 %v6351
    %6772 = vmatprep.subr.bf16.mxu0 %v6348
    %6773 = vmatpush1.bf16.msra.mxu0 %v6347
    %6774 = vmatprep.subr.bf16.mxu0 %v6344
    %6775 = vmatpush1.bf16.msra.mxu0 %v6343
    %6776 = vmatprep.subr.bf16.mxu0 %v6340
    %6777 = vmatpush1.bf16.msra.mxu0 %v6339
    %6778 = vmatprep.subr.bf16.mxu0 %v6336
    %6779 = vmatpush1.bf16.msra.mxu0 %v6335
    %6780 = vmatprep.subr.bf16.mxu0 %v6332
    %6781 = vmatpush1.bf16.msra.mxu0 %v6331
    %6782 = vmatprep.subr.bf16.mxu0 %v6328
    %6783 = vmatpush1.bf16.msra.mxu0 %v6327
    %6784 = vmatprep.subr.bf16.mxu0 %v6324
    %6785 = vmatpush1.bf16.msra.mxu0 %v6323
    %6786 = vmatprep.subr.bf16.mxu0 0
    %6787 = vmatpush2.bf16.msra.mxu0 0
    %6788 = vmatprep.subr.bf16.mxu0 %v6639
    %6789 = vmatpush2.bf16.msra.mxu0 %v6636
    %6790 = vmatprep.subr.bf16.mxu0 %v6376
    %6791 = vmatpush2.bf16.msra.mxu0 %v6375
    %6792 = vmatprep.subr.bf16.mxu0 %v6372
    %6793 = vmatpush2.bf16.msra.mxu0 %v6371
    %6794 = vmatprep.subr.bf16.mxu0 %v6368
    %6795 = vmatpush2.bf16.msra.mxu0 %v6367
    %6796 = vmatprep.subr.bf16.mxu0 %v6364
    %6797 = vmatpush2.bf16.msra.mxu0 %v6363
    %6798 = vmatprep.subr.bf16.mxu0 %v6360
    %6799 = vmatpush2.bf16.msra.mxu0 %v6359
    %6800 = vmatprep.subr.bf16.mxu0 %v6356
    %6801 = vmatpush2.bf16.msra.mxu0 %v6355
    %6802 = vmatprep.mubr.bf16.mxu0 %v6633
    %6803 = vmatmul.mubr.bf16.gmra.mxu0 %v5107
    %v6804 = vpop.f32.mrf.mxu0
    %v6805 = vadd.f32 %v6764, %v6804
    %v6806 = vpop.f32.mrf.mxu0
    %v6807 = vadd.f32 %v6766, %v6806
    %v6808 = vpop.f32.mrf.mxu0
    %v6809 = vpop.f32.mrf.mxu0
    %6810 = vdwg.mxu0
    %6811 = vmatprep.subr.bf16.mxu0 %v6162
    %6812 = vmatpush1.bf16.msra.mxu0 %v6161
    %6813 = vmatprep.subr.bf16.mxu0 %v6158
    %6814 = vmatpush1.bf16.msra.mxu0 %v6157
    %6815 = vmatprep.subr.bf16.mxu0 %v6154
    %6816 = vmatpush1.bf16.msra.mxu0 %v6153
    %6817 = vmatprep.subr.bf16.mxu0 %v6150
    %6818 = vmatpush1.bf16.msra.mxu0 %v6149
    %6819 = vmatprep.subr.bf16.mxu0 %v6146
    %6820 = vmatpush1.bf16.msra.mxu0 %v6145
    %6821 = vmatprep.subr.bf16.mxu0 %v6142
    %6822 = vmatpush1.bf16.msra.mxu0 %v6141
    %6823 = vmatprep.subr.bf16.mxu0 %v6138
    %6824 = vmatpush1.bf16.msra.mxu0 %v6137
    %6825 = vmatprep.subr.bf16.mxu0 %v6134
    %6826 = vmatpush1.bf16.msra.mxu0 %v6133
    %6827 = vmatprep.subr.bf16.mxu0 %v6194
    %6828 = vmatpush2.bf16.msra.mxu0 %v6193
    %6829 = vmatprep.subr.bf16.mxu0 %v6190
    %6830 = vmatpush2.bf16.msra.mxu0 %v6189
    %6831 = vmatprep.subr.bf16.mxu0 %v6186
    %6832 = vmatpush2.bf16.msra.mxu0 %v6185
    %6833 = vmatprep.subr.bf16.mxu0 %v6182
    %6834 = vmatpush2.bf16.msra.mxu0 %v6181
    %6835 = vmatprep.subr.bf16.mxu0 %v6178
    %6836 = vmatpush2.bf16.msra.mxu0 %v6177
    %6837 = vmatprep.subr.bf16.mxu0 %v6174
    %6838 = vmatpush2.bf16.msra.mxu0 %v6173
    %6839 = vmatprep.subr.bf16.mxu0 %v6170
    %6840 = vmatpush2.bf16.msra.mxu0 %v6169
    %6841 = vmatprep.subr.bf16.mxu0 %v6166
    %6842 = vmatpush2.bf16.msra.mxu0 %v6165
    %6843 = vmatprep.mubr.bf16.mxu0 %v5102
    %6844 = vmatmul.mubr.bf16.gmra.mxu0 %v5101
    %v6845 = vpop.f32.mrf.mxu0
    %v6846 = vadd.f32 %v5372, %v6845
    %v6847 = vpop.f32.mrf.mxu0
    %v6848 = vadd.f32 %v5376, %v6847
    %v6849 = vpop.f32.mrf.mxu0
    %v6850 = vpop.f32.mrf.mxu0
    %6851 = vdwg.mxu0
    %6852 = vmatprep.subr.bf16.mxu0 %v6226
    %6853 = vmatpush1.bf16.msra.mxu0 %v6225
    %6854 = vmatprep.subr.bf16.mxu0 %v6222
    %6855 = vmatpush1.bf16.msra.mxu0 %v6221
    %6856 = vmatprep.subr.bf16.mxu0 %v6218
    %6857 = vmatpush1.bf16.msra.mxu0 %v6217
    %6858 = vmatprep.subr.bf16.mxu0 %v6214
    %6859 = vmatpush1.bf16.msra.mxu0 %v6213
    %6860 = vmatprep.subr.bf16.mxu0 %v6210
    %6861 = vmatpush1.bf16.msra.mxu0 %v6209
    %6862 = vmatprep.subr.bf16.mxu0 %v6206
    %6863 = vmatpush1.bf16.msra.mxu0 %v6205
    %6864 = vmatprep.subr.bf16.mxu0 %v6202
    %6865 = vmatpush1.bf16.msra.mxu0 %v6201
    %6866 = vmatprep.subr.bf16.mxu0 %v6198
    %6867 = vmatpush1.bf16.msra.mxu0 %v6197
    %6868 = vmatprep.subr.bf16.mxu0 %v6258
    %6869 = vmatpush2.bf16.msra.mxu0 %v6257
    %6870 = vmatprep.subr.bf16.mxu0 %v6254
    %6871 = vmatpush2.bf16.msra.mxu0 %v6253
    %6872 = vmatprep.subr.bf16.mxu0 %v6250
    %6873 = vmatpush2.bf16.msra.mxu0 %v6249
    %6874 = vmatprep.subr.bf16.mxu0 %v6246
    %6875 = vmatpush2.bf16.msra.mxu0 %v6245
    %6876 = vmatprep.subr.bf16.mxu0 %v6242
    %6877 = vmatpush2.bf16.msra.mxu0 %v6241
    %6878 = vmatprep.subr.bf16.mxu0 %v6238
    %6879 = vmatpush2.bf16.msra.mxu0 %v6237
    %6880 = vmatprep.subr.bf16.mxu0 %v6234
    %6881 = vmatpush2.bf16.msra.mxu0 %v6233
    %6882 = vmatprep.subr.bf16.mxu0 %v6230
    %6883 = vmatpush2.bf16.msra.mxu0 %v6229
    %6884 = vmatprep.mubr.bf16.mxu0 %v5104
    %6885 = vmatmul.mubr.bf16.gmra.mxu0 %v5103
    %v6886 = vpop.f32.mrf.mxu0
    %v6887 = vadd.f32 %v6846, %v6886
    %v6888 = vpop.f32.mrf.mxu0
    %v6889 = vadd.f32 %v6848, %v6888
    %v6890 = vpop.f32.mrf.mxu0
    %v6891 = vpop.f32.mrf.mxu0
    %6892 = vdwg.mxu0
    %6893 = vmatprep.subr.bf16.mxu0 %v6290
    %6894 = vmatpush1.bf16.msra.mxu0 %v6289
    %6895 = vmatprep.subr.bf16.mxu0 %v6286
    %6896 = vmatpush1.bf16.msra.mxu0 %v6285
    %6897 = vmatprep.subr.bf16.mxu0 %v6282
    %6898 = vmatpush1.bf16.msra.mxu0 %v6281
    %6899 = vmatprep.subr.bf16.mxu0 %v6278
    %6900 = vmatpush1.bf16.msra.mxu0 %v6277
    %6901 = vmatprep.subr.bf16.mxu0 %v6274
    %6902 = vmatpush1.bf16.msra.mxu0 %v6273
    %6903 = vmatprep.subr.bf16.mxu0 %v6270
    %6904 = vmatpush1.bf16.msra.mxu0 %v6269
    %6905 = vmatprep.subr.bf16.mxu0 %v6266
    %6906 = vmatpush1.bf16.msra.mxu0 %v6265
    %6907 = vmatprep.subr.bf16.mxu0 %v6262
    %6908 = vmatpush1.bf16.msra.mxu0 %v6261
    %6909 = vmatprep.subr.bf16.mxu0 %v6322
    %6910 = vmatpush2.bf16.msra.mxu0 %v6321
    %6911 = vmatprep.subr.bf16.mxu0 %v6318
    %6912 = vmatpush2.bf16.msra.mxu0 %v6317
    %6913 = vmatprep.subr.bf16.mxu0 %v6314
    %6914 = vmatpush2.bf16.msra.mxu0 %v6313
    %6915 = vmatprep.subr.bf16.mxu0 %v6310
    %6916 = vmatpush2.bf16.msra.mxu0 %v6309
    %6917 = vmatprep.subr.bf16.mxu0 %v6306
    %6918 = vmatpush2.bf16.msra.mxu0 %v6305
    %6919 = vmatprep.subr.bf16.mxu0 %v6302
    %6920 = vmatpush2.bf16.msra.mxu0 %v6301
    %6921 = vmatprep.subr.bf16.mxu0 %v6298
    %6922 = vmatpush2.bf16.msra.mxu0 %v6297
    %6923 = vmatprep.subr.bf16.mxu0 %v6294
    %6924 = vmatpush2.bf16.msra.mxu0 %v6293
    %6925 = vmatprep.mubr.bf16.mxu0 %v5106
    %6926 = vmatmul.mubr.bf16.gmra.mxu0 %v5105
    %v6927 = vpop.f32.mrf.mxu0
    %v6928 = vadd.f32 %v6887, %v6927
    %v6929 = vpop.f32.mrf.mxu0
    %v6930 = vadd.f32 %v6889, %v6929
    %v6931 = vpop.f32.mrf.mxu0
    %v6932 = vpop.f32.mrf.mxu0
    %6933 = vdwg.mxu0
    %6934 = vmatprep.subr.bf16.mxu0 %v6354
    %6935 = vmatpush1.bf16.msra.mxu0 %v6353
    %6936 = vmatprep.subr.bf16.mxu0 %v6350
    %6937 = vmatpush1.bf16.msra.mxu0 %v6349
    %6938 = vmatprep.subr.bf16.mxu0 %v6346
    %6939 = vmatpush1.bf16.msra.mxu0 %v6345
    %6940 = vmatprep.subr.bf16.mxu0 %v6342
    %6941 = vmatpush1.bf16.msra.mxu0 %v6341
    %6942 = vmatprep.subr.bf16.mxu0 %v6338
    %6943 = vmatpush1.bf16.msra.mxu0 %v6337
    %6944 = vmatprep.subr.bf16.mxu0 %v6334
    %6945 = vmatpush1.bf16.msra.mxu0 %v6333
    %6946 = vmatprep.subr.bf16.mxu0 %v6330
    %6947 = vmatpush1.bf16.msra.mxu0 %v6329
    %6948 = vmatprep.subr.bf16.mxu0 %v6326
    %6949 = vmatpush1.bf16.msra.mxu0 %v6325
    %6950 = vmatprep.subr.bf16.mxu0 0
    %6951 = vmatpush2.bf16.msra.mxu0 0
    %6952 = vmatprep.subr.bf16.mxu0 %v6645
    %6953 = vmatpush2.bf16.msra.mxu0 %v6642
    %6954 = vmatprep.subr.bf16.mxu0 %v6378
    %6955 = vmatpush2.bf16.msra.mxu0 %v6377
    %6956 = vmatprep.subr.bf16.mxu0 %v6374
    %6957 = vmatpush2.bf16.msra.mxu0 %v6373
    %6958 = vmatprep.subr.bf16.mxu0 %v6370
    %6959 = vmatpush2.bf16.msra.mxu0 %v6369
    %6960 = vmatprep.subr.bf16.mxu0 %v6366
    %6961 = vmatpush2.bf16.msra.mxu0 %v6365
    %6962 = vmatprep.subr.bf16.mxu0 %v6362
    %6963 = vmatpush2.bf16.msra.mxu0 %v6361
    %6964 = vmatprep.subr.bf16.mxu0 %v6358
    %6965 = vmatpush2.bf16.msra.mxu0 %v6357
    %6966 = vmatprep.mubr.bf16.mxu0 %v6633
    %6967 = vmatmul.mubr.bf16.gmra.mxu0 %v5107
    %v6968 = vpop.f32.mrf.mxu0
    %v6969 = vadd.f32 %v6928, %v6968
    %v6970 = vpop.f32.mrf.mxu0
    %v6971 = vadd.f32 %v6930, %v6970
    %v6972 = vpop.f32.mrf.mxu0
    %v6973 = vpop.f32.mrf.mxu0
    %6974 = vdwg.mxu0
    %v6975 = vmax.f32 %v6805, 0.0
    %v6976 = vmax.f32 %v6807, 0.0
    %v6977 = vmax.f32 %v6969, 0.0
    %v6978 = vmax.f32 %v6971, 0.0
    %v6979 = vpack.c.bf16 %v6975, %v6975
    %v6980 = vpack.c.bf16 %v6976, %v6976
    %v6981 = vpack.c.bf16 %v6977, %v6977
    %v6982 = vpack.c.bf16 %v6978, %v6978
    %v6983 = vld [vmem:[%s7] sm:$0xf]
    %v6984 = vld [vmem:[%s7 + $0x4] sm:$0xf]
    %v6985 = vld [vmem:[%s7 + $0x8] sm:$0xf]
    %v6986 = vld [vmem:[%s7 + $0xc] sm:$0xf]
    %v6987 = vld [vmem:[%s7 + $0x10] sm:$0xf]
    %v6988 = vld [vmem:[%s7 + $0x14] sm:$0xf]
    %v6989 = vld [vmem:[%s7 + $0x18] sm:$0xf]
    %v6990 = vld [vmem:[%s7 + $0x1c] sm:$0xf]
    %v6991 = vld [vmem:[%s7 + $0x20] sm:$0xf]
    %v6992 = vld [vmem:[%s7 + $0x24] sm:$0xf]
    %v6993 = vld [vmem:[%s7 + $0x28] sm:$0xf]
    %v6994 = vld [vmem:[%s7 + $0x2c] sm:$0xf]
    %v6995 = vld [vmem:[%s7 + $0x30] sm:$0xf]
    %v6996 = vld [vmem:[%s7 + $0x34] sm:$0xf]
    %v6997 = vld [vmem:[%s7 + $0x38] sm:$0xf]
    %v6998 = vld [vmem:[%s7 + $0x3c] sm:$0xf]
    %v6999 = vld [vmem:[%s7 + $0x40] sm:$0xf]
    %v7000 = vld [vmem:[%s7 + $0x44] sm:$0xf]
    %v7001 = vld [vmem:[%s7 + $0x48] sm:$0xf]
    %v7002 = vld [vmem:[%s7 + $0x4c] sm:$0xf]
    %v7003 = vld [vmem:[%s7 + $0x50] sm:$0xf]
    %v7004 = vld [vmem:[%s7 + $0x54] sm:$0xf]
    %v7005 = vld [vmem:[%s7 + $0x58] sm:$0xf]
    %v7006 = vld [vmem:[%s7 + $0x5c] sm:$0xf]
    %v7007 = vld [vmem:[%s7 + $0x60] sm:$0xf]
    %v7008 = vld [vmem:[%s7 + $0x64] sm:$0xf]
    %v7009 = vld [vmem:[%s7 + $0x68] sm:$0xf]
    %v7010 = vld [vmem:[%s7 + $0x6c] sm:$0xf]
    %v7011 = vld [vmem:[%s7 + $0x70] sm:$0xf]
    %v7012 = vld [vmem:[%s7 + $0x74] sm:$0xf]
    %v7013 = vld [vmem:[%s7 + $0x78] sm:$0xf]
    %v7014 = vld [vmem:[%s7 + $0x7c] sm:$0xf]
    %v7015 = vld [vmem:[%s7 + $0x80] sm:$0xf]
    %v7016 = vld [vmem:[%s7 + $0x84] sm:$0xf]
    %v7017 = vld [vmem:[%s7 + $0x88] sm:$0xf]
    %v7018 = vld [vmem:[%s7 + $0x8c] sm:$0xf]
    %v7019 = vld [vmem:[%s7 + $0x90] sm:$0xf]
    %v7020 = vld [vmem:[%s7 + $0x94] sm:$0xf]
    %v7021 = vld [vmem:[%s7 + $0x98] sm:$0xf]
    %v7022 = vld [vmem:[%s7 + $0x9c] sm:$0xf]
    %v7023 = vld [vmem:[%s7 + $0xa0] sm:$0xf]
    %v7024 = vld [vmem:[%s7 + $0xa4] sm:$0xf]
    %v7025 = vld [vmem:[%s7 + $0xa8] sm:$0xf]
    %v7026 = vld [vmem:[%s7 + $0xac] sm:$0xf]
    %v7027 = vld [vmem:[%s7 + $0xb0] sm:$0xf]
    %v7028 = vld [vmem:[%s7 + $0xb4] sm:$0xf]
    %v7029 = vld [vmem:[%s7 + $0xb8] sm:$0xf]
    %v7030 = vld [vmem:[%s7 + $0xbc] sm:$0xf]
    %v7031 = vld [vmem:[%s7 + $0xc0] sm:$0xf]
    %v7032 = vld [vmem:[%s7 + $0xc4] sm:$0xf]
    %v7033 = vld [vmem:[%s7 + $0xc8] sm:$0xf]
    %v7034 = vld [vmem:[%s7 + $0xcc] sm:$0xf]
    %v7035 = vld [vmem:[%s7 + $0xd0] sm:$0xf]
    %v7036 = vld [vmem:[%s7 + $0xd4] sm:$0xf]
    %v7037 = vld [vmem:[%s7 + $0xd8] sm:$0xf]
    %v7038 = vld [vmem:[%s7 + $0xdc] sm:$0xf]
    %v7039 = vld [vmem:[%s7 + $0xe0] sm:$0xf]
    %v7040 = vld [vmem:[%s7 + $0xe4] sm:$0xf]
    %v7041 = vld [vmem:[%s7 + $0xe8] sm:$0xf]
    %v7042 = vld [vmem:[%s7 + $0xec] sm:$0xf]
    %v7043 = vld [vmem:[%s7 + $0xf0] sm:$0xf]
    %v7044 = vld [vmem:[%s7 + $0xf4] sm:$0xf]
    %v7045 = vld [vmem:[%s7 + $0xf8] sm:$0x3]
    %v7046 = vld [vmem:[#allocation13] sm:$0x1]
    %v7048 = vlaneseq
    %v7049 = vshrl.u32 %v7048, 7
    %v7050 = vsub.s32 0, %v7049
    %v7051 = vrot.slane %v7046, %v7050
    %v7116 = vunpack.c.l.b16 %v6983
    %v7117 = vunpack.c.l.b16 %v6984
    %v7118 = vunpack.c.l.b16 %v6985
    %v7119 = vunpack.c.l.b16 %v6986
    %v7120 = vunpack.c.l.b16 %v6987
    %v7121 = vunpack.c.l.b16 %v6988
    %v7122 = vunpack.c.l.b16 %v6989
    %v7123 = vunpack.c.l.b16 %v6990
    %v7124 = vunpack.c.l.b16 %v6991
    %v7125 = vunpack.c.l.b16 %v6992
    %v7126 = vunpack.c.l.b16 %v6993
    %v7127 = vunpack.c.l.b16 %v6994
    %v7128 = vunpack.c.l.b16 %v6995
    %v7129 = vunpack.c.l.b16 %v6996
    %v7130 = vunpack.c.l.b16 %v6997
    %v7131 = vunpack.c.l.b16 %v6998
    %v7132 = vunpack.c.l.b16 %v6999
    %v7133 = vunpack.c.l.b16 %v7000
    %v7134 = vunpack.c.l.b16 %v7001
    %v7135 = vunpack.c.l.b16 %v7002
    %v7136 = vunpack.c.l.b16 %v7003
    %v7137 = vunpack.c.l.b16 %v7004
    %v7138 = vunpack.c.l.b16 %v7005
    %v7139 = vunpack.c.l.b16 %v7006
    %v7140 = vunpack.c.l.b16 %v7007
    %v7141 = vunpack.c.l.b16 %v7008
    %v7142 = vunpack.c.l.b16 %v7009
    %v7143 = vunpack.c.l.b16 %v7010
    %v7144 = vunpack.c.l.b16 %v7011
    %v7145 = vunpack.c.l.b16 %v7012
    %v7146 = vunpack.c.l.b16 %v7013
    %v7147 = vunpack.c.l.b16 %v7014
    %v7148 = vunpack.c.l.b16 %v7015
    %v7149 = vunpack.c.l.b16 %v7016
    %v7150 = vunpack.c.l.b16 %v7017
    %v7151 = vunpack.c.l.b16 %v7018
    %v7152 = vunpack.c.l.b16 %v7019
    %v7153 = vunpack.c.l.b16 %v7020
    %v7154 = vunpack.c.l.b16 %v7021
    %v7155 = vunpack.c.l.b16 %v7022
    %v7156 = vunpack.c.l.b16 %v7023
    %v7157 = vunpack.c.l.b16 %v7024
    %v7158 = vunpack.c.l.b16 %v7025
    %v7159 = vunpack.c.l.b16 %v7026
    %v7160 = vunpack.c.l.b16 %v7027
    %v7161 = vunpack.c.l.b16 %v7028
    %v7162 = vunpack.c.l.b16 %v7029
    %v7163 = vunpack.c.l.b16 %v7030
    %v7164 = vunpack.c.l.b16 %v7031
    %v7165 = vunpack.c.l.b16 %v7032
    %v7166 = vunpack.c.l.b16 %v7033
    %v7167 = vunpack.c.l.b16 %v7034
    %v7168 = vunpack.c.l.b16 %v7035
    %v7169 = vunpack.c.l.b16 %v7036
    %v7170 = vunpack.c.l.b16 %v7037
    %v7171 = vunpack.c.l.b16 %v7038
    %v7172 = vunpack.c.l.b16 %v7039
    %v7173 = vunpack.c.l.b16 %v7040
    %v7174 = vunpack.c.l.b16 %v7041
    %v7175 = vunpack.c.l.b16 %v7042
    %v7176 = vunpack.c.l.b16 %v7043
    %v7177 = vunpack.c.l.b16 %v7044
    %v7178 = vunpack.c.l.b16 %v7045
    %v7179 = vpack.c.b16 %v7117, %v7116
    %v7180 = vpack.c.b16 %v7119, %v7118
    %v7181 = vpack.c.b16 %v7121, %v7120
    %v7182 = vpack.c.b16 %v7123, %v7122
    %v7183 = vpack.c.b16 %v7125, %v7124
    %v7184 = vpack.c.b16 %v7127, %v7126
    %v7185 = vpack.c.b16 %v7129, %v7128
    %v7186 = vpack.c.b16 %v7131, %v7130
    %v7187 = vpack.c.b16 %v7133, %v7132
    %v7188 = vpack.c.b16 %v7135, %v7134
    %v7189 = vpack.c.b16 %v7137, %v7136
    %v7190 = vpack.c.b16 %v7139, %v7138
    %v7191 = vpack.c.b16 %v7141, %v7140
    %v7192 = vpack.c.b16 %v7143, %v7142
    %v7193 = vpack.c.b16 %v7145, %v7144
    %v7194 = vpack.c.b16 %v7147, %v7146
    %v7195 = vpack.c.b16 %v7149, %v7148
    %v7196 = vpack.c.b16 %v7151, %v7150
    %v7197 = vpack.c.b16 %v7153, %v7152
    %v7198 = vpack.c.b16 %v7155, %v7154
    %v7199 = vpack.c.b16 %v7157, %v7156
    %v7200 = vpack.c.b16 %v7159, %v7158
    %v7201 = vpack.c.b16 %v7161, %v7160
    %v7202 = vpack.c.b16 %v7163, %v7162
    %v7203 = vpack.c.b16 %v7165, %v7164
    %v7204 = vpack.c.b16 %v7167, %v7166
    %v7205 = vpack.c.b16 %v7169, %v7168
    %v7206 = vpack.c.b16 %v7171, %v7170
    %v7207 = vpack.c.b16 %v7173, %v7172
    %v7208 = vpack.c.b16 %v7175, %v7174
    %v7209 = vpack.c.b16 %v7177, %v7176
    %v7210 = vpack.c.b16 %v7178, %v7178
    %vm7242 = vcmask 949248
    %v7244 = vsel %vm7242, %v6982, 0
    %vm7246 = vcmask 1041408
    %v7248 = vsel %vm7246, %v7210, 0
    %7250 = vmatprep.subr.bf16.mxu0 0
    %7251 = vmatpush1.bf16.msra.mxu0 %v7186
    %7252 = vmatprep.subr.bf16.mxu0 0
    %7253 = vmatpush1.bf16.msra.mxu0 %v7185
    %7254 = vmatprep.subr.bf16.mxu0 0
    %7255 = vmatpush1.bf16.msra.mxu0 %v7184
    %7256 = vmatprep.subr.bf16.mxu0 0
    %7257 = vmatpush1.bf16.msra.mxu0 %v7183
    %7258 = vmatprep.subr.bf16.mxu0 0
    %7259 = vmatpush1.bf16.msra.mxu0 %v7182
    %7260 = vmatprep.subr.bf16.mxu0 0
    %7261 = vmatpush1.bf16.msra.mxu0 %v7181
    %7262 = vmatprep.subr.bf16.mxu0 0
    %7263 = vmatpush1.bf16.msra.mxu0 %v7180
    %7264 = vmatprep.subr.bf16.mxu0 0
    %7265 = vmatpush1.bf16.msra.mxu0 %v7179
    %7266 = vmatprep.subr.bf16.mxu0 0
    %7267 = vmatpush2.bf16.msra.mxu0 %v7194
    %7268 = vmatprep.subr.bf16.mxu0 0
    %7269 = vmatpush2.bf16.msra.mxu0 %v7193
    %7270 = vmatprep.subr.bf16.mxu0 0
    %7271 = vmatpush2.bf16.msra.mxu0 %v7192
    %7272 = vmatprep.subr.bf16.mxu0 0
    %7273 = vmatpush2.bf16.msra.mxu0 %v7191
    %7274 = vmatprep.subr.bf16.mxu0 0
    %7275 = vmatpush2.bf16.msra.mxu0 %v7190
    %7276 = vmatprep.subr.bf16.mxu0 0
    %7277 = vmatpush2.bf16.msra.mxu0 %v7189
    %7278 = vmatprep.subr.bf16.mxu0 0
    %7279 = vmatpush2.bf16.msra.mxu0 %v7188
    %7280 = vmatprep.subr.bf16.mxu0 0
    %7281 = vmatpush2.bf16.msra.mxu0 %v7187
    %7282 = vmatprep.mubr.bf16.mxu0 %v6980
    %7283 = vmatmul.mubr.bf16.gmra.mxu0 %v6979
    %v7284 = vpop.f32.mrf.mxu0
    %v7285 = vadd.f32 %v7051, %v7284
    %v7286 = vpop.f32.mrf.mxu0
    %v7287 = vpop.f32.mrf.mxu0
    %v7288 = vpop.f32.mrf.mxu0
    %7289 = vdwg.mxu0
    %7290 = vmatprep.subr.bf16.mxu0 0
    %7291 = vmatpush1.bf16.msra.mxu0 %v7202
    %7292 = vmatprep.subr.bf16.mxu0 0
    %7293 = vmatpush1.bf16.msra.mxu0 %v7201
    %7294 = vmatprep.subr.bf16.mxu0 0
    %7295 = vmatpush1.bf16.msra.mxu0 %v7200
    %7296 = vmatprep.subr.bf16.mxu0 0
    %7297 = vmatpush1.bf16.msra.mxu0 %v7199
    %7298 = vmatprep.subr.bf16.mxu0 0
    %7299 = vmatpush1.bf16.msra.mxu0 %v7198
    %7300 = vmatprep.subr.bf16.mxu0 0
    %7301 = vmatpush1.bf16.msra.mxu0 %v7197
    %7302 = vmatprep.subr.bf16.mxu0 0
    %7303 = vmatpush1.bf16.msra.mxu0 %v7196
    %7304 = vmatprep.subr.bf16.mxu0 0
    %7305 = vmatpush1.bf16.msra.mxu0 %v7195
    %7306 = vmatprep.subr.bf16.mxu0 0
    %7307 = vmatpush2.bf16.msra.mxu0 %v7248
    %7308 = vmatprep.subr.bf16.mxu0 0
    %7309 = vmatpush2.bf16.msra.mxu0 %v7209
    %7310 = vmatprep.subr.bf16.mxu0 0
    %7311 = vmatpush2.bf16.msra.mxu0 %v7208
    %7312 = vmatprep.subr.bf16.mxu0 0
    %7313 = vmatpush2.bf16.msra.mxu0 %v7207
    %7314 = vmatprep.subr.bf16.mxu0 0
    %7315 = vmatpush2.bf16.msra.mxu0 %v7206
    %7316 = vmatprep.subr.bf16.mxu0 0
    %7317 = vmatpush2.bf16.msra.mxu0 %v7205
    %7318 = vmatprep.subr.bf16.mxu0 0
    %7319 = vmatpush2.bf16.msra.mxu0 %v7204
    %7320 = vmatprep.subr.bf16.mxu0 0
    %7321 = vmatpush2.bf16.msra.mxu0 %v7203
    %7322 = vmatprep.mubr.bf16.mxu0 %v7244
    %7323 = vmatmul.mubr.bf16.gmra.mxu0 %v6981
    %v7324 = vpop.f32.mrf.mxu0
    %v7325 = vadd.f32 %v7285, %v7324
    %v7326 = vpop.f32.mrf.mxu0
    %v7327 = vpop.f32.mrf.mxu0
    %v7328 = vpop.f32.mrf.mxu0
    %7329 = vdwg.mxu0
    %v7330 = vxor.u32 %v7325, 2147483648
    %v7331 = vmul.f32 %v7330, 1.442695
    %v7332 = vpow.pop %v7331
    %v7333 = vadd.f32 %v7332, 1.0
    %v7334 = vrcp.pop %v7333
    %v7335 = vmul.f32 1.0, %v7334
    %vm7336 = vcmask 15360
    %7337 = vst.msk [vmem:[%s9] sm:$0xff] %vm7336, %v7335
    // Predicated region
    $region70: #{tpu_custom_call.1} parent=1 // pred_check
      _
    $region71: #{tpu_custom_call.1} parent=1 // pred_check_branch
      %7339 = sbr.rel (0) target = $region73
    $region72: #{tpu_custom_call.1} parent=1 // pred_region
      _
    $region73: #{tpu_custom_call.1} parent=1 // pred_fallthru
      _
    // Predicated region
    $region74: #{tpu_custom_call.1} parent=1 // pred_check
      _
    $region75: #{tpu_custom_call.1} parent=1 // pred_check_branch
      %7341 = sbr.rel (0) target = $region77
    $region76: #{tpu_custom_call.1} parent=1 // pred_region
      _
    $region77: #{tpu_custom_call.1} parent=1 // pred_fallthru
      _
    %7342 = vsyncpa [#allocation3], 1
    %7343 = vsyncpa [#allocation5], 1
    %7344 = vsyncpa [#allocation8], 1
    %7345 = vsyncpa [#allocation11], 1
    %7346 = vsyncpa [#allocation14], 1

</llo_original>
